<compile_context>
chip_gen: v7x
topology: tpu7x:2x2x1
jax: 0.10.0
libtpu: 0.0.40
codegen_flags: <defaults>
</compile_context>

<pallas_src>
import jax
import jax.numpy as jnp
from jax.experimental import pallas as pl
from jax.experimental.pallas import tpu as pltpu


_VMEM_LIMIT = 32 * 1024 * 1024  # far above actual use, safe on v5e/v6e/v7x


def _pick_tile(m, target):
    """Largest multiple-of-8 tile <= target that divides m (or m if small)."""
    if m <= target:
        return m
    t = target - (target % 8)
    while t >= 8:
        if m % t == 0:
            return t
        t -= 8
    return target - (target % 8)   # fallback: uneven grid handled via pl.cdiv


# ----------------------------- Pallas kernels -----------------------------

def _gemm_bias_softsign_kernel(x_ref, w_ref, b_ref, o_ref):
    # (tm, K)bf16 @ (K, C)bf16 -> f32 accum, + bias, softsign, store bf16.
    acc = jnp.dot(x_ref[...], w_ref[...], preferred_element_type=jnp.float32)
    acc = acc + b_ref[...]
    o_ref[...] = (acc / (1.0 + jnp.abs(acc))).astype(o_ref.dtype)


def _maxpool_kernel(x_ref, o_ref):
    # x_ref: (bp, 2, W2, 2*C) -- conv rows regrouped (metadata-only) as
    #   (pooled row, row-within-pair, pooled col, (col-within-pair, C)).
    x = x_ref[...]
    c = o_ref.shape[-1]
    vert = jnp.maximum(x[:, 0], x[:, 1])                     # (bp, W2, 2*C)
    o_ref[...] = jnp.maximum(vert[..., :c], vert[..., c:])   # (bp, W2, C)


def _fc_head_kernel(x_ref, w1_ref, b1_ref, w2_ref, b2_ref, o_ref):
    # fc1 + softsign + fc2 + log_softmax, fully fused (hidden stays on-chip).
    h = jnp.dot(x_ref[...], w1_ref[...], preferred_element_type=jnp.float32)
    h = h + b1_ref[...]
    h = h / (1.0 + jnp.abs(h))
    z = jnp.dot(h.astype(w2_ref.dtype), w2_ref[...],
                preferred_element_type=jnp.float32)
    z = z + b2_ref[...]
    z = z - jnp.max(z, axis=-1, keepdims=True)
    lse = jnp.log(jnp.sum(jnp.exp(z), axis=-1, keepdims=True))
    o_ref[...] = z - lse


# ----------------------------- Pallas wrappers -----------------------------

def _gemm_bias_softsign(x, w, b, tm_target=1024):
    """x: (M, K) bf16, w: (K, C) bf16, b: (1, C) f32 -> (M, C) bf16."""
    m, k = x.shape
    n = w.shape[1]
    tm = _pick_tile(m, tm_target)
    return pl.pallas_call(
        _gemm_bias_softsign_kernel,
        grid=(pl.cdiv(m, tm),),
        in_specs=[
            pl.BlockSpec((tm, k), lambda i: (i, 0)),
            pl.BlockSpec((k, n), lambda i: (0, 0)),
            pl.BlockSpec((1, n), lambda i: (0, 0)),
        ],
        out_specs=pl.BlockSpec((tm, n), lambda i: (i, 0)),
        out_shape=jax.ShapeDtypeStruct((m, n), jnp.bfloat16),
        compiler_params=pltpu.CompilerParams(
            dimension_semantics=("parallel",),
            vmem_limit_bytes=_VMEM_LIMIT),
    )(x, w, b)


def _maxpool_2x2_rows(y, n, ho, wo, c, bp_target=512):
    """y: (n*ho*wo, c), rows ordered (n, ho, wo) -> (n, ho//2, wo//2, c)."""
    p, w2 = n * ho // 2, wo // 2
    yg = y.reshape(p, 2, w2, 2 * c)          # metadata-only regroup (row-major)
    bp = _pick_tile(p, bp_target)
    out = pl.pallas_call(
        _maxpool_kernel,
        grid=(pl.cdiv(p, bp),),
        in_specs=[pl.BlockSpec((bp, 2, w2, 2 * c), lambda i: (i, 0, 0, 0))],
        out_specs=pl.BlockSpec((bp, w2, c), lambda i: (i, 0, 0)),
        out_shape=jax.ShapeDtypeStruct((p, w2, c), y.dtype),
        compiler_params=pltpu.CompilerParams(
            dimension_semantics=("parallel",),
            vmem_limit_bytes=_VMEM_LIMIT),
    )(yg)
    return out.reshape(n, ho // 2, w2, c)


def _fc_head(x, w1, b1, w2, b2, tb_target=256):
    """x: (N, 800) bf16 -> (N, 10) f32 log-probabilities (fc1+fc2 fused)."""
    n, k = x.shape
    nout = w2.shape[1]
    tb = _pick_tile(n, tb_target)
    return pl.pallas_call(
        _fc_head_kernel,
        grid=(pl.cdiv(n, tb),),
        in_specs=[
            pl.BlockSpec((tb, k), lambda i: (i, 0)),
            pl.BlockSpec(w1.shape, lambda i: (0, 0)),
            pl.BlockSpec(b1.shape, lambda i: (0, 0)),
            pl.BlockSpec(w2.shape, lambda i: (0, 0)),
            pl.BlockSpec(b2.shape, lambda i: (0, 0)),
        ],
        out_specs=pl.BlockSpec((tb, nout), lambda i: (i, 0)),
        out_shape=jax.ShapeDtypeStruct((n, nout), jnp.float32),
        compiler_params=pltpu.CompilerParams(
            dimension_semantics=("parallel",),
            vmem_limit_bytes=_VMEM_LIMIT),
    )(x, w1, b1, w2, b2)


# ----------------------------- conv block ---------------------------------

def _conv_softsign_pool(x_nhwc, w2d, b2d, k):
    """Valid conv (stride 1) + softsign + 2x2/2 max-pool. NHWC in / NHWC out."""
    n, h, w, c = x_nhwc.shape
    ho, wo = h - k + 1, w - k + 1
    cout = w2d.shape[1]
    x_bf = x_nhwc.astype(jnp.bfloat16)
    # im2col: rows ordered (n, ho, wo); columns ordered (kh, kw, cin) to match
    # the packed weight layout. Stays as a fused bf16 XLA gather.
    cols = [x_bf[:, i:i + ho, j:j + wo, :] for i in range(k) for j in range(k)]
    patches = jnp.stack(cols, axis=3).reshape(n * ho * wo, k * k * c)
    y = _gemm_bias_softsign(patches, w2d, b2d)        # (n*ho*wo, cout) bf16
    return _maxpool_2x2_rows(y, n, ho, wo, cout)      # (n, ho//2, wo//2, cout)


# ----------------------------- model ---------------------------------------

def init_params(key):
    def uniform(k, shape, fan_in):
        bound = 1.0 / jnp.sqrt(jnp.float32(fan_in))
        return jax.random.uniform(k, shape, jnp.float32, -bound, bound)

    ks = jax.random.split(key, 8)
    return {
        "conv1_w": uniform(ks[0], (20, 3, 5, 5), 3 * 5 * 5),
        "conv1_b": uniform(ks[1], (20,), 3 * 5 * 5),
        "conv2_w": uniform(ks[2], (32, 20, 5, 5), 20 * 5 * 5),
        "conv2_b": uniform(ks[3], (32,), 20 * 5 * 5),
        "fc1_w": uniform(ks[4], (64, 5 * 5 * 32), 5 * 5 * 32),
        "fc1_b": uniform(ks[5], (64,), 5 * 5 * 32),
        "fc2_w": uniform(ks[6], (10, 64), 64),
        "fc2_b": uniform(ks[7], (10,), 64),
    }


def pack_params(p):
    """PyTorch-layout f32 params -> bf16 GEMM-ready weights (done once)."""
    def conv_w(w):   # (Cout, Cin, kh, kw) -> (kh*kw*Cin, Cout) bf16
        co, ci, kh, kw = w.shape
        return w.transpose(2, 3, 1, 0).reshape(kh * kw * ci, co).astype(jnp.bfloat16)

    # fc1 columns are (c, h, w) in PyTorch; our NHWC flatten is (h, w, c).
    f1 = p["fc1_w"].reshape(64, 32, 5, 5).transpose(0, 2, 3, 1).reshape(64, 800).T
    return {
        "c1w": conv_w(p["conv1_w"]),
        "c1b": p["conv1_b"].reshape(1, -1).astype(jnp.float32),
        "c2w": conv_w(p["conv2_w"]),
        "c2b": p["conv2_b"].reshape(1, -1).astype(jnp.float32),
        "f1w": f1.astype(jnp.bfloat16),
        "f1b": p["fc1_b"].reshape(1, -1).astype(jnp.float32),
        "f2w": p["fc2_w"].T.astype(jnp.bfloat16),
        "f2b": p["fc2_b"].reshape(1, -1).astype(jnp.float32),
    }


def net_forward(pp, x):
    """x: (N, 3, 32, 32) float32 NCHW -> (N, 10) log-probabilities."""
    n = x.shape[0]
    x = jnp.transpose(x, (0, 2, 3, 1))                    # NHWC once, up front
    y = _conv_softsign_pool(x, pp["c1w"], pp["c1b"], 5)   # (N, 14, 14, 20)
    y = _conv_softsign_pool(y, pp["c2w"], pp["c2b"], 5)   # (N, 5, 5, 32)
    y = y.reshape(n, 5 * 5 * 32)                          # (h, w, c) order
    return _fc_head(y, pp["f1w"], pp["f1b"], pp["f2w"], pp["f2b"])


if __name__ == "__main__":
    key = jax.random.PRNGKey(0)
    k_param, k_x = jax.random.split(key)
    params = init_params(k_param)
    packed = pack_params(params)
    # CIFAR-shaped input (32x32 is required for the 5*5*32 flatten to hold).
    x = jax.random.normal(k_x, (2, 3, 32, 32), dtype=jnp.float32)

    out = jax.jit(net_forward)(packed, x)
    out = jax.block_until_ready(out)

    assert out.shape == (2, 10)
    # log_softmax rows should exp-sum to ~1 (computed in f32 in-kernel)
    assert jnp.allclose(jnp.sum(jnp.exp(out), axis=1), 1.0, atol=1e-4)
    print("KERNEL_OK")
</pallas_src>

<mosaic_0001>
module attributes {stable_mosaic.version = 11 : i64} {
  func.func @_gemm_bias_softsign_kernel(%arg0: i32, %arg1: memref<784x75xbf16, #tpu.memory_space<vmem>>, %arg2: memref<75x20xbf16, #tpu.memory_space<vmem>>, %arg3: memref<1x20xf32, #tpu.memory_space<vmem>>, %arg4: memref<784x20xbf16, #tpu.memory_space<vmem>>) attributes {dimension_semantics = [#tpu.dimension_semantics<parallel>], iteration_bounds = array<i64: 2>, scalar_prefetch = 0 : i64, scratch_operands = 0 : i64, tpu.core_type = #tpu.core_type<tc>, window_params = [{transform_indices = @transform_0, window_bounds = array<i64: 784, 75>}, {pipeline_mode = #tpu.pipeline_mode<synchronous>, transform_indices = @transform_1, window_bounds = array<i64: 75, 20>}, {pipeline_mode = #tpu.pipeline_mode<synchronous>, transform_indices = @transform_2, window_bounds = array<i64: 1, 20>}, {transform_indices = @transform_3, window_bounds = array<i64: 784, 20>}]} {
    %c0 = arith.constant 0 : index
    %c0_0 = arith.constant 0 : index
    %0 = vector.load %arg1[%c0, %c0_0] : memref<784x75xbf16, #tpu.memory_space<vmem>>, vector<784x75xbf16>
    %c0_1 = arith.constant 0 : index
    %c0_2 = arith.constant 0 : index
    %1 = vector.load %arg2[%c0_1, %c0_2] : memref<75x20xbf16, #tpu.memory_space<vmem>>, vector<75x20xbf16>
    %cst = arith.constant dense<0.000000e+00> : vector<784x20xf32>
    %2 = tpu.matmul %0, %1, %cst {dimension_numbers = #tpu.dot_dimension_numbers<[1], [0], [0], [1], [0, 0, 1, 1], [], []>} : vector<784x75xbf16>, vector<75x20xbf16>, vector<784x20xf32> -> vector<784x20xf32>
    %c0_3 = arith.constant 0 : index
    %c0_4 = arith.constant 0 : index
    %3 = vector.load %arg3[%c0_3, %c0_4] : memref<1x20xf32, #tpu.memory_space<vmem>>, vector<1x20xf32>
    %4 = vector.broadcast %3 : vector<1x20xf32> to vector<784x20xf32>
    %5 = arith.addf %2, %4 : vector<784x20xf32>
    %6 = math.absf %5 : vector<784x20xf32>
    %cst_5 = arith.constant 1.000000e+00 : f32
    %7 = vector.broadcast %cst_5 : f32 to vector<784x20xf32>
    %8 = arith.addf %7, %6 : vector<784x20xf32>
    %9 = arith.divf %5, %8 : vector<784x20xf32>
    %10 = arith.truncf %9 : vector<784x20xf32> to vector<784x20xbf16>
    %c0_6 = arith.constant 0 : index
    %c0_7 = arith.constant 0 : index
    %11 = vector.load %arg4[%c0_6, %c0_7] : memref<784x20xbf16, #tpu.memory_space<vmem>>, vector<784x20xbf16>
    tpu.vector_store %arg4[%c0_6, %c0_7], %10 {strides = array<i32>} : memref<784x20xbf16, #tpu.memory_space<vmem>>, vector<784x20xbf16>,
    return
  }
  func.func @transform_0(%arg0: i32) -> (i32, i32) {
    %c0_i32 = arith.constant 0 : i32
    %c0_i32_0 = arith.constant 0 : i32
    return %arg0, %c0_i32 : i32, i32
  }
  func.func @transform_1(%arg0: i32) -> (i32, i32) {
    %c0_i32 = arith.constant 0 : i32
    %c0_i32_0 = arith.constant 0 : i32
    %c0_i32_1 = arith.constant 0 : i32
    return %c0_i32, %c0_i32_0 : i32, i32
  }
  func.func @transform_2(%arg0: i32) -> (i32, i32) {
    %c0_i32 = arith.constant 0 : i32
    %c0_i32_0 = arith.constant 0 : i32
    %c0_i32_1 = arith.constant 0 : i32
    return %c0_i32, %c0_i32_0 : i32, i32
  }
  func.func @transform_3(%arg0: i32) -> (i32, i32) {
    %c0_i32 = arith.constant 0 : i32
    %c0_i32_0 = arith.constant 0 : i32
    return %arg0, %c0_i32 : i32, i32
  }
}

module attributes {stable_mosaic.version = 11 : i64} {
  func.func @_maxpool_kernel(%arg0: i32, %arg1: memref<28x2x14x40xbf16, #tpu.memory_space<vmem>>, %arg2: memref<28x14x20xbf16, #tpu.memory_space<vmem>>) attributes {dimension_semantics = [#tpu.dimension_semantics<parallel>], iteration_bounds = array<i64: 1>, scalar_prefetch = 0 : i64, scratch_operands = 0 : i64, tpu.core_type = #tpu.core_type<tc>, window_params = [{transform_indices = @transform_0, window_bounds = array<i64: 28, 2, 14, 40>}, {transform_indices = @transform_1, window_bounds = array<i64: 28, 14, 20>}]} {
    %c0 = arith.constant 0 : index
    %c0_0 = arith.constant 0 : index
    %c0_1 = arith.constant 0 : index
    %c0_2 = arith.constant 0 : index
    %0 = vector.load %arg1[%c0, %c0_0, %c0_1, %c0_2] : memref<28x2x14x40xbf16, #tpu.memory_space<vmem>>, vector<28x2x14x40xbf16>
    %1 = vector.extract_strided_slice %0 {offsets = [0, 0, 0, 0], sizes = [28, 1, 14, 40], strides = [1, 1, 1, 1]} : vector<28x2x14x40xbf16> to vector<28x1x14x40xbf16>
    %2 = vector.shape_cast %1 : vector<28x1x14x40xbf16> to vector<28x14x40xbf16>
    %3 = vector.extract_strided_slice %0 {offsets = [0, 1, 0, 0], sizes = [28, 1, 14, 40], strides = [1, 1, 1, 1]} : vector<28x2x14x40xbf16> to vector<28x1x14x40xbf16>
    %4 = vector.shape_cast %3 : vector<28x1x14x40xbf16> to vector<28x14x40xbf16>
    %5 = arith.maximumf %2, %4 : vector<28x14x40xbf16>
    %6 = vector.extract_strided_slice %5 {offsets = [0, 0, 0], sizes = [28, 14, 20], strides = [1, 1, 1]} : vector<28x14x40xbf16> to vector<28x14x20xbf16>
    %7 = vector.extract_strided_slice %5 {offsets = [0, 0, 20], sizes = [28, 14, 20], strides = [1, 1, 1]} : vector<28x14x40xbf16> to vector<28x14x20xbf16>
    %8 = arith.maximumf %6, %7 : vector<28x14x20xbf16>
    %c0_3 = arith.constant 0 : index
    %c0_4 = arith.constant 0 : index
    %c0_5 = arith.constant 0 : index
    %9 = vector.load %arg2[%c0_3, %c0_4, %c0_5] : memref<28x14x20xbf16, #tpu.memory_space<vmem>>, vector<28x14x20xbf16>
    tpu.vector_store %arg2[%c0_3, %c0_4, %c0_5], %8 {strides = array<i32>} : memref<28x14x20xbf16, #tpu.memory_space<vmem>>, vector<28x14x20xbf16>,
    return
  }
  func.func @transform_0(%arg0: i32) -> (i32, i32, i32, i32) {
    %c0_i32 = arith.constant 0 : i32
    %c0_i32_0 = arith.constant 0 : i32
    %c0_i32_1 = arith.constant 0 : i32
    %c0_i32_2 = arith.constant 0 : i32
    return %arg0, %c0_i32, %c0_i32_0, %c0_i32_1 : i32, i32, i32, i32
  }
  func.func @transform_1(%arg0: i32) -> (i32, i32, i32) {
    %c0_i32 = arith.constant 0 : i32
    %c0_i32_0 = arith.constant 0 : i32
    %c0_i32_1 = arith.constant 0 : i32
    return %arg0, %c0_i32, %c0_i32_0 : i32, i32, i32
  }
}

module attributes {stable_mosaic.version = 11 : i64} {
  func.func @_gemm_bias_softsign_kernel(%arg0: i32, %arg1: memref<200x500xbf16, #tpu.memory_space<vmem>>, %arg2: memref<500x32xbf16, #tpu.memory_space<vmem>>, %arg3: memref<1x32xf32, #tpu.memory_space<vmem>>, %arg4: memref<200x32xbf16, #tpu.memory_space<vmem>>) attributes {dimension_semantics = [#tpu.dimension_semantics<parallel>], iteration_bounds = array<i64: 1>, scalar_prefetch = 0 : i64, scratch_operands = 0 : i64, tpu.core_type = #tpu.core_type<tc>, window_params = [{transform_indices = @transform_0, window_bounds = array<i64: 200, 500>}, {pipeline_mode = #tpu.pipeline_mode<synchronous>, transform_indices = @transform_1, window_bounds = array<i64: 500, 32>}, {pipeline_mode = #tpu.pipeline_mode<synchronous>, transform_indices = @transform_2, window_bounds = array<i64: 1, 32>}, {transform_indices = @transform_3, window_bounds = array<i64: 200, 32>}]} {
    %c0 = arith.constant 0 : index
    %c0_0 = arith.constant 0 : index
    %0 = vector.load %arg1[%c0, %c0_0] : memref<200x500xbf16, #tpu.memory_space<vmem>>, vector<200x500xbf16>
    %c0_1 = arith.constant 0 : index
    %c0_2 = arith.constant 0 : index
    %1 = vector.load %arg2[%c0_1, %c0_2] : memref<500x32xbf16, #tpu.memory_space<vmem>>, vector<500x32xbf16>
    %cst = arith.constant dense<0.000000e+00> : vector<200x32xf32>
    %2 = tpu.matmul %0, %1, %cst {dimension_numbers = #tpu.dot_dimension_numbers<[1], [0], [0], [1], [0, 0, 1, 1], [], []>} : vector<200x500xbf16>, vector<500x32xbf16>, vector<200x32xf32> -> vector<200x32xf32>
    %c0_3 = arith.constant 0 : index
    %c0_4 = arith.constant 0 : index
    %3 = vector.load %arg3[%c0_3, %c0_4] : memref<1x32xf32, #tpu.memory_space<vmem>>, vector<1x32xf32>
    %4 = vector.broadcast %3 : vector<1x32xf32> to vector<200x32xf32>
    %5 = arith.addf %2, %4 : vector<200x32xf32>
    %6 = math.absf %5 : vector<200x32xf32>
    %cst_5 = arith.constant 1.000000e+00 : f32
    %7 = vector.broadcast %cst_5 : f32 to vector<200x32xf32>
    %8 = arith.addf %7, %6 : vector<200x32xf32>
    %9 = arith.divf %5, %8 : vector<200x32xf32>
    %10 = arith.truncf %9 : vector<200x32xf32> to vector<200x32xbf16>
    %c0_6 = arith.constant 0 : index
    %c0_7 = arith.constant 0 : index
    %11 = vector.load %arg4[%c0_6, %c0_7] : memref<200x32xbf16, #tpu.memory_space<vmem>>, vector<200x32xbf16>
    tpu.vector_store %arg4[%c0_6, %c0_7], %10 {strides = array<i32>} : memref<200x32xbf16, #tpu.memory_space<vmem>>, vector<200x32xbf16>,
    return
  }
  func.func @transform_0(%arg0: i32) -> (i32, i32) {
    %c0_i32 = arith.constant 0 : i32
    %c0_i32_0 = arith.constant 0 : i32
    return %arg0, %c0_i32 : i32, i32
  }
  func.func @transform_1(%arg0: i32) -> (i32, i32) {
    %c0_i32 = arith.constant 0 : i32
    %c0_i32_0 = arith.constant 0 : i32
    %c0_i32_1 = arith.constant 0 : i32
    return %c0_i32, %c0_i32_0 : i32, i32
  }
  func.func @transform_2(%arg0: i32) -> (i32, i32) {
    %c0_i32 = arith.constant 0 : i32
    %c0_i32_0 = arith.constant 0 : i32
    %c0_i32_1 = arith.constant 0 : i32
    return %c0_i32, %c0_i32_0 : i32, i32
  }
  func.func @transform_3(%arg0: i32) -> (i32, i32) {
    %c0_i32 = arith.constant 0 : i32
    %c0_i32_0 = arith.constant 0 : i32
    return %arg0, %c0_i32 : i32, i32
  }
}

module attributes {stable_mosaic.version = 11 : i64} {
  func.func @_maxpool_kernel(%arg0: i32, %arg1: memref<10x2x5x64xbf16, #tpu.memory_space<vmem>>, %arg2: memref<10x5x32xbf16, #tpu.memory_space<vmem>>) attributes {dimension_semantics = [#tpu.dimension_semantics<parallel>], iteration_bounds = array<i64: 1>, scalar_prefetch = 0 : i64, scratch_operands = 0 : i64, tpu.core_type = #tpu.core_type<tc>, window_params = [{transform_indices = @transform_0, window_bounds = array<i64: 10, 2, 5, 64>}, {transform_indices = @transform_1, window_bounds = array<i64: 10, 5, 32>}]} {
    %c0 = arith.constant 0 : index
    %c0_0 = arith.constant 0 : index
    %c0_1 = arith.constant 0 : index
    %c0_2 = arith.constant 0 : index
    %0 = vector.load %arg1[%c0, %c0_0, %c0_1, %c0_2] : memref<10x2x5x64xbf16, #tpu.memory_space<vmem>>, vector<10x2x5x64xbf16>
    %1 = vector.extract_strided_slice %0 {offsets = [0, 0, 0, 0], sizes = [10, 1, 5, 64], strides = [1, 1, 1, 1]} : vector<10x2x5x64xbf16> to vector<10x1x5x64xbf16>
    %2 = vector.shape_cast %1 : vector<10x1x5x64xbf16> to vector<10x5x64xbf16>
    %3 = vector.extract_strided_slice %0 {offsets = [0, 1, 0, 0], sizes = [10, 1, 5, 64], strides = [1, 1, 1, 1]} : vector<10x2x5x64xbf16> to vector<10x1x5x64xbf16>
    %4 = vector.shape_cast %3 : vector<10x1x5x64xbf16> to vector<10x5x64xbf16>
    %5 = arith.maximumf %2, %4 : vector<10x5x64xbf16>
    %6 = vector.extract_strided_slice %5 {offsets = [0, 0, 0], sizes = [10, 5, 32], strides = [1, 1, 1]} : vector<10x5x64xbf16> to vector<10x5x32xbf16>
    %7 = vector.extract_strided_slice %5 {offsets = [0, 0, 32], sizes = [10, 5, 32], strides = [1, 1, 1]} : vector<10x5x64xbf16> to vector<10x5x32xbf16>
    %8 = arith.maximumf %6, %7 : vector<10x5x32xbf16>
    %c0_3 = arith.constant 0 : index
    %c0_4 = arith.constant 0 : index
    %c0_5 = arith.constant 0 : index
    %9 = vector.load %arg2[%c0_3, %c0_4, %c0_5] : memref<10x5x32xbf16, #tpu.memory_space<vmem>>, vector<10x5x32xbf16>
    tpu.vector_store %arg2[%c0_3, %c0_4, %c0_5], %8 {strides = array<i32>} : memref<10x5x32xbf16, #tpu.memory_space<vmem>>, vector<10x5x32xbf16>,
    return
  }
  func.func @transform_0(%arg0: i32) -> (i32, i32, i32, i32) {
    %c0_i32 = arith.constant 0 : i32
    %c0_i32_0 = arith.constant 0 : i32
    %c0_i32_1 = arith.constant 0 : i32
    %c0_i32_2 = arith.constant 0 : i32
    return %arg0, %c0_i32, %c0_i32_0, %c0_i32_1 : i32, i32, i32, i32
  }
  func.func @transform_1(%arg0: i32) -> (i32, i32, i32) {
    %c0_i32 = arith.constant 0 : i32
    %c0_i32_0 = arith.constant 0 : i32
    %c0_i32_1 = arith.constant 0 : i32
    return %arg0, %c0_i32, %c0_i32_0 : i32, i32, i32
  }
}

module attributes {stable_mosaic.version = 11 : i64} {
  func.func @_fc_head_kernel(%arg0: i32, %arg1: memref<2x800xbf16, #tpu.memory_space<vmem>>, %arg2: memref<800x64xbf16, #tpu.memory_space<vmem>>, %arg3: memref<1x64xf32, #tpu.memory_space<vmem>>, %arg4: memref<64x10xbf16, #tpu.memory_space<vmem>>, %arg5: memref<1x10xf32, #tpu.memory_space<vmem>>, %arg6: memref<2x10xf32, #tpu.memory_space<vmem>>) attributes {dimension_semantics = [#tpu.dimension_semantics<parallel>], iteration_bounds = array<i64: 1>, scalar_prefetch = 0 : i64, scratch_operands = 0 : i64, tpu.core_type = #tpu.core_type<tc>, window_params = [{transform_indices = @transform_0, window_bounds = array<i64: 2, 800>}, {pipeline_mode = #tpu.pipeline_mode<synchronous>, transform_indices = @transform_1, window_bounds = array<i64: 800, 64>}, {pipeline_mode = #tpu.pipeline_mode<synchronous>, transform_indices = @transform_2, window_bounds = array<i64: 1, 64>}, {pipeline_mode = #tpu.pipeline_mode<synchronous>, transform_indices = @transform_3, window_bounds = array<i64: 64, 10>}, {pipeline_mode = #tpu.pipeline_mode<synchronous>, transform_indices = @transform_4, window_bounds = array<i64: 1, 10>}, {transform_indices = @transform_5, window_bounds = array<i64: 2, 10>}]} {
    %c0 = arith.constant 0 : index
    %c0_0 = arith.constant 0 : index
    %0 = vector.load %arg1[%c0, %c0_0] : memref<2x800xbf16, #tpu.memory_space<vmem>>, vector<2x800xbf16>
    %c0_1 = arith.constant 0 : index
    %c0_2 = arith.constant 0 : index
    %1 = vector.load %arg2[%c0_1, %c0_2] : memref<800x64xbf16, #tpu.memory_space<vmem>>, vector<800x64xbf16>
    %cst = arith.constant dense<0.000000e+00> : vector<2x64xf32>
    %2 = tpu.matmul %0, %1, %cst {dimension_numbers = #tpu.dot_dimension_numbers<[1], [0], [0], [1], [0, 0, 1, 1], [], []>} : vector<2x800xbf16>, vector<800x64xbf16>, vector<2x64xf32> -> vector<2x64xf32>
    %c0_3 = arith.constant 0 : index
    %c0_4 = arith.constant 0 : index
    %3 = vector.load %arg3[%c0_3, %c0_4] : memref<1x64xf32, #tpu.memory_space<vmem>>, vector<1x64xf32>
    %4 = vector.broadcast %3 : vector<1x64xf32> to vector<2x64xf32>
    %5 = arith.addf %2, %4 : vector<2x64xf32>
    %6 = math.absf %5 : vector<2x64xf32>
    %cst_5 = arith.constant 1.000000e+00 : f32
    %7 = vector.broadcast %cst_5 : f32 to vector<2x64xf32>
    %8 = arith.addf %7, %6 : vector<2x64xf32>
    %9 = arith.divf %5, %8 : vector<2x64xf32>
    %10 = arith.truncf %9 : vector<2x64xf32> to vector<2x64xbf16>
    %c0_6 = arith.constant 0 : index
    %c0_7 = arith.constant 0 : index
    %11 = vector.load %arg4[%c0_6, %c0_7] : memref<64x10xbf16, #tpu.memory_space<vmem>>, vector<64x10xbf16>
    %cst_8 = arith.constant dense<0.000000e+00> : vector<2x10xf32>
    %12 = tpu.matmul %10, %11, %cst_8 {dimension_numbers = #tpu.dot_dimension_numbers<[1], [0], [0], [1], [0, 0, 1, 1], [], []>} : vector<2x64xbf16>, vector<64x10xbf16>, vector<2x10xf32> -> vector<2x10xf32>
    %c0_9 = arith.constant 0 : index
    %c0_10 = arith.constant 0 : index
    %13 = vector.load %arg5[%c0_9, %c0_10] : memref<1x10xf32, #tpu.memory_space<vmem>>, vector<1x10xf32>
    %14 = vector.broadcast %13 : vector<1x10xf32> to vector<2x10xf32>
    %15 = arith.addf %12, %14 : vector<2x10xf32>
    %cst_11 = arith.constant dense<0xFF800000> : vector<2xf32>
    %16 = vector.multi_reduction <maximumf>, %15, %cst_11 [1] : vector<2x10xf32> to vector<2xf32>
    %17 = vector.shape_cast %16 : vector<2xf32> to vector<2x1xf32>
    %18 = vector.broadcast %17 : vector<2x1xf32> to vector<2x10xf32>
    %19 = arith.subf %15, %18 : vector<2x10xf32>
    %20 = math.exp %19 : vector<2x10xf32>
    %cst_12 = arith.constant dense<0.000000e+00> : vector<2xf32>
    %21 = vector.multi_reduction <add>, %20, %cst_12 [1] : vector<2x10xf32> to vector<2xf32>
    %22 = vector.shape_cast %21 : vector<2xf32> to vector<2x1xf32>
    %23 = math.log %22 : vector<2x1xf32>
    %24 = vector.broadcast %23 : vector<2x1xf32> to vector<2x10xf32>
    %25 = arith.subf %19, %24 : vector<2x10xf32>
    %c0_13 = arith.constant 0 : index
    %c0_14 = arith.constant 0 : index
    %26 = vector.load %arg6[%c0_13, %c0_14] : memref<2x10xf32, #tpu.memory_space<vmem>>, vector<2x10xf32>
    tpu.vector_store %arg6[%c0_13, %c0_14], %25 {strides = array<i32>} : memref<2x10xf32, #tpu.memory_space<vmem>>, vector<2x10xf32>,
    return
  }
  func.func @transform_0(%arg0: i32) -> (i32, i32) {
    %c0_i32 = arith.constant 0 : i32
    %c0_i32_0 = arith.constant 0 : i32
    return %arg0, %c0_i32 : i32, i32
  }
  func.func @transform_1(%arg0: i32) -> (i32, i32) {
    %c0_i32 = arith.constant 0 : i32
    %c0_i32_0 = arith.constant 0 : i32
    %c0_i32_1 = arith.constant 0 : i32
    return %c0_i32, %c0_i32_0 : i32, i32
  }
  func.func @transform_2(%arg0: i32) -> (i32, i32) {
    %c0_i32 = arith.constant 0 : i32
    %c0_i32_0 = arith.constant 0 : i32
    %c0_i32_1 = arith.constant 0 : i32
    return %c0_i32, %c0_i32_0 : i32, i32
  }
  func.func @transform_3(%arg0: i32) -> (i32, i32) {
    %c0_i32 = arith.constant 0 : i32
    %c0_i32_0 = arith.constant 0 : i32
    %c0_i32_1 = arith.constant 0 : i32
    return %c0_i32, %c0_i32_0 : i32, i32
  }
  func.func @transform_4(%arg0: i32) -> (i32, i32) {
    %c0_i32 = arith.constant 0 : i32
    %c0_i32_0 = arith.constant 0 : i32
    %c0_i32_1 = arith.constant 0 : i32
    return %c0_i32, %c0_i32_0 : i32, i32
  }
  func.func @transform_5(%arg0: i32) -> (i32, i32) {
    %c0_i32 = arith.constant 0 : i32
    %c0_i32_0 = arith.constant 0 : i32
    return %arg0, %c0_i32 : i32, i32
  }
}

</mosaic_0001>

<llo_original>
// kernel: net_forward.5
$region0: #{net_forward.5}
  #allocation0 [shape = 'u32[]', space=smem, size = 0x4, offset = 0x4, fixed_abs, tag = 'smem constant byte address 0x4 - core index']
  #allocation1 [shape = 'u32[144,128]{1,0:T(1,128)}', space=vmem, size = 0x12000, scoped, tag = 'internal scratch']
  %s0 = inlined_call_operand.vmem [shape: bf16[1568,75], index: 0, kind: input, shape index: {}]
  %s1 = inlined_call_operand.vmem [shape: bf16[75,20], index: 1, kind: input, shape index: {}]
  %s2 = inlined_call_operand.vmem [shape: f32[1,20], index: 2, kind: input, shape index: {}]
  %s3 = inlined_call_operand.vmem [shape: bf16[1568,20], index: 3, kind: output, shape index: {}]
  %s4 = sld [smem:[#allocation0]]
  $region45: #{net_forward.5} parent=0
    _
  %s6 = ssub.s32 1, %s4
  %s7 = scalar_select 0, %s6, %s4
  loop: start=0, step=1, limit=4
  $region2: #{net_forward.5} parent=0 // loop_pre_header
    _
  $region3: #{net_forward.5} parent=0 // loop_header
    %s9 = sphi 0, %s13
    %p10 = scmp.ge.s32.totalorder %s9, 4
    %s19 = sphi 0, %s21
    %s22 = sphi 0, %s19
    %s23 = sphi 0, %s22
    %s39 = sphi 0, %s23
    %s43 = sphi 0, %s43
    %s45 = sphi 0, %s43
    %s46 = sphi 0, %s45
    %s60 = sphi 0, %s46
    %s64 = sphi 0, %s64
    %s66 = sphi 0, %s64
    %s67 = sphi 0, %s66
    %s81 = sphi 0, %s67
    %s87 = sphi 0, %s89
    %s90 = sphi 0, %s87
    %s91 = sphi 0, %s90
    %s107 = sphi 0, %s91
  $region4: #{net_forward.5} parent=0 // loop_header_branch
    %12 = sbr.rel (%p10) target = $region8
  $region5: #{net_forward.5} parent=0 // loop_body
    %s14 = ssub.s32 %s9, 1
    %s15 = ssub.s32 %s9, 2
    %s16 = sadd.s32 %s9, 1
    %s17 = ssub.s32 %s9, %s16
    %p18 = scmp.eq.s32.totalorder %s17, 0
    %s20 = sadd.s32 %s19, 1
    %s21 = scalar_select %p18, %s19, %s20
    %p24 = pneg %p18
    %p25 = scmp.eq.s32.totalorder %s9, 1
    %p26 = por %p24, %p25
    %p27 = scmp.ne.s32.totalorder %s19, %s22
    %p28 = scmp.eq.s32.totalorder %s9, 0
    %p29 = por %p27, %p28
    %p30 = scmp.ne.s32.totalorder %s19, %s22
    %p31 = scmp.eq.s32.totalorder %s14, 1
    %p32 = por %p30, %p31
    %p33 = scmp.ne.s32.totalorder %s22, %s23
    %p34 = scmp.eq.s32.totalorder %s14, 0
    %p35 = por %p33, %p34
    %p36 = scmp.ne.s32.totalorder %s22, %s23
    %p37 = scmp.eq.s32.totalorder %s15, 1
    %p38 = por %p36, %p37
    %p40 = scmp.ne.s32.totalorder %s23, %s39
    %p41 = scmp.eq.s32.totalorder %s15, 0
    %p42 = por %p40, %p41
    %s44 = sadd.s32 %s43, 1
    %p47 = scmp.eq.s32.totalorder %s9, 1
    %p48 = scmp.ne.s32.totalorder %s43, %s45
    %p49 = scmp.eq.s32.totalorder %s9, 0
    %p50 = por %p48, %p49
    %p51 = scmp.ne.s32.totalorder %s43, %s45
    %p52 = scmp.eq.s32.totalorder %s14, 1
    %p53 = por %p51, %p52
    %p54 = scmp.ne.s32.totalorder %s45, %s46
    %p55 = scmp.eq.s32.totalorder %s14, 0
    %p56 = por %p54, %p55
    %p57 = scmp.ne.s32.totalorder %s45, %s46
    %p58 = scmp.eq.s32.totalorder %s15, 1
    %p59 = por %p57, %p58
    %p61 = scmp.ne.s32.totalorder %s46, %s60
    %p62 = scmp.eq.s32.totalorder %s15, 0
    %p63 = por %p61, %p62
    %s65 = sadd.s32 %s64, 1
    %p68 = scmp.eq.s32.totalorder %s9, 1
    %p69 = scmp.ne.s32.totalorder %s64, %s66
    %p70 = scmp.eq.s32.totalorder %s9, 0
    %p71 = por %p69, %p70
    %p72 = scmp.ne.s32.totalorder %s64, %s66
    %p73 = scmp.eq.s32.totalorder %s14, 1
    %p74 = por %p72, %p73
    %p75 = scmp.ne.s32.totalorder %s66, %s67
    %p76 = scmp.eq.s32.totalorder %s14, 0
    %p77 = por %p75, %p76
    %p78 = scmp.ne.s32.totalorder %s66, %s67
    %p79 = scmp.eq.s32.totalorder %s15, 1
    %p80 = por %p78, %p79
    %p82 = scmp.ne.s32.totalorder %s67, %s81
    %p83 = scmp.eq.s32.totalorder %s15, 0
    %p84 = por %p82, %p83
    %s85 = ssub.s32 %s9, %s16
    %p86 = scmp.eq.s32.totalorder %s85, 0
    %s88 = sadd.s32 %s87, 1
    %s89 = scalar_select %p86, %s87, %s88
    %p92 = pneg %p86
    %p93 = scmp.eq.s32.totalorder %s9, 1
    %p94 = por %p92, %p93
    %p95 = scmp.ne.s32.totalorder %s87, %s90
    %p96 = scmp.eq.s32.totalorder %s9, 0
    %p97 = por %p95, %p96
    %p98 = scmp.ne.s32.totalorder %s87, %s90
    %p99 = scmp.eq.s32.totalorder %s14, 1
    %p100 = por %p98, %p99
    %p101 = scmp.ne.s32.totalorder %s90, %s91
    %p102 = scmp.eq.s32.totalorder %s14, 0
    %p103 = por %p101, %p102
    %p104 = scmp.ne.s32.totalorder %s90, %s91
    %p105 = scmp.eq.s32.totalorder %s15, 1
    %p106 = por %p104, %p105
    %p108 = scmp.ne.s32.totalorder %s91, %s107
    %p109 = scmp.eq.s32.totalorder %s15, 0
    %p110 = por %p108, %p109
    %p111 = scmp.le.s32.totalorder 1, %s9
    %p112 = scmp.lt.s32.totalorder %s9, 3
    %p113 = pnand %p111, %p112
    %p114 = pneg %p113
    // Predicated region
    $region9: #{net_forward.5} parent=5 // pred_check
      _
    $region10: #{net_forward.5} parent=5 // pred_check_branch
      %116 = sbr.rel (%p113) target = $region12
    $region11: #{net_forward.5} parent=5 // pred_region
      %s117 = ssub.s32 %s9, 1
      // Predicated region
      $region13: #{net_forward.5} parent=11 // pred_check
        %p118 = pneg %p56
      $region14: #{net_forward.5} parent=11 // pred_check_branch
        %120 = sbr.rel (%p118) target = $region16
      $region15: #{net_forward.5} parent=11 // pred_region
        _
      $region16: #{net_forward.5} parent=11 // pred_fallthru
        _
      // Predicated region
      $region17: #{net_forward.5} parent=11 // pred_check
        %p121 = pneg %p77
      $region18: #{net_forward.5} parent=11 // pred_check_branch
        %123 = sbr.rel (%p121) target = $region20
      $region19: #{net_forward.5} parent=11 // pred_region
        _
      $region20: #{net_forward.5} parent=11 // pred_fallthru
        _
    $region12: #{net_forward.5} parent=5 // pred_fallthru
      _
    %p124 = scmp.lt.s32.totalorder %s9, 2
    // Predicated region
    $region21: #{net_forward.5} parent=5 // pred_check
      %p125 = pneg %p124
    $region22: #{net_forward.5} parent=5 // pred_check_branch
      %127 = sbr.rel (%p125) target = $region24
    $region23: #{net_forward.5} parent=5 // pred_region
      // Predicated region
      $region25: #{net_forward.5} parent=23 // pred_check
        %p128 = pneg %p29
      $region26: #{net_forward.5} parent=23 // pred_check_branch
        %130 = sbr.rel (%p128) target = $region28
      $region27: #{net_forward.5} parent=23 // pred_region
        %s131 = smul.u32 98, %s9
        %p132 = scmp.lt.s32.totalorder %s131, 195
        %s133 = scalar_select %p132, %s131, 195
        %s134 = smul.addr %s133, 4
        %s135 = scalar_lea.vmem %s0, %s134
        %s136 = smul.u32 98, %s9
      $region28: #{net_forward.5} parent=23 // pred_fallthru
        _
    $region24: #{net_forward.5} parent=5 // pred_fallthru
      _
    %p137 = scmp.le.s32.totalorder 1, %s9
    %p138 = scmp.lt.s32.totalorder %s9, 3
    %p139 = pnand %p137, %p138
    %p140 = pneg %p139
    // Predicated region
    $region29: #{net_forward.5} parent=5 // pred_check
      _
    $region30: #{net_forward.5} parent=5 // pred_check_branch
      %142 = sbr.rel (%p139) target = $region32
    $region31: #{net_forward.5} parent=5 // pred_region
      %s143 = ssub.s32 %s9, 1
      %s144 = smul.u32 98, %s14
      %p145 = scmp.lt.s32.totalorder %s144, 195
      %s146 = scalar_select %p145, %s144, 195
      %s147 = smul.addr %s146, 4
      %s148 = scalar_lea.vmem %s0, %s147
      %p149 = pneg %p35
      %p150 = pneg %p32
      %p151 = pneg %p56
      %p152 = pneg %p53
      %p153 = pneg %p77
      %p154 = pneg %p74
      %p155 = pneg %p103
      %p156 = pneg %p100
      %s157 = smul.u32 98, %s14
      %p158 = scmp.lt.s32.totalorder %s157, 195
      %s159 = scalar_select %p158, %s157, 195
      %s160 = smul.addr %s159, 4
      %s161 = scalar_lea.vmem %s3, %s160
      %s162 = smul.u32 98, %s14
      %p163 = scmp.lt.s32.totalorder %s162, 195
      %s164 = scalar_select %p163, %s162, 195
      %s165 = smul.addr %s164, 4
      %s166 = scalar_lea.vmem %s0, %s165
      %s167 = smul.u32 98, %s14
      %s168 = smul.u32 98, %s14
      %p169 = scmp.lt.s32.totalorder %s168, 195
      %s170 = scalar_select %p169, %s168, 195
      %s171 = smul.addr %s170, 4
      %s172 = scalar_lea.vmem %s3, %s171
      %s173 = smul.u32 98, %s14
      %v175 = vld [vmem:[%s166] sm:$0xf]
      %v176 = vld [vmem:[%s166 + $0x4] sm:$0xf]
      %v177 = vld [vmem:[%s166 + $0x8] sm:$0xf]
      %v178 = vld [vmem:[%s166 + $0xc] sm:$0xf]
      %v179 = vld [vmem:[%s166 + $0x10] sm:$0xf]
      %v180 = vld [vmem:[%s166 + $0x14] sm:$0xf]
      %v181 = vld [vmem:[%s166 + $0x18] sm:$0xf]
      %v182 = vld [vmem:[%s166 + $0x1c] sm:$0xf]
      %v183 = vld [vmem:[%s166 + $0x20] sm:$0xf]
      %v184 = vld [vmem:[%s166 + $0x24] sm:$0xf]
      %v185 = vld [vmem:[%s166 + $0x28] sm:$0xf]
      %v186 = vld [vmem:[%s166 + $0x2c] sm:$0xf]
      %v187 = vld [vmem:[%s166 + $0x30] sm:$0xf]
      %v188 = vld [vmem:[%s166 + $0x34] sm:$0xf]
      %v189 = vld [vmem:[%s166 + $0x38] sm:$0xf]
      %v190 = vld [vmem:[%s166 + $0x3c] sm:$0xf]
      %v191 = vld [vmem:[%s166 + $0x40] sm:$0xf]
      %v192 = vld [vmem:[%s166 + $0x44] sm:$0xf]
      %v193 = vld [vmem:[%s166 + $0x48] sm:$0xf]
      %v194 = vld [vmem:[%s166 + $0x4c] sm:$0xf]
      %v195 = vld [vmem:[%s166 + $0x50] sm:$0xf]
      %v196 = vld [vmem:[%s166 + $0x54] sm:$0xf]
      %v197 = vld [vmem:[%s166 + $0x58] sm:$0xf]
      %v198 = vld [vmem:[%s166 + $0x5c] sm:$0xf]
      %v199 = vld [vmem:[%s166 + $0x60] sm:$0xf]
      %v200 = vld [vmem:[%s166 + $0x64] sm:$0xf]
      %v201 = vld [vmem:[%s166 + $0x68] sm:$0xf]
      %v202 = vld [vmem:[%s166 + $0x6c] sm:$0xf]
      %v203 = vld [vmem:[%s166 + $0x70] sm:$0xf]
      %v204 = vld [vmem:[%s166 + $0x74] sm:$0xf]
      %v205 = vld [vmem:[%s166 + $0x78] sm:$0xf]
      %v206 = vld [vmem:[%s166 + $0x7c] sm:$0xf]
      %v207 = vld [vmem:[%s166 + $0x80] sm:$0xf]
      %v208 = vld [vmem:[%s166 + $0x84] sm:$0xf]
      %v209 = vld [vmem:[%s166 + $0x88] sm:$0xf]
      %v210 = vld [vmem:[%s166 + $0x8c] sm:$0xf]
      %v211 = vld [vmem:[%s166 + $0x90] sm:$0xf]
      %v212 = vld [vmem:[%s166 + $0x94] sm:$0xf]
      %v213 = vld [vmem:[%s166 + $0x98] sm:$0xf]
      %v214 = vld [vmem:[%s166 + $0x9c] sm:$0xf]
      %v215 = vld [vmem:[%s166 + $0xa0] sm:$0xf]
      %v216 = vld [vmem:[%s166 + $0xa4] sm:$0xf]
      %v217 = vld [vmem:[%s166 + $0xa8] sm:$0xf]
      %v218 = vld [vmem:[%s166 + $0xac] sm:$0xf]
      %v219 = vld [vmem:[%s166 + $0xb0] sm:$0xf]
      %v220 = vld [vmem:[%s166 + $0xb4] sm:$0xf]
      %v221 = vld [vmem:[%s166 + $0xb8] sm:$0xf]
      %v222 = vld [vmem:[%s166 + $0xbc] sm:$0xf]
      %v223 = vld [vmem:[%s166 + $0xc0] sm:$0xf]
      %v224 = vld [vmem:[%s166 + $0xc4] sm:$0xf]
      %v225 = vld [vmem:[%s166 + $0xc8] sm:$0xf]
      %v226 = vld [vmem:[%s166 + $0xcc] sm:$0xf]
      %v227 = vld [vmem:[%s166 + $0xd0] sm:$0xf]
      %v228 = vld [vmem:[%s166 + $0xd4] sm:$0xf]
      %v229 = vld [vmem:[%s166 + $0xd8] sm:$0xf]
      %v230 = vld [vmem:[%s166 + $0xdc] sm:$0xf]
      %v231 = vld [vmem:[%s166 + $0xe0] sm:$0xf]
      %v232 = vld [vmem:[%s166 + $0xe4] sm:$0xf]
      %v233 = vld [vmem:[%s166 + $0xe8] sm:$0xf]
      %v234 = vld [vmem:[%s166 + $0xec] sm:$0xf]
      %v235 = vld [vmem:[%s166 + $0xf0] sm:$0xf]
      %v236 = vld [vmem:[%s166 + $0xf4] sm:$0xf]
      %v237 = vld [vmem:[%s166 + $0xf8] sm:$0xf]
      %v238 = vld [vmem:[%s166 + $0xfc] sm:$0xf]
      %v239 = vld [vmem:[%s166 + $0x100] sm:$0xf]
      %v240 = vld [vmem:[%s166 + $0x104] sm:$0xf]
      %v241 = vld [vmem:[%s166 + $0x108] sm:$0xf]
      %v242 = vld [vmem:[%s166 + $0x10c] sm:$0xf]
      %v243 = vld [vmem:[%s166 + $0x110] sm:$0xf]
      %v244 = vld [vmem:[%s166 + $0x114] sm:$0xf]
      %v245 = vld [vmem:[%s166 + $0x118] sm:$0xf]
      %v246 = vld [vmem:[%s166 + $0x11c] sm:$0xf]
      %v247 = vld [vmem:[%s166 + $0x120] sm:$0xf]
      %v248 = vld [vmem:[%s166 + $0x124] sm:$0xf]
      %v249 = vld [vmem:[%s166 + $0x128] sm:$0xf]
      %v250 = vld [vmem:[%s166 + $0x12c] sm:$0xf]
      %v251 = vld [vmem:[%s166 + $0x130] sm:$0xf]
      %v252 = vld [vmem:[%s166 + $0x134] sm:$0xf]
      %v253 = vld [vmem:[%s166 + $0x138] sm:$0xf]
      %v254 = vld [vmem:[%s166 + $0x13c] sm:$0xf]
      %v255 = vld [vmem:[%s166 + $0x140] sm:$0xf]
      %v256 = vld [vmem:[%s166 + $0x144] sm:$0xf]
      %v257 = vld [vmem:[%s166 + $0x148] sm:$0xf]
      %v258 = vld [vmem:[%s166 + $0x14c] sm:$0xf]
      %v259 = vld [vmem:[%s166 + $0x150] sm:$0xf]
      %v260 = vld [vmem:[%s166 + $0x154] sm:$0xf]
      %v261 = vld [vmem:[%s166 + $0x158] sm:$0xf]
      %v262 = vld [vmem:[%s166 + $0x15c] sm:$0xf]
      %v263 = vld [vmem:[%s166 + $0x160] sm:$0xf]
      %v264 = vld [vmem:[%s166 + $0x164] sm:$0xf]
      %v265 = vld [vmem:[%s166 + $0x168] sm:$0xf]
      %v266 = vld [vmem:[%s166 + $0x16c] sm:$0xf]
      %v267 = vld [vmem:[%s166 + $0x170] sm:$0xf]
      %v268 = vld [vmem:[%s166 + $0x174] sm:$0xf]
      %v269 = vld [vmem:[%s166 + $0x178] sm:$0xf]
      %v270 = vld [vmem:[%s166 + $0x17c] sm:$0xf]
      %v271 = vld [vmem:[%s166 + $0x180] sm:$0xf]
      %v272 = vld [vmem:[%s166 + $0x184] sm:$0xf]
      %v273 = vld [vmem:[%s1] sm:$0xf]
      %v274 = vld [vmem:[%s1 + $0x4] sm:$0xf]
      %v275 = vld [vmem:[%s1 + $0x8] sm:$0xf]
      %v276 = vld [vmem:[%s1 + $0xc] sm:$0xf]
      %v277 = vld [vmem:[%s1 + $0x10] sm:$0xf]
      %v278 = vld [vmem:[%s1 + $0x14] sm:$0xf]
      %v279 = vld [vmem:[%s1 + $0x18] sm:$0xf]
      %v280 = vld [vmem:[%s1 + $0x1c] sm:$0xf]
      %v281 = vld [vmem:[%s1 + $0x20] sm:$0xf]
      %v282 = vld [vmem:[%s1 + $0x24] sm:$0x3]
      %v283 = vld [vmem:[%s2] sm:$0x1]
      %v285 = vlaneseq
      %v286 = vshrl.u32 %v285, 7
      %v287 = vsub.s32 0, %v286
      %v288 = vrot.slane %v283, %v287
      %v388 = vunpack.c.l.b16 %v175
      %v389 = vunpack.c.l.b16 %v176
      %v390 = vunpack.c.l.b16 %v177
      %v391 = vunpack.c.l.b16 %v178
      %v392 = vunpack.c.l.b16 %v179
      %v393 = vunpack.c.l.b16 %v180
      %v394 = vunpack.c.l.b16 %v181
      %v395 = vunpack.c.l.b16 %v182
      %v396 = vunpack.c.l.b16 %v183
      %v397 = vunpack.c.l.b16 %v184
      %v398 = vunpack.c.l.b16 %v185
      %v399 = vunpack.c.l.b16 %v186
      %v400 = vunpack.c.l.b16 %v187
      %v401 = vunpack.c.l.b16 %v188
      %v402 = vunpack.c.l.b16 %v189
      %v403 = vunpack.c.l.b16 %v190
      %v404 = vunpack.c.l.b16 %v191
      %v405 = vunpack.c.l.b16 %v192
      %v406 = vunpack.c.l.b16 %v193
      %v407 = vunpack.c.l.b16 %v194
      %v408 = vunpack.c.l.b16 %v195
      %v409 = vunpack.c.l.b16 %v196
      %v410 = vunpack.c.l.b16 %v197
      %v411 = vunpack.c.l.b16 %v198
      %v412 = vunpack.c.l.b16 %v199
      %v413 = vunpack.c.l.b16 %v200
      %v414 = vunpack.c.l.b16 %v201
      %v415 = vunpack.c.l.b16 %v202
      %v416 = vunpack.c.l.b16 %v203
      %v417 = vunpack.c.l.b16 %v204
      %v418 = vunpack.c.l.b16 %v205
      %v419 = vunpack.c.l.b16 %v206
      %v420 = vunpack.c.l.b16 %v207
      %v421 = vunpack.c.l.b16 %v208
      %v422 = vunpack.c.l.b16 %v209
      %v423 = vunpack.c.l.b16 %v210
      %v424 = vunpack.c.l.b16 %v211
      %v425 = vunpack.c.l.b16 %v212
      %v426 = vunpack.c.l.b16 %v213
      %v427 = vunpack.c.l.b16 %v214
      %v428 = vunpack.c.l.b16 %v215
      %v429 = vunpack.c.l.b16 %v216
      %v430 = vunpack.c.l.b16 %v217
      %v431 = vunpack.c.l.b16 %v218
      %v432 = vunpack.c.l.b16 %v219
      %v433 = vunpack.c.l.b16 %v220
      %v434 = vunpack.c.l.b16 %v221
      %v435 = vunpack.c.l.b16 %v222
      %v436 = vunpack.c.l.b16 %v223
      %v437 = vunpack.c.l.b16 %v224
      %v438 = vunpack.c.l.b16 %v225
      %v439 = vunpack.c.l.b16 %v226
      %v440 = vunpack.c.l.b16 %v227
      %v441 = vunpack.c.l.b16 %v228
      %v442 = vunpack.c.l.b16 %v229
      %v443 = vunpack.c.l.b16 %v230
      %v444 = vunpack.c.l.b16 %v231
      %v445 = vunpack.c.l.b16 %v232
      %v446 = vunpack.c.l.b16 %v233
      %v447 = vunpack.c.l.b16 %v234
      %v448 = vunpack.c.l.b16 %v235
      %v449 = vunpack.c.l.b16 %v236
      %v450 = vunpack.c.l.b16 %v237
      %v451 = vunpack.c.l.b16 %v238
      %v452 = vunpack.c.l.b16 %v239
      %v453 = vunpack.c.l.b16 %v240
      %v454 = vunpack.c.l.b16 %v241
      %v455 = vunpack.c.l.b16 %v242
      %v456 = vunpack.c.l.b16 %v243
      %v457 = vunpack.c.l.b16 %v244
      %v458 = vunpack.c.l.b16 %v245
      %v459 = vunpack.c.l.b16 %v246
      %v460 = vunpack.c.l.b16 %v247
      %v461 = vunpack.c.l.b16 %v248
      %v462 = vunpack.c.l.b16 %v249
      %v463 = vunpack.c.l.b16 %v250
      %v464 = vunpack.c.l.b16 %v251
      %v465 = vunpack.c.l.b16 %v252
      %v466 = vunpack.c.l.b16 %v253
      %v467 = vunpack.c.l.b16 %v254
      %v468 = vunpack.c.l.b16 %v255
      %v469 = vunpack.c.l.b16 %v256
      %v470 = vunpack.c.l.b16 %v257
      %v471 = vunpack.c.l.b16 %v258
      %v472 = vunpack.c.l.b16 %v259
      %v473 = vunpack.c.l.b16 %v260
      %v474 = vunpack.c.l.b16 %v261
      %v475 = vunpack.c.l.b16 %v262
      %v476 = vunpack.c.l.b16 %v263
      %v477 = vunpack.c.l.b16 %v264
      %v478 = vunpack.c.l.b16 %v265
      %v479 = vunpack.c.l.b16 %v266
      %v480 = vunpack.c.l.b16 %v267
      %v481 = vunpack.c.l.b16 %v268
      %v482 = vunpack.c.l.b16 %v269
      %v483 = vunpack.c.l.b16 %v270
      %v484 = vunpack.c.l.b16 %v271
      %v485 = vunpack.c.l.b16 %v272
      %v486 = vpack.c.b16 %v389, %v388
      %v487 = vpack.c.b16 %v391, %v390
      %v488 = vpack.c.b16 %v393, %v392
      %v489 = vpack.c.b16 %v395, %v394
      %v490 = vpack.c.b16 %v397, %v396
      %v491 = vpack.c.b16 %v399, %v398
      %v492 = vpack.c.b16 %v401, %v400
      %v493 = vpack.c.b16 %v403, %v402
      %v494 = vpack.c.b16 %v405, %v404
      %v495 = vpack.c.b16 %v407, %v406
      %v496 = vpack.c.b16 %v409, %v408
      %v497 = vpack.c.b16 %v411, %v410
      %v498 = vpack.c.b16 %v413, %v412
      %v499 = vpack.c.b16 %v415, %v414
      %v500 = vpack.c.b16 %v417, %v416
      %v501 = vpack.c.b16 %v419, %v418
      %v502 = vpack.c.b16 %v421, %v420
      %v503 = vpack.c.b16 %v423, %v422
      %v504 = vpack.c.b16 %v425, %v424
      %v505 = vpack.c.b16 %v427, %v426
      %v506 = vpack.c.b16 %v429, %v428
      %v507 = vpack.c.b16 %v431, %v430
      %v508 = vpack.c.b16 %v433, %v432
      %v509 = vpack.c.b16 %v435, %v434
      %v510 = vpack.c.b16 %v437, %v436
      %v511 = vpack.c.b16 %v439, %v438
      %v512 = vpack.c.b16 %v441, %v440
      %v513 = vpack.c.b16 %v443, %v442
      %v514 = vpack.c.b16 %v445, %v444
      %v515 = vpack.c.b16 %v447, %v446
      %v516 = vpack.c.b16 %v449, %v448
      %v517 = vpack.c.b16 %v451, %v450
      %v518 = vpack.c.b16 %v453, %v452
      %v519 = vpack.c.b16 %v455, %v454
      %v520 = vpack.c.b16 %v457, %v456
      %v521 = vpack.c.b16 %v459, %v458
      %v522 = vpack.c.b16 %v461, %v460
      %v523 = vpack.c.b16 %v463, %v462
      %v524 = vpack.c.b16 %v465, %v464
      %v525 = vpack.c.b16 %v467, %v466
      %v526 = vpack.c.b16 %v469, %v468
      %v527 = vpack.c.b16 %v471, %v470
      %v528 = vpack.c.b16 %v473, %v472
      %v529 = vpack.c.b16 %v475, %v474
      %v530 = vpack.c.b16 %v477, %v476
      %v531 = vpack.c.b16 %v479, %v478
      %v532 = vpack.c.b16 %v481, %v480
      %v533 = vpack.c.b16 %v483, %v482
      %v534 = vpack.c.b16 %v485, %v484
      %v545 = vunpack.c.l.b16 %v273
      %v546 = vunpack.c.l.b16 %v274
      %v547 = vunpack.c.l.b16 %v275
      %v548 = vunpack.c.l.b16 %v276
      %v549 = vunpack.c.l.b16 %v277
      %v550 = vunpack.c.l.b16 %v278
      %v551 = vunpack.c.l.b16 %v279
      %v552 = vunpack.c.l.b16 %v280
      %v553 = vunpack.c.l.b16 %v281
      %v554 = vunpack.c.l.b16 %v282
      %v555 = vpack.c.b16 %v546, %v545
      %v556 = vpack.c.b16 %v548, %v547
      %v557 = vpack.c.b16 %v550, %v549
      %v558 = vpack.c.b16 %v552, %v551
      %v559 = vpack.c.b16 %v554, %v553
      %vm564 = vcmask 613376
      %v566 = vsel %vm564, %v486, 0
      %v569 = vsel %vm564, %v487, 0
      %v572 = vsel %vm564, %v488, 0
      %v575 = vsel %vm564, %v489, 0
      %v578 = vsel %vm564, %v490, 0
      %v581 = vsel %vm564, %v491, 0
      %v584 = vsel %vm564, %v492, 0
      %v587 = vsel %vm564, %v493, 0
      %v590 = vsel %vm564, %v494, 0
      %v593 = vsel %vm564, %v495, 0
      %v596 = vsel %vm564, %v496, 0
      %v599 = vsel %vm564, %v497, 0
      %v602 = vsel %vm564, %v498, 0
      %v605 = vsel %vm564, %v499, 0
      %v608 = vsel %vm564, %v500, 0
      %v611 = vsel %vm564, %v501, 0
      %v614 = vsel %vm564, %v502, 0
      %v617 = vsel %vm564, %v503, 0
      %v620 = vsel %vm564, %v504, 0
      %v623 = vsel %vm564, %v505, 0
      %v626 = vsel %vm564, %v506, 0
      %v629 = vsel %vm564, %v507, 0
      %v632 = vsel %vm564, %v508, 0
      %v635 = vsel %vm564, %v509, 0
      %v638 = vsel %vm564, %v510, 0
      %v641 = vsel %vm564, %v511, 0
      %v644 = vsel %vm564, %v512, 0
      %v647 = vsel %vm564, %v513, 0
      %v650 = vsel %vm564, %v514, 0
      %v653 = vsel %vm564, %v515, 0
      %v656 = vsel %vm564, %v516, 0
      %v659 = vsel %vm564, %v517, 0
      %v662 = vsel %vm564, %v518, 0
      %v665 = vsel %vm564, %v519, 0
      %v668 = vsel %vm564, %v520, 0
      %v671 = vsel %vm564, %v521, 0
      %v674 = vsel %vm564, %v522, 0
      %v677 = vsel %vm564, %v523, 0
      %v680 = vsel %vm564, %v524, 0
      %v683 = vsel %vm564, %v525, 0
      %v686 = vsel %vm564, %v526, 0
      %v689 = vsel %vm564, %v527, 0
      %v692 = vsel %vm564, %v528, 0
      %v695 = vsel %vm564, %v529, 0
      %v698 = vsel %vm564, %v530, 0
      %v701 = vsel %vm564, %v531, 0
      %v704 = vsel %vm564, %v532, 0
      %v707 = vsel %vm564, %v533, 0
      %v710 = vsel %vm564, %v534, 0
      %vm712 = vcmask 1044480
      %vm713 = vcmask 1045504
      %v714 = vsel %vm712, 4294967295, 65535
      %v715 = vsel %vm713, %v714, 0
      %v717 = vand.u32 %v559, %v715
      %719 = vmatprep.subr.bf16.mxu0 0
      %720 = vmatpush1.bf16.msra.mxu0 %v555
      %721 = vmatprep.subr.bf16.mxu0 0
      %722 = vmatpush1.bf16.msra.mxu0 %v556
      %723 = vmatprep.subr.bf16.mxu0 0
      %724 = vmatpush1.bf16.msra.mxu0 %v557
      %725 = vmatprep.subr.bf16.mxu0 0
      %726 = vmatpush1.bf16.msra.mxu0 %v558
      %727 = vmatprep.subr.bf16.mxu0 0
      %728 = vmatpush1.bf16.msra.mxu0 %v717
      %729 = vmatprep.subr.bf16.mxu0 0
      %730 = vmatpush1.bf16.msra.mxu0 0
      %731 = vmatprep.subr.bf16.mxu0 0
      %732 = vmatpush1.bf16.msra.mxu0 0
      %733 = vmatprep.subr.bf16.mxu0 0
      %734 = vmatpush1.bf16.msra.mxu0 0
      %735 = vmatprep.subr.bf16.mxu0 0
      %736 = vmatpush1.bf16.msra.mxu0 0
      %737 = vmatprep.subr.bf16.mxu0 0
      %738 = vmatpush1.bf16.msra.mxu0 0
      %739 = vmatprep.subr.bf16.mxu0 0
      %740 = vmatpush1.bf16.msra.mxu0 0
      %741 = vmatprep.subr.bf16.mxu0 0
      %742 = vmatpush1.bf16.msra.mxu0 0
      %743 = vmatprep.subr.bf16.mxu0 0
      %744 = vmatpush1.bf16.msra.mxu0 0
      %745 = vmatprep.subr.bf16.mxu0 0
      %746 = vmatpush1.bf16.msra.mxu0 0
      %747 = vmatprep.subr.bf16.mxu0 0
      %748 = vmatpush1.bf16.msra.mxu0 0
      %749 = vmatprep.subr.bf16.mxu0 0
      %750 = vmatpush1.bf16.msra.mxu0 0
      %751 = vmatprep.mubr.bf16.mxu0 0
      %752 = vmatmul.mubr.bf16.gmra.mrb[0].mxu0 %v566
      %v753 = vpop.f32.mrb[0].mxu0
      %v754 = vadd.f32 %v288, %v753
      %v755 = vpop.f32.mrb[0].mxu0
      %v756 = vpop.f32.mrb[0].mxu0
      %v757 = vadd.f32 %v288, %v756
      %v758 = vpop.f32.mrb[0].mxu0
      %759 = vmatprep.mubr.bf16.mxu0 0
      %760 = vmatmul.mubr.bf16.gmra.mrb[0].mxu0 %v569
      %v761 = vpop.f32.mrb[0].mxu0
      %v762 = vadd.f32 %v288, %v761
      %v763 = vpop.f32.mrb[0].mxu0
      %v764 = vpop.f32.mrb[0].mxu0
      %v765 = vadd.f32 %v288, %v764
      %v766 = vpop.f32.mrb[0].mxu0
      %767 = vmatprep.mubr.bf16.mxu0 0
      %768 = vmatmul.mubr.bf16.gmra.mrb[0].mxu0 %v572
      %v769 = vpop.f32.mrb[0].mxu0
      %v770 = vadd.f32 %v288, %v769
      %v771 = vpop.f32.mrb[0].mxu0
      %v772 = vpop.f32.mrb[0].mxu0
      %v773 = vadd.f32 %v288, %v772
      %v774 = vpop.f32.mrb[0].mxu0
      %775 = vmatprep.mubr.bf16.mxu0 0
      %776 = vmatmul.mubr.bf16.gmra.mrb[0].mxu0 %v575
      %v777 = vpop.f32.mrb[0].mxu0
      %v778 = vadd.f32 %v288, %v777
      %v779 = vpop.f32.mrb[0].mxu0
      %v780 = vpop.f32.mrb[0].mxu0
      %v781 = vadd.f32 %v288, %v780
      %v782 = vpop.f32.mrb[0].mxu0
      %783 = vmatprep.mubr.bf16.mxu0 0
      %784 = vmatmul.mubr.bf16.gmra.mrb[0].mxu0 %v578
      %v785 = vpop.f32.mrb[0].mxu0
      %v786 = vadd.f32 %v288, %v785
      %v787 = vpop.f32.mrb[0].mxu0
      %v788 = vpop.f32.mrb[0].mxu0
      %v789 = vadd.f32 %v288, %v788
      %v790 = vpop.f32.mrb[0].mxu0
      %791 = vmatprep.mubr.bf16.mxu0 0
      %792 = vmatmul.mubr.bf16.gmra.mrb[0].mxu0 %v581
      %v793 = vpop.f32.mrb[0].mxu0
      %v794 = vadd.f32 %v288, %v793
      %v795 = vpop.f32.mrb[0].mxu0
      %v796 = vpop.f32.mrb[0].mxu0
      %v797 = vadd.f32 %v288, %v796
      %v798 = vpop.f32.mrb[0].mxu0
      %799 = vmatprep.mubr.bf16.mxu0 0
      %800 = vmatmul.mubr.bf16.gmra.mrb[0].mxu0 %v584
      %v801 = vpop.f32.mrb[0].mxu0
      %v802 = vadd.f32 %v288, %v801
      %v803 = vpop.f32.mrb[0].mxu0
      %v804 = vpop.f32.mrb[0].mxu0
      %v805 = vadd.f32 %v288, %v804
      %v806 = vpop.f32.mrb[0].mxu0
      %807 = vmatprep.mubr.bf16.mxu0 0
      %808 = vmatmul.mubr.bf16.gmra.mrb[0].mxu0 %v587
      %v809 = vpop.f32.mrb[0].mxu0
      %v810 = vadd.f32 %v288, %v809
      %v811 = vpop.f32.mrb[0].mxu0
      %v812 = vpop.f32.mrb[0].mxu0
      %v813 = vadd.f32 %v288, %v812
      %v814 = vpop.f32.mrb[0].mxu0
      %815 = vmatprep.mubr.bf16.mxu0 0
      %816 = vmatmul.mubr.bf16.gmra.mrb[0].mxu0 %v590
      %v817 = vpop.f32.mrb[0].mxu0
      %v818 = vadd.f32 %v288, %v817
      %v819 = vpop.f32.mrb[0].mxu0
      %v820 = vpop.f32.mrb[0].mxu0
      %v821 = vadd.f32 %v288, %v820
      %v822 = vpop.f32.mrb[0].mxu0
      %823 = vmatprep.mubr.bf16.mxu0 0
      %824 = vmatmul.mubr.bf16.gmra.mrb[0].mxu0 %v593
      %v825 = vpop.f32.mrb[0].mxu0
      %v826 = vadd.f32 %v288, %v825
      %v827 = vpop.f32.mrb[0].mxu0
      %v828 = vpop.f32.mrb[0].mxu0
      %v829 = vadd.f32 %v288, %v828
      %v830 = vpop.f32.mrb[0].mxu0
      %831 = vmatprep.mubr.bf16.mxu0 0
      %832 = vmatmul.mubr.bf16.gmra.mrb[0].mxu0 %v596
      %v833 = vpop.f32.mrb[0].mxu0
      %v834 = vadd.f32 %v288, %v833
      %v835 = vpop.f32.mrb[0].mxu0
      %v836 = vpop.f32.mrb[0].mxu0
      %v837 = vadd.f32 %v288, %v836
      %v838 = vpop.f32.mrb[0].mxu0
      %839 = vmatprep.mubr.bf16.mxu0 0
      %840 = vmatmul.mubr.bf16.gmra.mrb[0].mxu0 %v599
      %v841 = vpop.f32.mrb[0].mxu0
      %v842 = vadd.f32 %v288, %v841
      %v843 = vpop.f32.mrb[0].mxu0
      %v844 = vpop.f32.mrb[0].mxu0
      %v845 = vadd.f32 %v288, %v844
      %v846 = vpop.f32.mrb[0].mxu0
      %847 = vmatprep.mubr.bf16.mxu0 0
      %848 = vmatmul.mubr.bf16.gmra.mrb[0].mxu0 %v602
      %v849 = vpop.f32.mrb[0].mxu0
      %v850 = vadd.f32 %v288, %v849
      %v851 = vpop.f32.mrb[0].mxu0
      %v852 = vpop.f32.mrb[0].mxu0
      %v853 = vadd.f32 %v288, %v852
      %v854 = vpop.f32.mrb[0].mxu0
      %855 = vmatprep.mubr.bf16.mxu0 0
      %856 = vmatmul.mubr.bf16.gmra.mrb[0].mxu0 %v605
      %v857 = vpop.f32.mrb[0].mxu0
      %v858 = vadd.f32 %v288, %v857
      %v859 = vpop.f32.mrb[0].mxu0
      %v860 = vpop.f32.mrb[0].mxu0
      %v861 = vadd.f32 %v288, %v860
      %v862 = vpop.f32.mrb[0].mxu0
      %863 = vmatprep.mubr.bf16.mxu0 0
      %864 = vmatmul.mubr.bf16.gmra.mrb[0].mxu0 %v608
      %v865 = vpop.f32.mrb[0].mxu0
      %v866 = vadd.f32 %v288, %v865
      %v867 = vpop.f32.mrb[0].mxu0
      %v868 = vpop.f32.mrb[0].mxu0
      %v869 = vadd.f32 %v288, %v868
      %v870 = vpop.f32.mrb[0].mxu0
      %871 = vmatprep.mubr.bf16.mxu0 0
      %872 = vmatmul.mubr.bf16.gmra.mrb[0].mxu0 %v611
      %v873 = vpop.f32.mrb[0].mxu0
      %v874 = vadd.f32 %v288, %v873
      %v875 = vpop.f32.mrb[0].mxu0
      %v876 = vpop.f32.mrb[0].mxu0
      %v877 = vadd.f32 %v288, %v876
      %v878 = vpop.f32.mrb[0].mxu0
      %879 = vmatprep.mubr.bf16.mxu0 0
      %880 = vmatmul.mubr.bf16.gmra.mrb[0].mxu0 %v614
      %v881 = vpop.f32.mrb[0].mxu0
      %v882 = vadd.f32 %v288, %v881
      %v883 = vpop.f32.mrb[0].mxu0
      %v884 = vpop.f32.mrb[0].mxu0
      %v885 = vadd.f32 %v288, %v884
      %v886 = vpop.f32.mrb[0].mxu0
      %887 = vmatprep.mubr.bf16.mxu0 0
      %888 = vmatmul.mubr.bf16.gmra.mrb[0].mxu0 %v617
      %v889 = vpop.f32.mrb[0].mxu0
      %v890 = vadd.f32 %v288, %v889
      %v891 = vpop.f32.mrb[0].mxu0
      %v892 = vpop.f32.mrb[0].mxu0
      %v893 = vadd.f32 %v288, %v892
      %v894 = vpop.f32.mrb[0].mxu0
      %895 = vmatprep.mubr.bf16.mxu0 0
      %896 = vmatmul.mubr.bf16.gmra.mrb[0].mxu0 %v620
      %v897 = vpop.f32.mrb[0].mxu0
      %v898 = vadd.f32 %v288, %v897
      %v899 = vpop.f32.mrb[0].mxu0
      %v900 = vpop.f32.mrb[0].mxu0
      %v901 = vadd.f32 %v288, %v900
      %v902 = vpop.f32.mrb[0].mxu0
      %903 = vmatprep.mubr.bf16.mxu0 0
      %904 = vmatmul.mubr.bf16.gmra.mrb[0].mxu0 %v623
      %v905 = vpop.f32.mrb[0].mxu0
      %v906 = vadd.f32 %v288, %v905
      %v907 = vpop.f32.mrb[0].mxu0
      %v908 = vpop.f32.mrb[0].mxu0
      %v909 = vadd.f32 %v288, %v908
      %v910 = vpop.f32.mrb[0].mxu0
      %911 = vmatprep.mubr.bf16.mxu0 0
      %912 = vmatmul.mubr.bf16.gmra.mrb[0].mxu0 %v626
      %v913 = vpop.f32.mrb[0].mxu0
      %v914 = vadd.f32 %v288, %v913
      %v915 = vpop.f32.mrb[0].mxu0
      %v916 = vpop.f32.mrb[0].mxu0
      %v917 = vadd.f32 %v288, %v916
      %v918 = vpop.f32.mrb[0].mxu0
      %919 = vmatprep.mubr.bf16.mxu0 0
      %920 = vmatmul.mubr.bf16.gmra.mrb[0].mxu0 %v629
      %v921 = vpop.f32.mrb[0].mxu0
      %v922 = vadd.f32 %v288, %v921
      %v923 = vpop.f32.mrb[0].mxu0
      %v924 = vpop.f32.mrb[0].mxu0
      %v925 = vadd.f32 %v288, %v924
      %v926 = vpop.f32.mrb[0].mxu0
      %927 = vmatprep.mubr.bf16.mxu0 0
      %928 = vmatmul.mubr.bf16.gmra.mrb[0].mxu0 %v632
      %v929 = vpop.f32.mrb[0].mxu0
      %v930 = vadd.f32 %v288, %v929
      %v931 = vpop.f32.mrb[0].mxu0
      %v932 = vpop.f32.mrb[0].mxu0
      %v933 = vadd.f32 %v288, %v932
      %v934 = vpop.f32.mrb[0].mxu0
      %935 = vmatprep.mubr.bf16.mxu0 0
      %936 = vmatmul.mubr.bf16.gmra.mrb[0].mxu0 %v635
      %v937 = vpop.f32.mrb[0].mxu0
      %v938 = vadd.f32 %v288, %v937
      %v939 = vpop.f32.mrb[0].mxu0
      %v940 = vpop.f32.mrb[0].mxu0
      %v941 = vadd.f32 %v288, %v940
      %v942 = vpop.f32.mrb[0].mxu0
      %943 = vmatprep.mubr.bf16.mxu0 0
      %944 = vmatmul.mubr.bf16.gmra.mrb[0].mxu0 %v638
      %v945 = vpop.f32.mrb[0].mxu0
      %v946 = vadd.f32 %v288, %v945
      %v947 = vpop.f32.mrb[0].mxu0
      %v948 = vpop.f32.mrb[0].mxu0
      %v949 = vadd.f32 %v288, %v948
      %v950 = vpop.f32.mrb[0].mxu0
      %951 = vmatprep.mubr.bf16.mxu0 0
      %952 = vmatmul.mubr.bf16.gmra.mrb[0].mxu0 %v641
      %v953 = vpop.f32.mrb[0].mxu0
      %v954 = vadd.f32 %v288, %v953
      %v955 = vpop.f32.mrb[0].mxu0
      %v956 = vpop.f32.mrb[0].mxu0
      %v957 = vadd.f32 %v288, %v956
      %v958 = vpop.f32.mrb[0].mxu0
      %959 = vmatprep.mubr.bf16.mxu0 0
      %960 = vmatmul.mubr.bf16.gmra.mrb[0].mxu0 %v644
      %v961 = vpop.f32.mrb[0].mxu0
      %v962 = vadd.f32 %v288, %v961
      %v963 = vpop.f32.mrb[0].mxu0
      %v964 = vpop.f32.mrb[0].mxu0
      %v965 = vadd.f32 %v288, %v964
      %v966 = vpop.f32.mrb[0].mxu0
      %967 = vmatprep.mubr.bf16.mxu0 0
      %968 = vmatmul.mubr.bf16.gmra.mrb[0].mxu0 %v647
      %v969 = vpop.f32.mrb[0].mxu0
      %v970 = vadd.f32 %v288, %v969
      %v971 = vpop.f32.mrb[0].mxu0
      %v972 = vpop.f32.mrb[0].mxu0
      %v973 = vadd.f32 %v288, %v972
      %v974 = vpop.f32.mrb[0].mxu0
      %975 = vmatprep.mubr.bf16.mxu0 0
      %976 = vmatmul.mubr.bf16.gmra.mrb[0].mxu0 %v650
      %v977 = vpop.f32.mrb[0].mxu0
      %v978 = vadd.f32 %v288, %v977
      %v979 = vpop.f32.mrb[0].mxu0
      %v980 = vpop.f32.mrb[0].mxu0
      %v981 = vadd.f32 %v288, %v980
      %v982 = vpop.f32.mrb[0].mxu0
      %983 = vmatprep.mubr.bf16.mxu0 0
      %984 = vmatmul.mubr.bf16.gmra.mrb[0].mxu0 %v653
      %v985 = vpop.f32.mrb[0].mxu0
      %v986 = vadd.f32 %v288, %v985
      %v987 = vpop.f32.mrb[0].mxu0
      %v988 = vpop.f32.mrb[0].mxu0
      %v989 = vadd.f32 %v288, %v988
      %v990 = vpop.f32.mrb[0].mxu0
      %991 = vmatprep.mubr.bf16.mxu0 0
      %992 = vmatmul.mubr.bf16.gmra.mrb[0].mxu0 %v656
      %v993 = vpop.f32.mrb[0].mxu0
      %v994 = vadd.f32 %v288, %v993
      %v995 = vpop.f32.mrb[0].mxu0
      %v996 = vpop.f32.mrb[0].mxu0
      %v997 = vadd.f32 %v288, %v996
      %v998 = vpop.f32.mrb[0].mxu0
      %999 = vmatprep.mubr.bf16.mxu0 0
      %1000 = vmatmul.mubr.bf16.gmra.mrb[0].mxu0 %v659
      %v1001 = vpop.f32.mrb[0].mxu0
      %v1002 = vadd.f32 %v288, %v1001
      %v1003 = vpop.f32.mrb[0].mxu0
      %v1004 = vpop.f32.mrb[0].mxu0
      %v1005 = vadd.f32 %v288, %v1004
      %v1006 = vpop.f32.mrb[0].mxu0
      %1007 = vmatprep.mubr.bf16.mxu0 0
      %1008 = vmatmul.mubr.bf16.gmra.mrb[0].mxu0 %v662
      %v1009 = vpop.f32.mrb[0].mxu0
      %v1010 = vadd.f32 %v288, %v1009
      %v1011 = vpop.f32.mrb[0].mxu0
      %v1012 = vpop.f32.mrb[0].mxu0
      %v1013 = vadd.f32 %v288, %v1012
      %v1014 = vpop.f32.mrb[0].mxu0
      %1015 = vmatprep.mubr.bf16.mxu0 0
      %1016 = vmatmul.mubr.bf16.gmra.mrb[0].mxu0 %v665
      %v1017 = vpop.f32.mrb[0].mxu0
      %v1018 = vadd.f32 %v288, %v1017
      %v1019 = vpop.f32.mrb[0].mxu0
      %v1020 = vpop.f32.mrb[0].mxu0
      %v1021 = vadd.f32 %v288, %v1020
      %v1022 = vpop.f32.mrb[0].mxu0
      %1023 = vmatprep.mubr.bf16.mxu0 0
      %1024 = vmatmul.mubr.bf16.gmra.mrb[0].mxu0 %v668
      %v1025 = vpop.f32.mrb[0].mxu0
      %v1026 = vadd.f32 %v288, %v1025
      %v1027 = vpop.f32.mrb[0].mxu0
      %v1028 = vpop.f32.mrb[0].mxu0
      %v1029 = vadd.f32 %v288, %v1028
      %v1030 = vpop.f32.mrb[0].mxu0
      %1031 = vmatprep.mubr.bf16.mxu0 0
      %1032 = vmatmul.mubr.bf16.gmra.mrb[0].mxu0 %v671
      %v1033 = vpop.f32.mrb[0].mxu0
      %v1034 = vadd.f32 %v288, %v1033
      %v1035 = vpop.f32.mrb[0].mxu0
      %v1036 = vpop.f32.mrb[0].mxu0
      %v1037 = vadd.f32 %v288, %v1036
      %v1038 = vpop.f32.mrb[0].mxu0
      %1039 = vmatprep.mubr.bf16.mxu0 0
      %1040 = vmatmul.mubr.bf16.gmra.mrb[0].mxu0 %v674
      %v1041 = vpop.f32.mrb[0].mxu0
      %v1042 = vadd.f32 %v288, %v1041
      %v1043 = vpop.f32.mrb[0].mxu0
      %v1044 = vpop.f32.mrb[0].mxu0
      %v1045 = vadd.f32 %v288, %v1044
      %v1046 = vpop.f32.mrb[0].mxu0
      %1047 = vmatprep.mubr.bf16.mxu0 0
      %1048 = vmatmul.mubr.bf16.gmra.mrb[0].mxu0 %v677
      %v1049 = vpop.f32.mrb[0].mxu0
      %v1050 = vadd.f32 %v288, %v1049
      %v1051 = vpop.f32.mrb[0].mxu0
      %v1052 = vpop.f32.mrb[0].mxu0
      %v1053 = vadd.f32 %v288, %v1052
      %v1054 = vpop.f32.mrb[0].mxu0
      %1055 = vmatprep.mubr.bf16.mxu0 0
      %1056 = vmatmul.mubr.bf16.gmra.mrb[0].mxu0 %v680
      %v1057 = vpop.f32.mrb[0].mxu0
      %v1058 = vadd.f32 %v288, %v1057
      %v1059 = vpop.f32.mrb[0].mxu0
      %v1060 = vpop.f32.mrb[0].mxu0
      %v1061 = vadd.f32 %v288, %v1060
      %v1062 = vpop.f32.mrb[0].mxu0
      %1063 = vmatprep.mubr.bf16.mxu0 0
      %1064 = vmatmul.mubr.bf16.gmra.mrb[0].mxu0 %v683
      %v1065 = vpop.f32.mrb[0].mxu0
      %v1066 = vadd.f32 %v288, %v1065
      %v1067 = vpop.f32.mrb[0].mxu0
      %v1068 = vpop.f32.mrb[0].mxu0
      %v1069 = vadd.f32 %v288, %v1068
      %v1070 = vpop.f32.mrb[0].mxu0
      %1071 = vmatprep.mubr.bf16.mxu0 0
      %1072 = vmatmul.mubr.bf16.gmra.mrb[0].mxu0 %v686
      %v1073 = vpop.f32.mrb[0].mxu0
      %v1074 = vadd.f32 %v288, %v1073
      %v1075 = vpop.f32.mrb[0].mxu0
      %v1076 = vpop.f32.mrb[0].mxu0
      %v1077 = vadd.f32 %v288, %v1076
      %v1078 = vpop.f32.mrb[0].mxu0
      %1079 = vmatprep.mubr.bf16.mxu0 0
      %1080 = vmatmul.mubr.bf16.gmra.mrb[0].mxu0 %v689
      %v1081 = vpop.f32.mrb[0].mxu0
      %v1082 = vadd.f32 %v288, %v1081
      %v1083 = vpop.f32.mrb[0].mxu0
      %v1084 = vpop.f32.mrb[0].mxu0
      %v1085 = vadd.f32 %v288, %v1084
      %v1086 = vpop.f32.mrb[0].mxu0
      %1087 = vmatprep.mubr.bf16.mxu0 0
      %1088 = vmatmul.mubr.bf16.gmra.mrb[0].mxu0 %v692
      %v1089 = vpop.f32.mrb[0].mxu0
      %v1090 = vadd.f32 %v288, %v1089
      %v1091 = vpop.f32.mrb[0].mxu0
      %v1092 = vpop.f32.mrb[0].mxu0
      %v1093 = vadd.f32 %v288, %v1092
      %v1094 = vpop.f32.mrb[0].mxu0
      %1095 = vmatprep.mubr.bf16.mxu0 0
      %1096 = vmatmul.mubr.bf16.gmra.mrb[0].mxu0 %v695
      %v1097 = vpop.f32.mrb[0].mxu0
      %v1098 = vadd.f32 %v288, %v1097
      %v1099 = vpop.f32.mrb[0].mxu0
      %v1100 = vpop.f32.mrb[0].mxu0
      %v1101 = vadd.f32 %v288, %v1100
      %v1102 = vpop.f32.mrb[0].mxu0
      %1103 = vmatprep.mubr.bf16.mxu0 0
      %1104 = vmatmul.mubr.bf16.gmra.mrb[0].mxu0 %v698
      %v1105 = vpop.f32.mrb[0].mxu0
      %v1106 = vadd.f32 %v288, %v1105
      %v1107 = vpop.f32.mrb[0].mxu0
      %v1108 = vpop.f32.mrb[0].mxu0
      %v1109 = vadd.f32 %v288, %v1108
      %v1110 = vpop.f32.mrb[0].mxu0
      %1111 = vmatprep.mubr.bf16.mxu0 0
      %1112 = vmatmul.mubr.bf16.gmra.mrb[0].mxu0 %v701
      %v1113 = vpop.f32.mrb[0].mxu0
      %v1114 = vadd.f32 %v288, %v1113
      %v1115 = vpop.f32.mrb[0].mxu0
      %v1116 = vpop.f32.mrb[0].mxu0
      %v1117 = vadd.f32 %v288, %v1116
      %v1118 = vpop.f32.mrb[0].mxu0
      %1119 = vmatprep.mubr.bf16.mxu0 0
      %1120 = vmatmul.mubr.bf16.gmra.mrb[0].mxu0 %v704
      %v1121 = vpop.f32.mrb[0].mxu0
      %v1122 = vadd.f32 %v288, %v1121
      %v1123 = vpop.f32.mrb[0].mxu0
      %v1124 = vpop.f32.mrb[0].mxu0
      %v1125 = vadd.f32 %v288, %v1124
      %v1126 = vpop.f32.mrb[0].mxu0
      %1127 = vmatprep.mubr.bf16.mxu0 0
      %1128 = vmatmul.mubr.bf16.gmra.mrb[0].mxu0 %v707
      %v1129 = vpop.f32.mrb[0].mxu0
      %v1130 = vadd.f32 %v288, %v1129
      %v1131 = vpop.f32.mrb[0].mxu0
      %v1132 = vpop.f32.mrb[0].mxu0
      %v1133 = vadd.f32 %v288, %v1132
      %v1134 = vpop.f32.mrb[0].mxu0
      %1135 = vmatprep.mubr.bf16.mxu0 0
      %1136 = vmatmul.mubr.bf16.gmra.mrb[0].mxu0 %v710
      %v1137 = vpop.f32.mrb[0].mxu0
      %v1138 = vadd.f32 %v288, %v1137
      %v1139 = vpop.f32.mrb[0].mxu0
      %v1140 = vpop.f32.mrb[0].mxu0
      %v1141 = vadd.f32 %v288, %v1140
      %v1142 = vpop.f32.mrb[0].mxu0
      %1143 = vdwg.mxu0
      %v1144 = vand.u32 2147483647, %v754
      %v1145 = vand.u32 2147483647, %v757
      %v1146 = vand.u32 2147483647, %v762
      %v1147 = vand.u32 2147483647, %v765
      %v1148 = vand.u32 2147483647, %v770
      %v1149 = vand.u32 2147483647, %v773
      %v1150 = vand.u32 2147483647, %v778
      %v1151 = vand.u32 2147483647, %v781
      %v1152 = vand.u32 2147483647, %v786
      %v1153 = vand.u32 2147483647, %v789
      %v1154 = vand.u32 2147483647, %v794
      %v1155 = vand.u32 2147483647, %v797
      %v1156 = vand.u32 2147483647, %v802
      %v1157 = vand.u32 2147483647, %v805
      %v1158 = vand.u32 2147483647, %v810
      %v1159 = vand.u32 2147483647, %v813
      %v1160 = vand.u32 2147483647, %v818
      %v1161 = vand.u32 2147483647, %v821
      %v1162 = vand.u32 2147483647, %v826
      %v1163 = vand.u32 2147483647, %v829
      %v1164 = vand.u32 2147483647, %v834
      %v1165 = vand.u32 2147483647, %v837
      %v1166 = vand.u32 2147483647, %v842
      %v1167 = vand.u32 2147483647, %v845
      %v1168 = vand.u32 2147483647, %v850
      %v1169 = vand.u32 2147483647, %v853
      %v1170 = vand.u32 2147483647, %v858
      %v1171 = vand.u32 2147483647, %v861
      %v1172 = vand.u32 2147483647, %v866
      %v1173 = vand.u32 2147483647, %v869
      %v1174 = vand.u32 2147483647, %v874
      %v1175 = vand.u32 2147483647, %v877
      %v1176 = vand.u32 2147483647, %v882
      %v1177 = vand.u32 2147483647, %v885
      %v1178 = vand.u32 2147483647, %v890
      %v1179 = vand.u32 2147483647, %v893
      %v1180 = vand.u32 2147483647, %v898
      %v1181 = vand.u32 2147483647, %v901
      %v1182 = vand.u32 2147483647, %v906
      %v1183 = vand.u32 2147483647, %v909
      %v1184 = vand.u32 2147483647, %v914
      %v1185 = vand.u32 2147483647, %v917
      %v1186 = vand.u32 2147483647, %v922
      %v1187 = vand.u32 2147483647, %v925
      %v1188 = vand.u32 2147483647, %v930
      %v1189 = vand.u32 2147483647, %v933
      %v1190 = vand.u32 2147483647, %v938
      %v1191 = vand.u32 2147483647, %v941
      %v1192 = vand.u32 2147483647, %v946
      %v1193 = vand.u32 2147483647, %v949
      %v1194 = vand.u32 2147483647, %v954
      %v1195 = vand.u32 2147483647, %v957
      %v1196 = vand.u32 2147483647, %v962
      %v1197 = vand.u32 2147483647, %v965
      %v1198 = vand.u32 2147483647, %v970
      %v1199 = vand.u32 2147483647, %v973
      %v1200 = vand.u32 2147483647, %v978
      %v1201 = vand.u32 2147483647, %v981
      %v1202 = vand.u32 2147483647, %v986
      %v1203 = vand.u32 2147483647, %v989
      %v1204 = vand.u32 2147483647, %v994
      %v1205 = vand.u32 2147483647, %v997
      %v1206 = vand.u32 2147483647, %v1002
      %v1207 = vand.u32 2147483647, %v1005
      %v1208 = vand.u32 2147483647, %v1010
      %v1209 = vand.u32 2147483647, %v1013
      %v1210 = vand.u32 2147483647, %v1018
      %v1211 = vand.u32 2147483647, %v1021
      %v1212 = vand.u32 2147483647, %v1026
      %v1213 = vand.u32 2147483647, %v1029
      %v1214 = vand.u32 2147483647, %v1034
      %v1215 = vand.u32 2147483647, %v1037
      %v1216 = vand.u32 2147483647, %v1042
      %v1217 = vand.u32 2147483647, %v1045
      %v1218 = vand.u32 2147483647, %v1050
      %v1219 = vand.u32 2147483647, %v1053
      %v1220 = vand.u32 2147483647, %v1058
      %v1221 = vand.u32 2147483647, %v1061
      %v1222 = vand.u32 2147483647, %v1066
      %v1223 = vand.u32 2147483647, %v1069
      %v1224 = vand.u32 2147483647, %v1074
      %v1225 = vand.u32 2147483647, %v1077
      %v1226 = vand.u32 2147483647, %v1082
      %v1227 = vand.u32 2147483647, %v1085
      %v1228 = vand.u32 2147483647, %v1090
      %v1229 = vand.u32 2147483647, %v1093
      %v1230 = vand.u32 2147483647, %v1098
      %v1231 = vand.u32 2147483647, %v1101
      %v1232 = vand.u32 2147483647, %v1106
      %v1233 = vand.u32 2147483647, %v1109
      %v1234 = vand.u32 2147483647, %v1114
      %v1235 = vand.u32 2147483647, %v1117
      %v1236 = vand.u32 2147483647, %v1122
      %v1237 = vand.u32 2147483647, %v1125
      %v1238 = vand.u32 2147483647, %v1130
      %v1239 = vand.u32 2147483647, %v1133
      %v1240 = vand.u32 2147483647, %v1138
      %v1241 = vand.u32 2147483647, %v1141
      %v1242 = vadd.f32 %v1144, 1.0
      %v1243 = vadd.f32 %v1145, 1.0
      %v1244 = vadd.f32 %v1146, 1.0
      %v1245 = vadd.f32 %v1147, 1.0
      %v1246 = vadd.f32 %v1148, 1.0
      %v1247 = vadd.f32 %v1149, 1.0
      %v1248 = vadd.f32 %v1150, 1.0
      %v1249 = vadd.f32 %v1151, 1.0
      %v1250 = vadd.f32 %v1152, 1.0
      %v1251 = vadd.f32 %v1153, 1.0
      %v1252 = vadd.f32 %v1154, 1.0
      %v1253 = vadd.f32 %v1155, 1.0
      %v1254 = vadd.f32 %v1156, 1.0
      %v1255 = vadd.f32 %v1157, 1.0
      %v1256 = vadd.f32 %v1158, 1.0
      %v1257 = vadd.f32 %v1159, 1.0
      %v1258 = vadd.f32 %v1160, 1.0
      %v1259 = vadd.f32 %v1161, 1.0
      %v1260 = vadd.f32 %v1162, 1.0
      %v1261 = vadd.f32 %v1163, 1.0
      %v1262 = vadd.f32 %v1164, 1.0
      %v1263 = vadd.f32 %v1165, 1.0
      %v1264 = vadd.f32 %v1166, 1.0
      %v1265 = vadd.f32 %v1167, 1.0
      %v1266 = vadd.f32 %v1168, 1.0
      %v1267 = vadd.f32 %v1169, 1.0
      %v1268 = vadd.f32 %v1170, 1.0
      %v1269 = vadd.f32 %v1171, 1.0
      %v1270 = vadd.f32 %v1172, 1.0
      %v1271 = vadd.f32 %v1173, 1.0
      %v1272 = vadd.f32 %v1174, 1.0
      %v1273 = vadd.f32 %v1175, 1.0
      %v1274 = vadd.f32 %v1176, 1.0
      %v1275 = vadd.f32 %v1177, 1.0
      %v1276 = vadd.f32 %v1178, 1.0
      %v1277 = vadd.f32 %v1179, 1.0
      %v1278 = vadd.f32 %v1180, 1.0
      %v1279 = vadd.f32 %v1181, 1.0
      %v1280 = vadd.f32 %v1182, 1.0
      %v1281 = vadd.f32 %v1183, 1.0
      %v1282 = vadd.f32 %v1184, 1.0
      %v1283 = vadd.f32 %v1185, 1.0
      %v1284 = vadd.f32 %v1186, 1.0
      %v1285 = vadd.f32 %v1187, 1.0
      %v1286 = vadd.f32 %v1188, 1.0
      %v1287 = vadd.f32 %v1189, 1.0
      %v1288 = vadd.f32 %v1190, 1.0
      %v1289 = vadd.f32 %v1191, 1.0
      %v1290 = vadd.f32 %v1192, 1.0
      %v1291 = vadd.f32 %v1193, 1.0
      %v1292 = vadd.f32 %v1194, 1.0
      %v1293 = vadd.f32 %v1195, 1.0
      %v1294 = vadd.f32 %v1196, 1.0
      %v1295 = vadd.f32 %v1197, 1.0
      %v1296 = vadd.f32 %v1198, 1.0
      %v1297 = vadd.f32 %v1199, 1.0
      %v1298 = vadd.f32 %v1200, 1.0
      %v1299 = vadd.f32 %v1201, 1.0
      %v1300 = vadd.f32 %v1202, 1.0
      %v1301 = vadd.f32 %v1203, 1.0
      %v1302 = vadd.f32 %v1204, 1.0
      %v1303 = vadd.f32 %v1205, 1.0
      %v1304 = vadd.f32 %v1206, 1.0
      %v1305 = vadd.f32 %v1207, 1.0
      %v1306 = vadd.f32 %v1208, 1.0
      %v1307 = vadd.f32 %v1209, 1.0
      %v1308 = vadd.f32 %v1210, 1.0
      %v1309 = vadd.f32 %v1211, 1.0
      %v1310 = vadd.f32 %v1212, 1.0
      %v1311 = vadd.f32 %v1213, 1.0
      %v1312 = vadd.f32 %v1214, 1.0
      %v1313 = vadd.f32 %v1215, 1.0
      %v1314 = vadd.f32 %v1216, 1.0
      %v1315 = vadd.f32 %v1217, 1.0
      %v1316 = vadd.f32 %v1218, 1.0
      %v1317 = vadd.f32 %v1219, 1.0
      %v1318 = vadd.f32 %v1220, 1.0
      %v1319 = vadd.f32 %v1221, 1.0
      %v1320 = vadd.f32 %v1222, 1.0
      %v1321 = vadd.f32 %v1223, 1.0
      %v1322 = vadd.f32 %v1224, 1.0
      %v1323 = vadd.f32 %v1225, 1.0
      %v1324 = vadd.f32 %v1226, 1.0
      %v1325 = vadd.f32 %v1227, 1.0
      %v1326 = vadd.f32 %v1228, 1.0
      %v1327 = vadd.f32 %v1229, 1.0
      %v1328 = vadd.f32 %v1230, 1.0
      %v1329 = vadd.f32 %v1231, 1.0
      %v1330 = vadd.f32 %v1232, 1.0
      %v1331 = vadd.f32 %v1233, 1.0
      %v1332 = vadd.f32 %v1234, 1.0
      %v1333 = vadd.f32 %v1235, 1.0
      %v1334 = vadd.f32 %v1236, 1.0
      %v1335 = vadd.f32 %v1237, 1.0
      %v1336 = vadd.f32 %v1238, 1.0
      %v1337 = vadd.f32 %v1239, 1.0
      %v1338 = vadd.f32 %v1240, 1.0
      %v1339 = vadd.f32 %v1241, 1.0
      %v1340 = vrcp.pop %v1242
      %v1341 = vmul.f32 %v754, %v1340
      %v1342 = vrcp.pop %v1243
      %v1343 = vmul.f32 %v757, %v1342
      %v1344 = vrcp.pop %v1244
      %v1345 = vmul.f32 %v762, %v1344
      %v1346 = vrcp.pop %v1245
      %v1347 = vmul.f32 %v765, %v1346
      %v1348 = vrcp.pop %v1246
      %v1349 = vmul.f32 %v770, %v1348
      %v1350 = vrcp.pop %v1247
      %v1351 = vmul.f32 %v773, %v1350
      %v1352 = vrcp.pop %v1248
      %v1353 = vmul.f32 %v778, %v1352
      %v1354 = vrcp.pop %v1249
      %v1355 = vmul.f32 %v781, %v1354
      %v1356 = vrcp.pop %v1250
      %v1357 = vmul.f32 %v786, %v1356
      %v1358 = vrcp.pop %v1251
      %v1359 = vmul.f32 %v789, %v1358
      %v1360 = vrcp.pop %v1252
      %v1361 = vmul.f32 %v794, %v1360
      %v1362 = vrcp.pop %v1253
      %v1363 = vmul.f32 %v797, %v1362
      %v1364 = vrcp.pop %v1254
      %v1365 = vmul.f32 %v802, %v1364
      %v1366 = vrcp.pop %v1255
      %v1367 = vmul.f32 %v805, %v1366
      %v1368 = vrcp.pop %v1256
      %v1369 = vmul.f32 %v810, %v1368
      %v1370 = vrcp.pop %v1257
      %v1371 = vmul.f32 %v813, %v1370
      %v1372 = vrcp.pop %v1258
      %v1373 = vmul.f32 %v818, %v1372
      %v1374 = vrcp.pop %v1259
      %v1375 = vmul.f32 %v821, %v1374
      %v1376 = vrcp.pop %v1260
      %v1377 = vmul.f32 %v826, %v1376
      %v1378 = vrcp.pop %v1261
      %v1379 = vmul.f32 %v829, %v1378
      %v1380 = vrcp.pop %v1262
      %v1381 = vmul.f32 %v834, %v1380
      %v1382 = vrcp.pop %v1263
      %v1383 = vmul.f32 %v837, %v1382
      %v1384 = vrcp.pop %v1264
      %v1385 = vmul.f32 %v842, %v1384
      %v1386 = vrcp.pop %v1265
      %v1387 = vmul.f32 %v845, %v1386
      %v1388 = vrcp.pop %v1266
      %v1389 = vmul.f32 %v850, %v1388
      %v1390 = vrcp.pop %v1267
      %v1391 = vmul.f32 %v853, %v1390
      %v1392 = vrcp.pop %v1268
      %v1393 = vmul.f32 %v858, %v1392
      %v1394 = vrcp.pop %v1269
      %v1395 = vmul.f32 %v861, %v1394
      %v1396 = vrcp.pop %v1270
      %v1397 = vmul.f32 %v866, %v1396
      %v1398 = vrcp.pop %v1271
      %v1399 = vmul.f32 %v869, %v1398
      %v1400 = vrcp.pop %v1272
      %v1401 = vmul.f32 %v874, %v1400
      %v1402 = vrcp.pop %v1273
      %v1403 = vmul.f32 %v877, %v1402
      %v1404 = vrcp.pop %v1274
      %v1405 = vmul.f32 %v882, %v1404
      %v1406 = vrcp.pop %v1275
      %v1407 = vmul.f32 %v885, %v1406
      %v1408 = vrcp.pop %v1276
      %v1409 = vmul.f32 %v890, %v1408
      %v1410 = vrcp.pop %v1277
      %v1411 = vmul.f32 %v893, %v1410
      %v1412 = vrcp.pop %v1278
      %v1413 = vmul.f32 %v898, %v1412
      %v1414 = vrcp.pop %v1279
      %v1415 = vmul.f32 %v901, %v1414
      %v1416 = vrcp.pop %v1280
      %v1417 = vmul.f32 %v906, %v1416
      %v1418 = vrcp.pop %v1281
      %v1419 = vmul.f32 %v909, %v1418
      %v1420 = vrcp.pop %v1282
      %v1421 = vmul.f32 %v914, %v1420
      %v1422 = vrcp.pop %v1283
      %v1423 = vmul.f32 %v917, %v1422
      %v1424 = vrcp.pop %v1284
      %v1425 = vmul.f32 %v922, %v1424
      %v1426 = vrcp.pop %v1285
      %v1427 = vmul.f32 %v925, %v1426
      %v1428 = vrcp.pop %v1286
      %v1429 = vmul.f32 %v930, %v1428
      %v1430 = vrcp.pop %v1287
      %v1431 = vmul.f32 %v933, %v1430
      %v1432 = vrcp.pop %v1288
      %v1433 = vmul.f32 %v938, %v1432
      %v1434 = vrcp.pop %v1289
      %v1435 = vmul.f32 %v941, %v1434
      %v1436 = vrcp.pop %v1290
      %v1437 = vmul.f32 %v946, %v1436
      %v1438 = vrcp.pop %v1291
      %v1439 = vmul.f32 %v949, %v1438
      %v1440 = vrcp.pop %v1292
      %v1441 = vmul.f32 %v954, %v1440
      %v1442 = vrcp.pop %v1293
      %v1443 = vmul.f32 %v957, %v1442
      %v1444 = vrcp.pop %v1294
      %v1445 = vmul.f32 %v962, %v1444
      %v1446 = vrcp.pop %v1295
      %v1447 = vmul.f32 %v965, %v1446
      %v1448 = vrcp.pop %v1296
      %v1449 = vmul.f32 %v970, %v1448
      %v1450 = vrcp.pop %v1297
      %v1451 = vmul.f32 %v973, %v1450
      %v1452 = vrcp.pop %v1298
      %v1453 = vmul.f32 %v978, %v1452
      %v1454 = vrcp.pop %v1299
      %v1455 = vmul.f32 %v981, %v1454
      %v1456 = vrcp.pop %v1300
      %v1457 = vmul.f32 %v986, %v1456
      %v1458 = vrcp.pop %v1301
      %v1459 = vmul.f32 %v989, %v1458
      %v1460 = vrcp.pop %v1302
      %v1461 = vmul.f32 %v994, %v1460
      %v1462 = vrcp.pop %v1303
      %v1463 = vmul.f32 %v997, %v1462
      %v1464 = vrcp.pop %v1304
      %v1465 = vmul.f32 %v1002, %v1464
      %v1466 = vrcp.pop %v1305
      %v1467 = vmul.f32 %v1005, %v1466
      %v1468 = vrcp.pop %v1306
      %v1469 = vmul.f32 %v1010, %v1468
      %v1470 = vrcp.pop %v1307
      %v1471 = vmul.f32 %v1013, %v1470
      %v1472 = vrcp.pop %v1308
      %v1473 = vmul.f32 %v1018, %v1472
      %v1474 = vrcp.pop %v1309
      %v1475 = vmul.f32 %v1021, %v1474
      %v1476 = vrcp.pop %v1310
      %v1477 = vmul.f32 %v1026, %v1476
      %v1478 = vrcp.pop %v1311
      %v1479 = vmul.f32 %v1029, %v1478
      %v1480 = vrcp.pop %v1312
      %v1481 = vmul.f32 %v1034, %v1480
      %v1482 = vrcp.pop %v1313
      %v1483 = vmul.f32 %v1037, %v1482
      %v1484 = vrcp.pop %v1314
      %v1485 = vmul.f32 %v1042, %v1484
      %v1486 = vrcp.pop %v1315
      %v1487 = vmul.f32 %v1045, %v1486
      %v1488 = vrcp.pop %v1316
      %v1489 = vmul.f32 %v1050, %v1488
      %v1490 = vrcp.pop %v1317
      %v1491 = vmul.f32 %v1053, %v1490
      %v1492 = vrcp.pop %v1318
      %v1493 = vmul.f32 %v1058, %v1492
      %v1494 = vrcp.pop %v1319
      %v1495 = vmul.f32 %v1061, %v1494
      %v1496 = vrcp.pop %v1320
      %v1497 = vmul.f32 %v1066, %v1496
      %v1498 = vrcp.pop %v1321
      %v1499 = vmul.f32 %v1069, %v1498
      %v1500 = vrcp.pop %v1322
      %v1501 = vmul.f32 %v1074, %v1500
      %v1502 = vrcp.pop %v1323
      %v1503 = vmul.f32 %v1077, %v1502
      %v1504 = vrcp.pop %v1324
      %v1505 = vmul.f32 %v1082, %v1504
      %v1506 = vrcp.pop %v1325
      %v1507 = vmul.f32 %v1085, %v1506
      %v1508 = vrcp.pop %v1326
      %v1509 = vmul.f32 %v1090, %v1508
      %v1510 = vrcp.pop %v1327
      %v1511 = vmul.f32 %v1093, %v1510
      %v1512 = vrcp.pop %v1328
      %v1513 = vmul.f32 %v1098, %v1512
      %v1514 = vrcp.pop %v1329
      %v1515 = vmul.f32 %v1101, %v1514
      %v1516 = vrcp.pop %v1330
      %v1517 = vmul.f32 %v1106, %v1516
      %v1518 = vrcp.pop %v1331
      %v1519 = vmul.f32 %v1109, %v1518
      %v1520 = vrcp.pop %v1332
      %v1521 = vmul.f32 %v1114, %v1520
      %v1522 = vrcp.pop %v1333
      %v1523 = vmul.f32 %v1117, %v1522
      %v1524 = vrcp.pop %v1334
      %v1525 = vmul.f32 %v1122, %v1524
      %v1526 = vrcp.pop %v1335
      %v1527 = vmul.f32 %v1125, %v1526
      %v1528 = vrcp.pop %v1336
      %v1529 = vmul.f32 %v1130, %v1528
      %v1530 = vrcp.pop %v1337
      %v1531 = vmul.f32 %v1133, %v1530
      %v1532 = vrcp.pop %v1338
      %v1533 = vmul.f32 %v1138, %v1532
      %v1534 = vrcp.pop %v1339
      %v1535 = vmul.f32 %v1141, %v1534
      %v1536 = vpack.c.bf16 %v1343, %v1341
      %v1537 = vpack.c.bf16 %v1347, %v1345
      %v1538 = vpack.c.bf16 %v1351, %v1349
      %v1539 = vpack.c.bf16 %v1355, %v1353
      %v1540 = vpack.c.bf16 %v1359, %v1357
      %v1541 = vpack.c.bf16 %v1363, %v1361
      %v1542 = vpack.c.bf16 %v1367, %v1365
      %v1543 = vpack.c.bf16 %v1371, %v1369
      %v1544 = vpack.c.bf16 %v1375, %v1373
      %v1545 = vpack.c.bf16 %v1379, %v1377
      %v1546 = vpack.c.bf16 %v1383, %v1381
      %v1547 = vpack.c.bf16 %v1387, %v1385
      %v1548 = vpack.c.bf16 %v1391, %v1389
      %v1549 = vpack.c.bf16 %v1395, %v1393
      %v1550 = vpack.c.bf16 %v1399, %v1397
      %v1551 = vpack.c.bf16 %v1403, %v1401
      %v1552 = vpack.c.bf16 %v1407, %v1405
      %v1553 = vpack.c.bf16 %v1411, %v1409
      %v1554 = vpack.c.bf16 %v1415, %v1413
      %v1555 = vpack.c.bf16 %v1419, %v1417
      %v1556 = vpack.c.bf16 %v1423, %v1421
      %v1557 = vpack.c.bf16 %v1427, %v1425
      %v1558 = vpack.c.bf16 %v1431, %v1429
      %v1559 = vpack.c.bf16 %v1435, %v1433
      %v1560 = vpack.c.bf16 %v1439, %v1437
      %v1561 = vpack.c.bf16 %v1443, %v1441
      %v1562 = vpack.c.bf16 %v1447, %v1445
      %v1563 = vpack.c.bf16 %v1451, %v1449
      %v1564 = vpack.c.bf16 %v1455, %v1453
      %v1565 = vpack.c.bf16 %v1459, %v1457
      %v1566 = vpack.c.bf16 %v1463, %v1461
      %v1567 = vpack.c.bf16 %v1467, %v1465
      %v1568 = vpack.c.bf16 %v1471, %v1469
      %v1569 = vpack.c.bf16 %v1475, %v1473
      %v1570 = vpack.c.bf16 %v1479, %v1477
      %v1571 = vpack.c.bf16 %v1483, %v1481
      %v1572 = vpack.c.bf16 %v1487, %v1485
      %v1573 = vpack.c.bf16 %v1491, %v1489
      %v1574 = vpack.c.bf16 %v1495, %v1493
      %v1575 = vpack.c.bf16 %v1499, %v1497
      %v1576 = vpack.c.bf16 %v1503, %v1501
      %v1577 = vpack.c.bf16 %v1507, %v1505
      %v1578 = vpack.c.bf16 %v1511, %v1509
      %v1579 = vpack.c.bf16 %v1515, %v1513
      %v1580 = vpack.c.bf16 %v1519, %v1517
      %v1581 = vpack.c.bf16 %v1523, %v1521
      %v1582 = vpack.c.bf16 %v1527, %v1525
      %v1583 = vpack.c.bf16 %v1531, %v1529
      %v1584 = vpack.c.bf16 %v1535, %v1533
      %v1634 = vunpack.c.l.b16 %v1536
      %v1635 = vunpack.c.h.b16 %v1536
      %v1636 = vunpack.c.l.b16 %v1537
      %v1637 = vunpack.c.h.b16 %v1537
      %v1638 = vunpack.c.l.b16 %v1538
      %v1639 = vunpack.c.h.b16 %v1538
      %v1640 = vunpack.c.l.b16 %v1539
      %v1641 = vunpack.c.h.b16 %v1539
      %v1642 = vunpack.c.l.b16 %v1540
      %v1643 = vunpack.c.h.b16 %v1540
      %v1644 = vunpack.c.l.b16 %v1541
      %v1645 = vunpack.c.h.b16 %v1541
      %v1646 = vunpack.c.l.b16 %v1542
      %v1647 = vunpack.c.h.b16 %v1542
      %v1648 = vunpack.c.l.b16 %v1543
      %v1649 = vunpack.c.h.b16 %v1543
      %v1650 = vunpack.c.l.b16 %v1544
      %v1651 = vunpack.c.h.b16 %v1544
      %v1652 = vunpack.c.l.b16 %v1545
      %v1653 = vunpack.c.h.b16 %v1545
      %v1654 = vunpack.c.l.b16 %v1546
      %v1655 = vunpack.c.h.b16 %v1546
      %v1656 = vunpack.c.l.b16 %v1547
      %v1657 = vunpack.c.h.b16 %v1547
      %v1658 = vunpack.c.l.b16 %v1548
      %v1659 = vunpack.c.h.b16 %v1548
      %v1660 = vunpack.c.l.b16 %v1549
      %v1661 = vunpack.c.h.b16 %v1549
      %v1662 = vunpack.c.l.b16 %v1550
      %v1663 = vunpack.c.h.b16 %v1550
      %v1664 = vunpack.c.l.b16 %v1551
      %v1665 = vunpack.c.h.b16 %v1551
      %v1666 = vunpack.c.l.b16 %v1552
      %v1667 = vunpack.c.h.b16 %v1552
      %v1668 = vunpack.c.l.b16 %v1553
      %v1669 = vunpack.c.h.b16 %v1553
      %v1670 = vunpack.c.l.b16 %v1554
      %v1671 = vunpack.c.h.b16 %v1554
      %v1672 = vunpack.c.l.b16 %v1555
      %v1673 = vunpack.c.h.b16 %v1555
      %v1674 = vunpack.c.l.b16 %v1556
      %v1675 = vunpack.c.h.b16 %v1556
      %v1676 = vunpack.c.l.b16 %v1557
      %v1677 = vunpack.c.h.b16 %v1557
      %v1678 = vunpack.c.l.b16 %v1558
      %v1679 = vunpack.c.h.b16 %v1558
      %v1680 = vunpack.c.l.b16 %v1559
      %v1681 = vunpack.c.h.b16 %v1559
      %v1682 = vunpack.c.l.b16 %v1560
      %v1683 = vunpack.c.h.b16 %v1560
      %v1684 = vunpack.c.l.b16 %v1561
      %v1685 = vunpack.c.h.b16 %v1561
      %v1686 = vunpack.c.l.b16 %v1562
      %v1687 = vunpack.c.h.b16 %v1562
      %v1688 = vunpack.c.l.b16 %v1563
      %v1689 = vunpack.c.h.b16 %v1563
      %v1690 = vunpack.c.l.b16 %v1564
      %v1691 = vunpack.c.h.b16 %v1564
      %v1692 = vunpack.c.l.b16 %v1565
      %v1693 = vunpack.c.h.b16 %v1565
      %v1694 = vunpack.c.l.b16 %v1566
      %v1695 = vunpack.c.h.b16 %v1566
      %v1696 = vunpack.c.l.b16 %v1567
      %v1697 = vunpack.c.h.b16 %v1567
      %v1698 = vunpack.c.l.b16 %v1568
      %v1699 = vunpack.c.h.b16 %v1568
      %v1700 = vunpack.c.l.b16 %v1569
      %v1701 = vunpack.c.h.b16 %v1569
      %v1702 = vunpack.c.l.b16 %v1570
      %v1703 = vunpack.c.h.b16 %v1570
      %v1704 = vunpack.c.l.b16 %v1571
      %v1705 = vunpack.c.h.b16 %v1571
      %v1706 = vunpack.c.l.b16 %v1572
      %v1707 = vunpack.c.h.b16 %v1572
      %v1708 = vunpack.c.l.b16 %v1573
      %v1709 = vunpack.c.h.b16 %v1573
      %v1710 = vunpack.c.l.b16 %v1574
      %v1711 = vunpack.c.h.b16 %v1574
      %v1712 = vunpack.c.l.b16 %v1575
      %v1713 = vunpack.c.h.b16 %v1575
      %v1714 = vunpack.c.l.b16 %v1576
      %v1715 = vunpack.c.h.b16 %v1576
      %v1716 = vunpack.c.l.b16 %v1577
      %v1717 = vunpack.c.h.b16 %v1577
      %v1718 = vunpack.c.l.b16 %v1578
      %v1719 = vunpack.c.h.b16 %v1578
      %v1720 = vunpack.c.l.b16 %v1579
      %v1721 = vunpack.c.h.b16 %v1579
      %v1722 = vunpack.c.l.b16 %v1580
      %v1723 = vunpack.c.h.b16 %v1580
      %v1724 = vunpack.c.l.b16 %v1581
      %v1725 = vunpack.c.h.b16 %v1581
      %v1726 = vunpack.c.l.b16 %v1582
      %v1727 = vunpack.c.h.b16 %v1582
      %v1728 = vunpack.c.l.b16 %v1583
      %v1729 = vunpack.c.h.b16 %v1583
      %v1730 = vunpack.c.l.b16 %v1584
      %v1731 = vunpack.c.h.b16 %v1584
      %v1732 = vpack.c.b16 %v1634, %v1634
      %v1733 = vpack.c.b16 %v1635, %v1635
      %v1734 = vpack.c.b16 %v1636, %v1636
      %v1735 = vpack.c.b16 %v1637, %v1637
      %v1736 = vpack.c.b16 %v1638, %v1638
      %v1737 = vpack.c.b16 %v1639, %v1639
      %v1738 = vpack.c.b16 %v1640, %v1640
      %v1739 = vpack.c.b16 %v1641, %v1641
      %v1740 = vpack.c.b16 %v1642, %v1642
      %v1741 = vpack.c.b16 %v1643, %v1643
      %v1742 = vpack.c.b16 %v1644, %v1644
      %v1743 = vpack.c.b16 %v1645, %v1645
      %v1744 = vpack.c.b16 %v1646, %v1646
      %v1745 = vpack.c.b16 %v1647, %v1647
      %v1746 = vpack.c.b16 %v1648, %v1648
      %v1747 = vpack.c.b16 %v1649, %v1649
      %v1748 = vpack.c.b16 %v1650, %v1650
      %v1749 = vpack.c.b16 %v1651, %v1651
      %v1750 = vpack.c.b16 %v1652, %v1652
      %v1751 = vpack.c.b16 %v1653, %v1653
      %v1752 = vpack.c.b16 %v1654, %v1654
      %v1753 = vpack.c.b16 %v1655, %v1655
      %v1754 = vpack.c.b16 %v1656, %v1656
      %v1755 = vpack.c.b16 %v1657, %v1657
      %v1756 = vpack.c.b16 %v1658, %v1658
      %v1757 = vpack.c.b16 %v1659, %v1659
      %v1758 = vpack.c.b16 %v1660, %v1660
      %v1759 = vpack.c.b16 %v1661, %v1661
      %v1760 = vpack.c.b16 %v1662, %v1662
      %v1761 = vpack.c.b16 %v1663, %v1663
      %v1762 = vpack.c.b16 %v1664, %v1664
      %v1763 = vpack.c.b16 %v1665, %v1665
      %v1764 = vpack.c.b16 %v1666, %v1666
      %v1765 = vpack.c.b16 %v1667, %v1667
      %v1766 = vpack.c.b16 %v1668, %v1668
      %v1767 = vpack.c.b16 %v1669, %v1669
      %v1768 = vpack.c.b16 %v1670, %v1670
      %v1769 = vpack.c.b16 %v1671, %v1671
      %v1770 = vpack.c.b16 %v1672, %v1672
      %v1771 = vpack.c.b16 %v1673, %v1673
      %v1772 = vpack.c.b16 %v1674, %v1674
      %v1773 = vpack.c.b16 %v1675, %v1675
      %v1774 = vpack.c.b16 %v1676, %v1676
      %v1775 = vpack.c.b16 %v1677, %v1677
      %v1776 = vpack.c.b16 %v1678, %v1678
      %v1777 = vpack.c.b16 %v1679, %v1679
      %v1778 = vpack.c.b16 %v1680, %v1680
      %v1779 = vpack.c.b16 %v1681, %v1681
      %v1780 = vpack.c.b16 %v1682, %v1682
      %v1781 = vpack.c.b16 %v1683, %v1683
      %v1782 = vpack.c.b16 %v1684, %v1684
      %v1783 = vpack.c.b16 %v1685, %v1685
      %v1784 = vpack.c.b16 %v1686, %v1686
      %v1785 = vpack.c.b16 %v1687, %v1687
      %v1786 = vpack.c.b16 %v1688, %v1688
      %v1787 = vpack.c.b16 %v1689, %v1689
      %v1788 = vpack.c.b16 %v1690, %v1690
      %v1789 = vpack.c.b16 %v1691, %v1691
      %v1790 = vpack.c.b16 %v1692, %v1692
      %v1791 = vpack.c.b16 %v1693, %v1693
      %v1792 = vpack.c.b16 %v1694, %v1694
      %v1793 = vpack.c.b16 %v1695, %v1695
      %v1794 = vpack.c.b16 %v1696, %v1696
      %v1795 = vpack.c.b16 %v1697, %v1697
      %v1796 = vpack.c.b16 %v1698, %v1698
      %v1797 = vpack.c.b16 %v1699, %v1699
      %v1798 = vpack.c.b16 %v1700, %v1700
      %v1799 = vpack.c.b16 %v1701, %v1701
      %v1800 = vpack.c.b16 %v1702, %v1702
      %v1801 = vpack.c.b16 %v1703, %v1703
      %v1802 = vpack.c.b16 %v1704, %v1704
      %v1803 = vpack.c.b16 %v1705, %v1705
      %v1804 = vpack.c.b16 %v1706, %v1706
      %v1805 = vpack.c.b16 %v1707, %v1707
      %v1806 = vpack.c.b16 %v1708, %v1708
      %v1807 = vpack.c.b16 %v1709, %v1709
      %v1808 = vpack.c.b16 %v1710, %v1710
      %v1809 = vpack.c.b16 %v1711, %v1711
      %v1810 = vpack.c.b16 %v1712, %v1712
      %v1811 = vpack.c.b16 %v1713, %v1713
      %v1812 = vpack.c.b16 %v1714, %v1714
      %v1813 = vpack.c.b16 %v1715, %v1715
      %v1814 = vpack.c.b16 %v1716, %v1716
      %v1815 = vpack.c.b16 %v1717, %v1717
      %v1816 = vpack.c.b16 %v1718, %v1718
      %v1817 = vpack.c.b16 %v1719, %v1719
      %v1818 = vpack.c.b16 %v1720, %v1720
      %v1819 = vpack.c.b16 %v1721, %v1721
      %v1820 = vpack.c.b16 %v1722, %v1722
      %v1821 = vpack.c.b16 %v1723, %v1723
      %v1822 = vpack.c.b16 %v1724, %v1724
      %v1823 = vpack.c.b16 %v1725, %v1725
      %v1824 = vpack.c.b16 %v1726, %v1726
      %v1825 = vpack.c.b16 %v1727, %v1727
      %v1826 = vpack.c.b16 %v1728, %v1728
      %v1827 = vpack.c.b16 %v1729, %v1729
      %v1828 = vpack.c.b16 %v1730, %v1730
      %v1829 = vpack.c.b16 %v1731, %v1731
      %vm1928 = vcmask 158720
      %1929 = vst.msk [vmem:[%s172] sm:$0xf] %vm1928, %v1732
      %1930 = vst.msk [vmem:[%s172 + $0x4] sm:$0xf] %vm1928, %v1733
      %1931 = vst.msk [vmem:[%s172 + $0x8] sm:$0xf] %vm1928, %v1734
      %1932 = vst.msk [vmem:[%s172 + $0xc] sm:$0xf] %vm1928, %v1735
      %1933 = vst.msk [vmem:[%s172 + $0x10] sm:$0xf] %vm1928, %v1736
      %1934 = vst.msk [vmem:[%s172 + $0x14] sm:$0xf] %vm1928, %v1737
      %1935 = vst.msk [vmem:[%s172 + $0x18] sm:$0xf] %vm1928, %v1738
      %1936 = vst.msk [vmem:[%s172 + $0x1c] sm:$0xf] %vm1928, %v1739
      %1937 = vst.msk [vmem:[%s172 + $0x20] sm:$0xf] %vm1928, %v1740
      %1938 = vst.msk [vmem:[%s172 + $0x24] sm:$0xf] %vm1928, %v1741
      %1939 = vst.msk [vmem:[%s172 + $0x28] sm:$0xf] %vm1928, %v1742
      %1940 = vst.msk [vmem:[%s172 + $0x2c] sm:$0xf] %vm1928, %v1743
      %1941 = vst.msk [vmem:[%s172 + $0x30] sm:$0xf] %vm1928, %v1744
      %1942 = vst.msk [vmem:[%s172 + $0x34] sm:$0xf] %vm1928, %v1745
      %1943 = vst.msk [vmem:[%s172 + $0x38] sm:$0xf] %vm1928, %v1746
      %1944 = vst.msk [vmem:[%s172 + $0x3c] sm:$0xf] %vm1928, %v1747
      %1945 = vst.msk [vmem:[%s172 + $0x40] sm:$0xf] %vm1928, %v1748
      %1946 = vst.msk [vmem:[%s172 + $0x44] sm:$0xf] %vm1928, %v1749
      %1947 = vst.msk [vmem:[%s172 + $0x48] sm:$0xf] %vm1928, %v1750
      %1948 = vst.msk [vmem:[%s172 + $0x4c] sm:$0xf] %vm1928, %v1751
      %1949 = vst.msk [vmem:[%s172 + $0x50] sm:$0xf] %vm1928, %v1752
      %1950 = vst.msk [vmem:[%s172 + $0x54] sm:$0xf] %vm1928, %v1753
      %1951 = vst.msk [vmem:[%s172 + $0x58] sm:$0xf] %vm1928, %v1754
      %1952 = vst.msk [vmem:[%s172 + $0x5c] sm:$0xf] %vm1928, %v1755
      %1953 = vst.msk [vmem:[%s172 + $0x60] sm:$0xf] %vm1928, %v1756
      %1954 = vst.msk [vmem:[%s172 + $0x64] sm:$0xf] %vm1928, %v1757
      %1955 = vst.msk [vmem:[%s172 + $0x68] sm:$0xf] %vm1928, %v1758
      %1956 = vst.msk [vmem:[%s172 + $0x6c] sm:$0xf] %vm1928, %v1759
      %1957 = vst.msk [vmem:[%s172 + $0x70] sm:$0xf] %vm1928, %v1760
      %1958 = vst.msk [vmem:[%s172 + $0x74] sm:$0xf] %vm1928, %v1761
      %1959 = vst.msk [vmem:[%s172 + $0x78] sm:$0xf] %vm1928, %v1762
      %1960 = vst.msk [vmem:[%s172 + $0x7c] sm:$0xf] %vm1928, %v1763
      %1961 = vst.msk [vmem:[%s172 + $0x80] sm:$0xf] %vm1928, %v1764
      %1962 = vst.msk [vmem:[%s172 + $0x84] sm:$0xf] %vm1928, %v1765
      %1963 = vst.msk [vmem:[%s172 + $0x88] sm:$0xf] %vm1928, %v1766
      %1964 = vst.msk [vmem:[%s172 + $0x8c] sm:$0xf] %vm1928, %v1767
      %1965 = vst.msk [vmem:[%s172 + $0x90] sm:$0xf] %vm1928, %v1768
      %1966 = vst.msk [vmem:[%s172 + $0x94] sm:$0xf] %vm1928, %v1769
      %1967 = vst.msk [vmem:[%s172 + $0x98] sm:$0xf] %vm1928, %v1770
      %1968 = vst.msk [vmem:[%s172 + $0x9c] sm:$0xf] %vm1928, %v1771
      %1969 = vst.msk [vmem:[%s172 + $0xa0] sm:$0xf] %vm1928, %v1772
      %1970 = vst.msk [vmem:[%s172 + $0xa4] sm:$0xf] %vm1928, %v1773
      %1971 = vst.msk [vmem:[%s172 + $0xa8] sm:$0xf] %vm1928, %v1774
      %1972 = vst.msk [vmem:[%s172 + $0xac] sm:$0xf] %vm1928, %v1775
      %1973 = vst.msk [vmem:[%s172 + $0xb0] sm:$0xf] %vm1928, %v1776
      %1974 = vst.msk [vmem:[%s172 + $0xb4] sm:$0xf] %vm1928, %v1777
      %1975 = vst.msk [vmem:[%s172 + $0xb8] sm:$0xf] %vm1928, %v1778
      %1976 = vst.msk [vmem:[%s172 + $0xbc] sm:$0xf] %vm1928, %v1779
      %1977 = vst.msk [vmem:[%s172 + $0xc0] sm:$0xf] %vm1928, %v1780
      %1978 = vst.msk [vmem:[%s172 + $0xc4] sm:$0xf] %vm1928, %v1781
      %1979 = vst.msk [vmem:[%s172 + $0xc8] sm:$0xf] %vm1928, %v1782
      %1980 = vst.msk [vmem:[%s172 + $0xcc] sm:$0xf] %vm1928, %v1783
      %1981 = vst.msk [vmem:[%s172 + $0xd0] sm:$0xf] %vm1928, %v1784
      %1982 = vst.msk [vmem:[%s172 + $0xd4] sm:$0xf] %vm1928, %v1785
      %1983 = vst.msk [vmem:[%s172 + $0xd8] sm:$0xf] %vm1928, %v1786
      %1984 = vst.msk [vmem:[%s172 + $0xdc] sm:$0xf] %vm1928, %v1787
      %1985 = vst.msk [vmem:[%s172 + $0xe0] sm:$0xf] %vm1928, %v1788
      %1986 = vst.msk [vmem:[%s172 + $0xe4] sm:$0xf] %vm1928, %v1789
      %1987 = vst.msk [vmem:[%s172 + $0xe8] sm:$0xf] %vm1928, %v1790
      %1988 = vst.msk [vmem:[%s172 + $0xec] sm:$0xf] %vm1928, %v1791
      %1989 = vst.msk [vmem:[%s172 + $0xf0] sm:$0xf] %vm1928, %v1792
      %1990 = vst.msk [vmem:[%s172 + $0xf4] sm:$0xf] %vm1928, %v1793
      %1991 = vst.msk [vmem:[%s172 + $0xf8] sm:$0xf] %vm1928, %v1794
      %1992 = vst.msk [vmem:[%s172 + $0xfc] sm:$0xf] %vm1928, %v1795
      %1993 = vst.msk [vmem:[%s172 + $0x100] sm:$0xf] %vm1928, %v1796
      %1994 = vst.msk [vmem:[%s172 + $0x104] sm:$0xf] %vm1928, %v1797
      %1995 = vst.msk [vmem:[%s172 + $0x108] sm:$0xf] %vm1928, %v1798
      %1996 = vst.msk [vmem:[%s172 + $0x10c] sm:$0xf] %vm1928, %v1799
      %1997 = vst.msk [vmem:[%s172 + $0x110] sm:$0xf] %vm1928, %v1800
      %1998 = vst.msk [vmem:[%s172 + $0x114] sm:$0xf] %vm1928, %v1801
      %1999 = vst.msk [vmem:[%s172 + $0x118] sm:$0xf] %vm1928, %v1802
      %2000 = vst.msk [vmem:[%s172 + $0x11c] sm:$0xf] %vm1928, %v1803
      %2001 = vst.msk [vmem:[%s172 + $0x120] sm:$0xf] %vm1928, %v1804
      %2002 = vst.msk [vmem:[%s172 + $0x124] sm:$0xf] %vm1928, %v1805
      %2003 = vst.msk [vmem:[%s172 + $0x128] sm:$0xf] %vm1928, %v1806
      %2004 = vst.msk [vmem:[%s172 + $0x12c] sm:$0xf] %vm1928, %v1807
      %2005 = vst.msk [vmem:[%s172 + $0x130] sm:$0xf] %vm1928, %v1808
      %2006 = vst.msk [vmem:[%s172 + $0x134] sm:$0xf] %vm1928, %v1809
      %2007 = vst.msk [vmem:[%s172 + $0x138] sm:$0xf] %vm1928, %v1810
      %2008 = vst.msk [vmem:[%s172 + $0x13c] sm:$0xf] %vm1928, %v1811
      %2009 = vst.msk [vmem:[%s172 + $0x140] sm:$0xf] %vm1928, %v1812
      %2010 = vst.msk [vmem:[%s172 + $0x144] sm:$0xf] %vm1928, %v1813
      %2011 = vst.msk [vmem:[%s172 + $0x148] sm:$0xf] %vm1928, %v1814
      %2012 = vst.msk [vmem:[%s172 + $0x14c] sm:$0xf] %vm1928, %v1815
      %2013 = vst.msk [vmem:[%s172 + $0x150] sm:$0xf] %vm1928, %v1816
      %2014 = vst.msk [vmem:[%s172 + $0x154] sm:$0xf] %vm1928, %v1817
      %2015 = vst.msk [vmem:[%s172 + $0x158] sm:$0xf] %vm1928, %v1818
      %2016 = vst.msk [vmem:[%s172 + $0x15c] sm:$0xf] %vm1928, %v1819
      %2017 = vst.msk [vmem:[%s172 + $0x160] sm:$0xf] %vm1928, %v1820
      %2018 = vst.msk [vmem:[%s172 + $0x164] sm:$0xf] %vm1928, %v1821
      %2019 = vst.msk [vmem:[%s172 + $0x168] sm:$0xf] %vm1928, %v1822
      %2020 = vst.msk [vmem:[%s172 + $0x16c] sm:$0xf] %vm1928, %v1823
      %2021 = vst.msk [vmem:[%s172 + $0x170] sm:$0xf] %vm1928, %v1824
      %2022 = vst.msk [vmem:[%s172 + $0x174] sm:$0xf] %vm1928, %v1825
      %2023 = vst.msk [vmem:[%s172 + $0x178] sm:$0xf] %vm1928, %v1826
      %2024 = vst.msk [vmem:[%s172 + $0x17c] sm:$0xf] %vm1928, %v1827
      %2025 = vst.msk [vmem:[%s172 + $0x180] sm:$0xf] %vm1928, %v1828
      %2026 = vst.msk [vmem:[%s172 + $0x184] sm:$0xf] %vm1928, %v1829
      %s2027 = smul.u32 98, %s14
      %p2028 = scmp.lt.s32.totalorder %s2027, 195
      %s2029 = scalar_select %p2028, %s2027, 195
      %s2030 = smul.addr %s2029, 4
      %s2031 = scalar_lea.vmem %s3, %s2030
      // Predicated region
      $region33: #{net_forward.5} parent=31 // pred_check
        %p2032 = pneg %p100
      $region34: #{net_forward.5} parent=31 // pred_check_branch
        %2034 = sbr.rel (%p2032) target = $region36
      $region35: #{net_forward.5} parent=31 // pred_region
        %s2035 = smul.u32 98, %s14
      $region36: #{net_forward.5} parent=31 // pred_fallthru
        _
    $region32: #{net_forward.5} parent=5 // pred_fallthru
      _
    %p2036 = scmp.le.s32.totalorder 2, %s9
    // Predicated region
    $region37: #{net_forward.5} parent=5 // pred_check
      %p2037 = pneg %p2036
    $region38: #{net_forward.5} parent=5 // pred_check_branch
      %2039 = sbr.rel (%p2037) target = $region40
    $region39: #{net_forward.5} parent=5 // pred_region
      %s2040 = ssub.s32 %s9, 2
      // Predicated region
      $region41: #{net_forward.5} parent=39 // pred_check
        %p2041 = pneg %p106
      $region42: #{net_forward.5} parent=39 // pred_check_branch
        %2043 = sbr.rel (%p2041) target = $region44
      $region43: #{net_forward.5} parent=39 // pred_region
        %s2044 = smul.u32 98, %s15
        %p2045 = scmp.lt.s32.totalorder %s2044, 195
        %s2046 = scalar_select %p2045, %s2044, 195
        %s2047 = smul.addr %s2046, 4
        %s2048 = scalar_lea.vmem %s3, %s2047
      $region44: #{net_forward.5} parent=39 // pred_fallthru
        _
    $region40: #{net_forward.5} parent=5 // pred_fallthru
      _
  $region6: #{net_forward.5} parent=0 // loop_footer
    %s13 = sadd.s32 1, %s9
  $region7: #{net_forward.5} parent=0 // loop_footer_branch
    %8 = sbr.rel target = $region3
  $region8: #{net_forward.5} parent=0 // loop_exit
    _

// kernel: net_forward.6
$region0: #{net_forward.6}
  #allocation0 [shape = 'u32[]', space=smem, size = 0x4, offset = 0x4, fixed_abs, tag = 'smem constant byte address 0x4 - core index']
  #allocation1 [shape = 'u32[144,128]{1,0:T(1,128)}', space=vmem, size = 0x12000, scoped, tag = 'internal scratch']
  %s0 = inlined_call_operand.vmem [shape: bf16[28,2,14,40], index: 0, kind: input, shape index: {}]
  %s1 = inlined_call_operand.vmem [shape: bf16[28,14,20], index: 1, kind: output, shape index: {}]
  %s2 = sld [smem:[#allocation0]]
  $region14: #{net_forward.6} parent=0
    _
  %s4 = ssub.s32 1, %s2
  %s5 = scalar_select 0, %s4, %s2
  // Predicated region
  $region2: #{net_forward.6} parent=0 // pred_check
    _
  $region3: #{net_forward.6} parent=0 // pred_check_branch
    %7 = sbr.rel (0) target = $region5
  $region4: #{net_forward.6} parent=0 // pred_region
    _
  $region5: #{net_forward.6} parent=0 // pred_fallthru
    _
  %v8 = vld [vmem:[%s0] sm:$0xf]
  %v9 = vld [vmem:[%s0 + $0x4] sm:$0x7]
  %v10 = vld [vmem:[%s0 + $0x8] sm:$0xf]
  %v11 = vld [vmem:[%s0 + $0xc] sm:$0x7]
  %v12 = vld [vmem:[%s0 + $0x10] sm:$0xf]
  %v13 = vld [vmem:[%s0 + $0x14] sm:$0x7]
  %v14 = vld [vmem:[%s0 + $0x18] sm:$0xf]
  %v15 = vld [vmem:[%s0 + $0x1c] sm:$0x7]
  %v16 = vld [vmem:[%s0 + $0x20] sm:$0xf]
  %v17 = vld [vmem:[%s0 + $0x24] sm:$0x7]
  %v18 = vld [vmem:[%s0 + $0x28] sm:$0xf]
  %v19 = vld [vmem:[%s0 + $0x2c] sm:$0x7]
  %v20 = vld [vmem:[%s0 + $0x30] sm:$0xf]
  %v21 = vld [vmem:[%s0 + $0x34] sm:$0x7]
  %v22 = vld [vmem:[%s0 + $0x38] sm:$0xf]
  %v23 = vld [vmem:[%s0 + $0x3c] sm:$0x7]
  %v24 = vld [vmem:[%s0 + $0x40] sm:$0xf]
  %v25 = vld [vmem:[%s0 + $0x44] sm:$0x7]
  %v26 = vld [vmem:[%s0 + $0x48] sm:$0xf]
  %v27 = vld [vmem:[%s0 + $0x4c] sm:$0x7]
  %v28 = vld [vmem:[%s0 + $0x50] sm:$0xf]
  %v29 = vld [vmem:[%s0 + $0x54] sm:$0x7]
  %v30 = vld [vmem:[%s0 + $0x58] sm:$0xf]
  %v31 = vld [vmem:[%s0 + $0x5c] sm:$0x7]
  %v32 = vld [vmem:[%s0 + $0x60] sm:$0xf]
  %v33 = vld [vmem:[%s0 + $0x64] sm:$0x7]
  %v34 = vld [vmem:[%s0 + $0x68] sm:$0xf]
  %v35 = vld [vmem:[%s0 + $0x6c] sm:$0x7]
  %v36 = vld [vmem:[%s0 + $0x70] sm:$0xf]
  %v37 = vld [vmem:[%s0 + $0x74] sm:$0x7]
  %v38 = vld [vmem:[%s0 + $0x78] sm:$0xf]
  %v39 = vld [vmem:[%s0 + $0x7c] sm:$0x7]
  %v40 = vld [vmem:[%s0 + $0x80] sm:$0xf]
  %v41 = vld [vmem:[%s0 + $0x84] sm:$0x7]
  %v42 = vld [vmem:[%s0 + $0x88] sm:$0xf]
  %v43 = vld [vmem:[%s0 + $0x8c] sm:$0x7]
  %v44 = vld [vmem:[%s0 + $0x90] sm:$0xf]
  %v45 = vld [vmem:[%s0 + $0x94] sm:$0x7]
  %v46 = vld [vmem:[%s0 + $0x98] sm:$0xf]
  %v47 = vld [vmem:[%s0 + $0x9c] sm:$0x7]
  %v48 = vld [vmem:[%s0 + $0xa0] sm:$0xf]
  %v49 = vld [vmem:[%s0 + $0xa4] sm:$0x7]
  %v50 = vld [vmem:[%s0 + $0xa8] sm:$0xf]
  %v51 = vld [vmem:[%s0 + $0xac] sm:$0x7]
  %v52 = vld [vmem:[%s0 + $0xb0] sm:$0xf]
  %v53 = vld [vmem:[%s0 + $0xb4] sm:$0x7]
  %v54 = vld [vmem:[%s0 + $0xb8] sm:$0xf]
  %v55 = vld [vmem:[%s0 + $0xbc] sm:$0x7]
  %v56 = vld [vmem:[%s0 + $0xc0] sm:$0xf]
  %v57 = vld [vmem:[%s0 + $0xc4] sm:$0x7]
  %v58 = vld [vmem:[%s0 + $0xc8] sm:$0xf]
  %v59 = vld [vmem:[%s0 + $0xcc] sm:$0x7]
  %v60 = vld [vmem:[%s0 + $0xd0] sm:$0xf]
  %v61 = vld [vmem:[%s0 + $0xd4] sm:$0x7]
  %v62 = vld [vmem:[%s0 + $0xd8] sm:$0xf]
  %v63 = vld [vmem:[%s0 + $0xdc] sm:$0x7]
  %v64 = vld [vmem:[%s0 + $0xe0] sm:$0xf]
  %v65 = vld [vmem:[%s0 + $0xe4] sm:$0x7]
  %v66 = vld [vmem:[%s0 + $0xe8] sm:$0xf]
  %v67 = vld [vmem:[%s0 + $0xec] sm:$0x7]
  %v68 = vld [vmem:[%s0 + $0xf0] sm:$0xf]
  %v69 = vld [vmem:[%s0 + $0xf4] sm:$0x7]
  %v70 = vld [vmem:[%s0 + $0xf8] sm:$0xf]
  %v71 = vld [vmem:[%s0 + $0xfc] sm:$0x7]
  %v72 = vld [vmem:[%s0 + $0x100] sm:$0xf]
  %v73 = vld [vmem:[%s0 + $0x104] sm:$0x7]
  %v74 = vld [vmem:[%s0 + $0x108] sm:$0xf]
  %v75 = vld [vmem:[%s0 + $0x10c] sm:$0x7]
  %v76 = vld [vmem:[%s0 + $0x110] sm:$0xf]
  %v77 = vld [vmem:[%s0 + $0x114] sm:$0x7]
  %v78 = vld [vmem:[%s0 + $0x118] sm:$0xf]
  %v79 = vld [vmem:[%s0 + $0x11c] sm:$0x7]
  %v80 = vld [vmem:[%s0 + $0x120] sm:$0xf]
  %v81 = vld [vmem:[%s0 + $0x124] sm:$0x7]
  %v82 = vld [vmem:[%s0 + $0x128] sm:$0xf]
  %v83 = vld [vmem:[%s0 + $0x12c] sm:$0x7]
  %v84 = vld [vmem:[%s0 + $0x130] sm:$0xf]
  %v85 = vld [vmem:[%s0 + $0x134] sm:$0x7]
  %v86 = vld [vmem:[%s0 + $0x138] sm:$0xf]
  %v87 = vld [vmem:[%s0 + $0x13c] sm:$0x7]
  %v88 = vld [vmem:[%s0 + $0x140] sm:$0xf]
  %v89 = vld [vmem:[%s0 + $0x144] sm:$0x7]
  %v90 = vld [vmem:[%s0 + $0x148] sm:$0xf]
  %v91 = vld [vmem:[%s0 + $0x14c] sm:$0x7]
  %v92 = vld [vmem:[%s0 + $0x150] sm:$0xf]
  %v93 = vld [vmem:[%s0 + $0x154] sm:$0x7]
  %v94 = vld [vmem:[%s0 + $0x158] sm:$0xf]
  %v95 = vld [vmem:[%s0 + $0x15c] sm:$0x7]
  %v96 = vld [vmem:[%s0 + $0x160] sm:$0xf]
  %v97 = vld [vmem:[%s0 + $0x164] sm:$0x7]
  %v98 = vld [vmem:[%s0 + $0x168] sm:$0xf]
  %v99 = vld [vmem:[%s0 + $0x16c] sm:$0x7]
  %v100 = vld [vmem:[%s0 + $0x170] sm:$0xf]
  %v101 = vld [vmem:[%s0 + $0x174] sm:$0x7]
  %v102 = vld [vmem:[%s0 + $0x178] sm:$0xf]
  %v103 = vld [vmem:[%s0 + $0x17c] sm:$0x7]
  %v104 = vld [vmem:[%s0 + $0x180] sm:$0xf]
  %v105 = vld [vmem:[%s0 + $0x184] sm:$0x7]
  %v106 = vld [vmem:[%s0 + $0x188] sm:$0xf]
  %v107 = vld [vmem:[%s0 + $0x18c] sm:$0x7]
  %v108 = vld [vmem:[%s0 + $0x190] sm:$0xf]
  %v109 = vld [vmem:[%s0 + $0x194] sm:$0x7]
  %v110 = vld [vmem:[%s0 + $0x198] sm:$0xf]
  %v111 = vld [vmem:[%s0 + $0x19c] sm:$0x7]
  %v112 = vld [vmem:[%s0 + $0x1a0] sm:$0xf]
  %v113 = vld [vmem:[%s0 + $0x1a4] sm:$0x7]
  %v114 = vld [vmem:[%s0 + $0x1a8] sm:$0xf]
  %v115 = vld [vmem:[%s0 + $0x1ac] sm:$0x7]
  %v116 = vld [vmem:[%s0 + $0x1b0] sm:$0xf]
  %v117 = vld [vmem:[%s0 + $0x1b4] sm:$0x7]
  %v118 = vld [vmem:[%s0 + $0x1b8] sm:$0xf]
  %v119 = vld [vmem:[%s0 + $0x1bc] sm:$0x7]
  %v120 = vmax.bf16 %v8, %v10
  %v121 = vmax.bf16 %v9, %v11
  %v122 = vmax.bf16 %v12, %v14
  %v123 = vmax.bf16 %v13, %v15
  %v124 = vmax.bf16 %v16, %v18
  %v125 = vmax.bf16 %v17, %v19
  %v126 = vmax.bf16 %v20, %v22
  %v127 = vmax.bf16 %v21, %v23
  %v128 = vmax.bf16 %v24, %v26
  %v129 = vmax.bf16 %v25, %v27
  %v130 = vmax.bf16 %v28, %v30
  %v131 = vmax.bf16 %v29, %v31
  %v132 = vmax.bf16 %v32, %v34
  %v133 = vmax.bf16 %v33, %v35
  %v134 = vmax.bf16 %v36, %v38
  %v135 = vmax.bf16 %v37, %v39
  %v136 = vmax.bf16 %v40, %v42
  %v137 = vmax.bf16 %v41, %v43
  %v138 = vmax.bf16 %v44, %v46
  %v139 = vmax.bf16 %v45, %v47
  %v140 = vmax.bf16 %v48, %v50
  %v141 = vmax.bf16 %v49, %v51
  %v142 = vmax.bf16 %v52, %v54
  %v143 = vmax.bf16 %v53, %v55
  %v144 = vmax.bf16 %v56, %v58
  %v145 = vmax.bf16 %v57, %v59
  %v146 = vmax.bf16 %v60, %v62
  %v147 = vmax.bf16 %v61, %v63
  %v148 = vmax.bf16 %v64, %v66
  %v149 = vmax.bf16 %v65, %v67
  %v150 = vmax.bf16 %v68, %v70
  %v151 = vmax.bf16 %v69, %v71
  %v152 = vmax.bf16 %v72, %v74
  %v153 = vmax.bf16 %v73, %v75
  %v154 = vmax.bf16 %v76, %v78
  %v155 = vmax.bf16 %v77, %v79
  %v156 = vmax.bf16 %v80, %v82
  %v157 = vmax.bf16 %v81, %v83
  %v158 = vmax.bf16 %v84, %v86
  %v159 = vmax.bf16 %v85, %v87
  %v160 = vmax.bf16 %v88, %v90
  %v161 = vmax.bf16 %v89, %v91
  %v162 = vmax.bf16 %v92, %v94
  %v163 = vmax.bf16 %v93, %v95
  %v164 = vmax.bf16 %v96, %v98
  %v165 = vmax.bf16 %v97, %v99
  %v166 = vmax.bf16 %v100, %v102
  %v167 = vmax.bf16 %v101, %v103
  %v168 = vmax.bf16 %v104, %v106
  %v169 = vmax.bf16 %v105, %v107
  %v170 = vmax.bf16 %v108, %v110
  %v171 = vmax.bf16 %v109, %v111
  %v172 = vmax.bf16 %v112, %v114
  %v173 = vmax.bf16 %v113, %v115
  %v174 = vmax.bf16 %v116, %v118
  %v175 = vmax.bf16 %v117, %v119
  %232 = vrot.lane.b32.xlu0 %v120, 108
  %v233 = vpop.permute.xlu0 %232
  %234 = vrot.lane.b32.xlu0 %v121, 108
  %v235 = vpop.permute.xlu0 %234
  %236 = vrot.lane.b32.xlu0 %v122, 108
  %v237 = vpop.permute.xlu0 %236
  %238 = vrot.lane.b32.xlu0 %v123, 108
  %v239 = vpop.permute.xlu0 %238
  %240 = vrot.lane.b32.xlu0 %v124, 108
  %v241 = vpop.permute.xlu0 %240
  %242 = vrot.lane.b32.xlu0 %v125, 108
  %v243 = vpop.permute.xlu0 %242
  %244 = vrot.lane.b32.xlu0 %v126, 108
  %v245 = vpop.permute.xlu0 %244
  %246 = vrot.lane.b32.xlu0 %v127, 108
  %v247 = vpop.permute.xlu0 %246
  %248 = vrot.lane.b32.xlu0 %v128, 108
  %v249 = vpop.permute.xlu0 %248
  %250 = vrot.lane.b32.xlu0 %v129, 108
  %v251 = vpop.permute.xlu0 %250
  %252 = vrot.lane.b32.xlu0 %v130, 108
  %v253 = vpop.permute.xlu0 %252
  %254 = vrot.lane.b32.xlu0 %v131, 108
  %v255 = vpop.permute.xlu0 %254
  %256 = vrot.lane.b32.xlu0 %v132, 108
  %v257 = vpop.permute.xlu0 %256
  %258 = vrot.lane.b32.xlu0 %v133, 108
  %v259 = vpop.permute.xlu0 %258
  %260 = vrot.lane.b32.xlu0 %v134, 108
  %v261 = vpop.permute.xlu0 %260
  %262 = vrot.lane.b32.xlu0 %v135, 108
  %v263 = vpop.permute.xlu0 %262
  %264 = vrot.lane.b32.xlu0 %v136, 108
  %v265 = vpop.permute.xlu0 %264
  %266 = vrot.lane.b32.xlu0 %v137, 108
  %v267 = vpop.permute.xlu0 %266
  %268 = vrot.lane.b32.xlu0 %v138, 108
  %v269 = vpop.permute.xlu0 %268
  %270 = vrot.lane.b32.xlu0 %v139, 108
  %v271 = vpop.permute.xlu0 %270
  %272 = vrot.lane.b32.xlu0 %v140, 108
  %v273 = vpop.permute.xlu0 %272
  %274 = vrot.lane.b32.xlu0 %v141, 108
  %v275 = vpop.permute.xlu0 %274
  %276 = vrot.lane.b32.xlu0 %v142, 108
  %v277 = vpop.permute.xlu0 %276
  %278 = vrot.lane.b32.xlu0 %v143, 108
  %v279 = vpop.permute.xlu0 %278
  %280 = vrot.lane.b32.xlu0 %v144, 108
  %v281 = vpop.permute.xlu0 %280
  %282 = vrot.lane.b32.xlu0 %v145, 108
  %v283 = vpop.permute.xlu0 %282
  %284 = vrot.lane.b32.xlu0 %v146, 108
  %v285 = vpop.permute.xlu0 %284
  %286 = vrot.lane.b32.xlu0 %v147, 108
  %v287 = vpop.permute.xlu0 %286
  %288 = vrot.lane.b32.xlu0 %v148, 108
  %v289 = vpop.permute.xlu0 %288
  %290 = vrot.lane.b32.xlu0 %v149, 108
  %v291 = vpop.permute.xlu0 %290
  %292 = vrot.lane.b32.xlu0 %v150, 108
  %v293 = vpop.permute.xlu0 %292
  %294 = vrot.lane.b32.xlu0 %v151, 108
  %v295 = vpop.permute.xlu0 %294
  %296 = vrot.lane.b32.xlu0 %v152, 108
  %v297 = vpop.permute.xlu0 %296
  %298 = vrot.lane.b32.xlu0 %v153, 108
  %v299 = vpop.permute.xlu0 %298
  %300 = vrot.lane.b32.xlu0 %v154, 108
  %v301 = vpop.permute.xlu0 %300
  %302 = vrot.lane.b32.xlu0 %v155, 108
  %v303 = vpop.permute.xlu0 %302
  %304 = vrot.lane.b32.xlu0 %v156, 108
  %v305 = vpop.permute.xlu0 %304
  %306 = vrot.lane.b32.xlu0 %v157, 108
  %v307 = vpop.permute.xlu0 %306
  %308 = vrot.lane.b32.xlu0 %v158, 108
  %v309 = vpop.permute.xlu0 %308
  %310 = vrot.lane.b32.xlu0 %v159, 108
  %v311 = vpop.permute.xlu0 %310
  %312 = vrot.lane.b32.xlu0 %v160, 108
  %v313 = vpop.permute.xlu0 %312
  %314 = vrot.lane.b32.xlu0 %v161, 108
  %v315 = vpop.permute.xlu0 %314
  %316 = vrot.lane.b32.xlu0 %v162, 108
  %v317 = vpop.permute.xlu0 %316
  %318 = vrot.lane.b32.xlu0 %v163, 108
  %v319 = vpop.permute.xlu0 %318
  %320 = vrot.lane.b32.xlu0 %v164, 108
  %v321 = vpop.permute.xlu0 %320
  %322 = vrot.lane.b32.xlu0 %v165, 108
  %v323 = vpop.permute.xlu0 %322
  %324 = vrot.lane.b32.xlu0 %v166, 108
  %v325 = vpop.permute.xlu0 %324
  %326 = vrot.lane.b32.xlu0 %v167, 108
  %v327 = vpop.permute.xlu0 %326
  %328 = vrot.lane.b32.xlu0 %v168, 108
  %v329 = vpop.permute.xlu0 %328
  %330 = vrot.lane.b32.xlu0 %v169, 108
  %v331 = vpop.permute.xlu0 %330
  %332 = vrot.lane.b32.xlu0 %v170, 108
  %v333 = vpop.permute.xlu0 %332
  %334 = vrot.lane.b32.xlu0 %v171, 108
  %v335 = vpop.permute.xlu0 %334
  %336 = vrot.lane.b32.xlu0 %v172, 108
  %v337 = vpop.permute.xlu0 %336
  %338 = vrot.lane.b32.xlu0 %v173, 108
  %v339 = vpop.permute.xlu0 %338
  %340 = vrot.lane.b32.xlu0 %v174, 108
  %v341 = vpop.permute.xlu0 %340
  %342 = vrot.lane.b32.xlu0 %v175, 108
  %v343 = vpop.permute.xlu0 %342
  %v400 = vmax.bf16 %v120, %v233
  %v401 = vmax.bf16 %v121, %v235
  %v402 = vmax.bf16 %v122, %v237
  %v403 = vmax.bf16 %v123, %v239
  %v404 = vmax.bf16 %v124, %v241
  %v405 = vmax.bf16 %v125, %v243
  %v406 = vmax.bf16 %v126, %v245
  %v407 = vmax.bf16 %v127, %v247
  %v408 = vmax.bf16 %v128, %v249
  %v409 = vmax.bf16 %v129, %v251
  %v410 = vmax.bf16 %v130, %v253
  %v411 = vmax.bf16 %v131, %v255
  %v412 = vmax.bf16 %v132, %v257
  %v413 = vmax.bf16 %v133, %v259
  %v414 = vmax.bf16 %v134, %v261
  %v415 = vmax.bf16 %v135, %v263
  %v416 = vmax.bf16 %v136, %v265
  %v417 = vmax.bf16 %v137, %v267
  %v418 = vmax.bf16 %v138, %v269
  %v419 = vmax.bf16 %v139, %v271
  %v420 = vmax.bf16 %v140, %v273
  %v421 = vmax.bf16 %v141, %v275
  %v422 = vmax.bf16 %v142, %v277
  %v423 = vmax.bf16 %v143, %v279
  %v424 = vmax.bf16 %v144, %v281
  %v425 = vmax.bf16 %v145, %v283
  %v426 = vmax.bf16 %v146, %v285
  %v427 = vmax.bf16 %v147, %v287
  %v428 = vmax.bf16 %v148, %v289
  %v429 = vmax.bf16 %v149, %v291
  %v430 = vmax.bf16 %v150, %v293
  %v431 = vmax.bf16 %v151, %v295
  %v432 = vmax.bf16 %v152, %v297
  %v433 = vmax.bf16 %v153, %v299
  %v434 = vmax.bf16 %v154, %v301
  %v435 = vmax.bf16 %v155, %v303
  %v436 = vmax.bf16 %v156, %v305
  %v437 = vmax.bf16 %v157, %v307
  %v438 = vmax.bf16 %v158, %v309
  %v439 = vmax.bf16 %v159, %v311
  %v440 = vmax.bf16 %v160, %v313
  %v441 = vmax.bf16 %v161, %v315
  %v442 = vmax.bf16 %v162, %v317
  %v443 = vmax.bf16 %v163, %v319
  %v444 = vmax.bf16 %v164, %v321
  %v445 = vmax.bf16 %v165, %v323
  %v446 = vmax.bf16 %v166, %v325
  %v447 = vmax.bf16 %v167, %v327
  %v448 = vmax.bf16 %v168, %v329
  %v449 = vmax.bf16 %v169, %v331
  %v450 = vmax.bf16 %v170, %v333
  %v451 = vmax.bf16 %v171, %v335
  %v452 = vmax.bf16 %v172, %v337
  %v453 = vmax.bf16 %v173, %v339
  %v454 = vmax.bf16 %v174, %v341
  %v455 = vmax.bf16 %v175, %v343
  %vm456 = vcmask 158720
  %457 = vst.msk [vmem:[%s1] sm:$0xf] %vm456, %v400
  %vm458 = vcmask 157696
  %459 = vst.msk [vmem:[%s1 + $0x4] sm:$0x7] %vm458, %v401
  %460 = vst.msk [vmem:[%s1 + $0x8] sm:$0xf] %vm456, %v402
  %461 = vst.msk [vmem:[%s1 + $0xc] sm:$0x7] %vm458, %v403
  %462 = vst.msk [vmem:[%s1 + $0x10] sm:$0xf] %vm456, %v404
  %463 = vst.msk [vmem:[%s1 + $0x14] sm:$0x7] %vm458, %v405
  %464 = vst.msk [vmem:[%s1 + $0x18] sm:$0xf] %vm456, %v406
  %465 = vst.msk [vmem:[%s1 + $0x1c] sm:$0x7] %vm458, %v407
  %466 = vst.msk [vmem:[%s1 + $0x20] sm:$0xf] %vm456, %v408
  %467 = vst.msk [vmem:[%s1 + $0x24] sm:$0x7] %vm458, %v409
  %468 = vst.msk [vmem:[%s1 + $0x28] sm:$0xf] %vm456, %v410
  %469 = vst.msk [vmem:[%s1 + $0x2c] sm:$0x7] %vm458, %v411
  %470 = vst.msk [vmem:[%s1 + $0x30] sm:$0xf] %vm456, %v412
  %471 = vst.msk [vmem:[%s1 + $0x34] sm:$0x7] %vm458, %v413
  %472 = vst.msk [vmem:[%s1 + $0x38] sm:$0xf] %vm456, %v414
  %473 = vst.msk [vmem:[%s1 + $0x3c] sm:$0x7] %vm458, %v415
  %474 = vst.msk [vmem:[%s1 + $0x40] sm:$0xf] %vm456, %v416
  %475 = vst.msk [vmem:[%s1 + $0x44] sm:$0x7] %vm458, %v417
  %476 = vst.msk [vmem:[%s1 + $0x48] sm:$0xf] %vm456, %v418
  %477 = vst.msk [vmem:[%s1 + $0x4c] sm:$0x7] %vm458, %v419
  %478 = vst.msk [vmem:[%s1 + $0x50] sm:$0xf] %vm456, %v420
  %479 = vst.msk [vmem:[%s1 + $0x54] sm:$0x7] %vm458, %v421
  %480 = vst.msk [vmem:[%s1 + $0x58] sm:$0xf] %vm456, %v422
  %481 = vst.msk [vmem:[%s1 + $0x5c] sm:$0x7] %vm458, %v423
  %482 = vst.msk [vmem:[%s1 + $0x60] sm:$0xf] %vm456, %v424
  %483 = vst.msk [vmem:[%s1 + $0x64] sm:$0x7] %vm458, %v425
  %484 = vst.msk [vmem:[%s1 + $0x68] sm:$0xf] %vm456, %v426
  %485 = vst.msk [vmem:[%s1 + $0x6c] sm:$0x7] %vm458, %v427
  %486 = vst.msk [vmem:[%s1 + $0x70] sm:$0xf] %vm456, %v428
  %487 = vst.msk [vmem:[%s1 + $0x74] sm:$0x7] %vm458, %v429
  %488 = vst.msk [vmem:[%s1 + $0x78] sm:$0xf] %vm456, %v430
  %489 = vst.msk [vmem:[%s1 + $0x7c] sm:$0x7] %vm458, %v431
  %490 = vst.msk [vmem:[%s1 + $0x80] sm:$0xf] %vm456, %v432
  %491 = vst.msk [vmem:[%s1 + $0x84] sm:$0x7] %vm458, %v433
  %492 = vst.msk [vmem:[%s1 + $0x88] sm:$0xf] %vm456, %v434
  %493 = vst.msk [vmem:[%s1 + $0x8c] sm:$0x7] %vm458, %v435
  %494 = vst.msk [vmem:[%s1 + $0x90] sm:$0xf] %vm456, %v436
  %495 = vst.msk [vmem:[%s1 + $0x94] sm:$0x7] %vm458, %v437
  %496 = vst.msk [vmem:[%s1 + $0x98] sm:$0xf] %vm456, %v438
  %497 = vst.msk [vmem:[%s1 + $0x9c] sm:$0x7] %vm458, %v439
  %498 = vst.msk [vmem:[%s1 + $0xa0] sm:$0xf] %vm456, %v440
  %499 = vst.msk [vmem:[%s1 + $0xa4] sm:$0x7] %vm458, %v441
  %500 = vst.msk [vmem:[%s1 + $0xa8] sm:$0xf] %vm456, %v442
  %501 = vst.msk [vmem:[%s1 + $0xac] sm:$0x7] %vm458, %v443
  %502 = vst.msk [vmem:[%s1 + $0xb0] sm:$0xf] %vm456, %v444
  %503 = vst.msk [vmem:[%s1 + $0xb4] sm:$0x7] %vm458, %v445
  %504 = vst.msk [vmem:[%s1 + $0xb8] sm:$0xf] %vm456, %v446
  %505 = vst.msk [vmem:[%s1 + $0xbc] sm:$0x7] %vm458, %v447
  %506 = vst.msk [vmem:[%s1 + $0xc0] sm:$0xf] %vm456, %v448
  %507 = vst.msk [vmem:[%s1 + $0xc4] sm:$0x7] %vm458, %v449
  %508 = vst.msk [vmem:[%s1 + $0xc8] sm:$0xf] %vm456, %v450
  %509 = vst.msk [vmem:[%s1 + $0xcc] sm:$0x7] %vm458, %v451
  %510 = vst.msk [vmem:[%s1 + $0xd0] sm:$0xf] %vm456, %v452
  %511 = vst.msk [vmem:[%s1 + $0xd4] sm:$0x7] %vm458, %v453
  %512 = vst.msk [vmem:[%s1 + $0xd8] sm:$0xf] %vm456, %v454
  %513 = vst.msk [vmem:[%s1 + $0xdc] sm:$0x7] %vm458, %v455
  // Predicated region
  $region6: #{net_forward.6} parent=0 // pred_check
    _
  $region7: #{net_forward.6} parent=0 // pred_check_branch
    %515 = sbr.rel (0) target = $region9
  $region8: #{net_forward.6} parent=0 // pred_region
    _
  $region9: #{net_forward.6} parent=0 // pred_fallthru
    _
  // Predicated region
  $region10: #{net_forward.6} parent=0 // pred_check
    _
  $region11: #{net_forward.6} parent=0 // pred_check_branch
    %517 = sbr.rel (0) target = $region13
  $region12: #{net_forward.6} parent=0 // pred_region
    _
  $region13: #{net_forward.6} parent=0 // pred_fallthru
    _

// kernel: net_forward.7
$region0: #{net_forward.7}
  #allocation0 [shape = 'u32[]', space=smem, size = 0x4, offset = 0x4, fixed_abs, tag = 'smem constant byte address 0x4 - core index']
  #allocation1 [shape = 'u32[144,128]{1,0:T(1,128)}', space=vmem, size = 0x12000, scoped, tag = 'internal scratch']
  %s0 = inlined_call_operand.vmem [shape: bf16[200,500], index: 0, kind: input, shape index: {}]
  %s1 = inlined_call_operand.vmem [shape: bf16[500,32], index: 1, kind: input, shape index: {}]
  %s2 = inlined_call_operand.vmem [shape: f32[1,32], index: 2, kind: input, shape index: {}]
  %s3 = inlined_call_operand.vmem [shape: bf16[200,32], index: 3, kind: output, shape index: {}]
  %s4 = sld [smem:[#allocation0]]
  $region22: #{net_forward.7} parent=0
    _
  %s6 = ssub.s32 1, %s4
  %s7 = scalar_select 0, %s6, %s4
  // Predicated region
  $region2: #{net_forward.7} parent=0 // pred_check
    _
  $region3: #{net_forward.7} parent=0 // pred_check_branch
    %9 = sbr.rel (0) target = $region5
  $region4: #{net_forward.7} parent=0 // pred_region
    _
  $region5: #{net_forward.7} parent=0 // pred_fallthru
    _
  // Predicated region
  $region6: #{net_forward.7} parent=0 // pred_check
    _
  $region7: #{net_forward.7} parent=0 // pred_check_branch
    %11 = sbr.rel (0) target = $region9
  $region8: #{net_forward.7} parent=0 // pred_region
    _
  $region9: #{net_forward.7} parent=0 // pred_fallthru
    _
  // Predicated region
  $region10: #{net_forward.7} parent=0 // pred_check
    _
  $region11: #{net_forward.7} parent=0 // pred_check_branch
    %13 = sbr.rel (0) target = $region13
  $region12: #{net_forward.7} parent=0 // pred_region
    _
  $region13: #{net_forward.7} parent=0 // pred_fallthru
    _
  %v15 = vld [vmem:[%s0] sm:$0xff]
  %v16 = vld [vmem:[%s0 + $0x8] sm:$0xff]
  %v17 = vld [vmem:[%s0 + $0x10] sm:$0xff]
  %v18 = vld [vmem:[%s0 + $0x18] sm:$0xff]
  %v19 = vld [vmem:[%s0 + $0x20] sm:$0xff]
  %v20 = vld [vmem:[%s0 + $0x28] sm:$0xff]
  %v21 = vld [vmem:[%s0 + $0x30] sm:$0xff]
  %v22 = vld [vmem:[%s0 + $0x38] sm:$0xff]
  %v23 = vld [vmem:[%s0 + $0x40] sm:$0xff]
  %v24 = vld [vmem:[%s0 + $0x48] sm:$0xff]
  %v25 = vld [vmem:[%s0 + $0x50] sm:$0xff]
  %v26 = vld [vmem:[%s0 + $0x58] sm:$0xff]
  %v27 = vld [vmem:[%s0 + $0x60] sm:$0xff]
  %v28 = vld [vmem:[%s0 + $0x68] sm:$0xff]
  %v29 = vld [vmem:[%s0 + $0x70] sm:$0xff]
  %v30 = vld [vmem:[%s0 + $0x78] sm:$0xff]
  %v31 = vld [vmem:[%s0 + $0x80] sm:$0xff]
  %v32 = vld [vmem:[%s0 + $0x88] sm:$0xff]
  %v33 = vld [vmem:[%s0 + $0x90] sm:$0xff]
  %v34 = vld [vmem:[%s0 + $0x98] sm:$0xff]
  %v35 = vld [vmem:[%s0 + $0xa0] sm:$0xff]
  %v36 = vld [vmem:[%s0 + $0xa8] sm:$0xff]
  %v37 = vld [vmem:[%s0 + $0xb0] sm:$0xff]
  %v38 = vld [vmem:[%s0 + $0xb8] sm:$0xff]
  %v39 = vld [vmem:[%s0 + $0xc0] sm:$0xff]
  %v40 = vld [vmem:[%s0 + $0xc8] sm:$0xff]
  %v41 = vld [vmem:[%s0 + $0xd0] sm:$0xff]
  %v42 = vld [vmem:[%s0 + $0xd8] sm:$0xff]
  %v43 = vld [vmem:[%s0 + $0xe0] sm:$0xff]
  %v44 = vld [vmem:[%s0 + $0xe8] sm:$0xff]
  %v45 = vld [vmem:[%s0 + $0xf0] sm:$0xff]
  %v46 = vld [vmem:[%s0 + $0xf8] sm:$0xff]
  %v47 = vld [vmem:[%s0 + $0x100] sm:$0xff]
  %v48 = vld [vmem:[%s0 + $0x108] sm:$0xff]
  %v49 = vld [vmem:[%s0 + $0x110] sm:$0xff]
  %v50 = vld [vmem:[%s0 + $0x118] sm:$0xff]
  %v51 = vld [vmem:[%s0 + $0x120] sm:$0xff]
  %v52 = vld [vmem:[%s0 + $0x128] sm:$0xff]
  %v53 = vld [vmem:[%s0 + $0x130] sm:$0xff]
  %v54 = vld [vmem:[%s0 + $0x138] sm:$0xff]
  %v55 = vld [vmem:[%s0 + $0x140] sm:$0xff]
  %v56 = vld [vmem:[%s0 + $0x148] sm:$0xff]
  %v57 = vld [vmem:[%s0 + $0x150] sm:$0xff]
  %v58 = vld [vmem:[%s0 + $0x158] sm:$0xff]
  %v59 = vld [vmem:[%s0 + $0x160] sm:$0xff]
  %v60 = vld [vmem:[%s0 + $0x168] sm:$0xff]
  %v61 = vld [vmem:[%s0 + $0x170] sm:$0xff]
  %v62 = vld [vmem:[%s0 + $0x178] sm:$0xff]
  %v63 = vld [vmem:[%s0 + $0x180] sm:$0xff]
  %v64 = vld [vmem:[%s0 + $0x188] sm:$0xff]
  %v65 = vld [vmem:[%s1] sm:$0xf]
  %v66 = vld [vmem:[%s1 + $0x4] sm:$0xf]
  %v67 = vld [vmem:[%s1 + $0x8] sm:$0xf]
  %v68 = vld [vmem:[%s1 + $0xc] sm:$0xf]
  %v69 = vld [vmem:[%s1 + $0x10] sm:$0xf]
  %v70 = vld [vmem:[%s1 + $0x14] sm:$0xf]
  %v71 = vld [vmem:[%s1 + $0x18] sm:$0xf]
  %v72 = vld [vmem:[%s1 + $0x1c] sm:$0xf]
  %v73 = vld [vmem:[%s1 + $0x20] sm:$0xf]
  %v74 = vld [vmem:[%s1 + $0x24] sm:$0xf]
  %v75 = vld [vmem:[%s1 + $0x28] sm:$0xf]
  %v76 = vld [vmem:[%s1 + $0x2c] sm:$0xf]
  %v77 = vld [vmem:[%s1 + $0x30] sm:$0xf]
  %v78 = vld [vmem:[%s1 + $0x34] sm:$0xf]
  %v79 = vld [vmem:[%s1 + $0x38] sm:$0xf]
  %v80 = vld [vmem:[%s1 + $0x3c] sm:$0xf]
  %v81 = vld [vmem:[%s1 + $0x40] sm:$0xf]
  %v82 = vld [vmem:[%s1 + $0x44] sm:$0xf]
  %v83 = vld [vmem:[%s1 + $0x48] sm:$0xf]
  %v84 = vld [vmem:[%s1 + $0x4c] sm:$0xf]
  %v85 = vld [vmem:[%s1 + $0x50] sm:$0xf]
  %v86 = vld [vmem:[%s1 + $0x54] sm:$0xf]
  %v87 = vld [vmem:[%s1 + $0x58] sm:$0xf]
  %v88 = vld [vmem:[%s1 + $0x5c] sm:$0xf]
  %v89 = vld [vmem:[%s1 + $0x60] sm:$0xf]
  %v90 = vld [vmem:[%s1 + $0x64] sm:$0xf]
  %v91 = vld [vmem:[%s1 + $0x68] sm:$0xf]
  %v92 = vld [vmem:[%s1 + $0x6c] sm:$0xf]
  %v93 = vld [vmem:[%s1 + $0x70] sm:$0xf]
  %v94 = vld [vmem:[%s1 + $0x74] sm:$0xf]
  %v95 = vld [vmem:[%s1 + $0x78] sm:$0xf]
  %v96 = vld [vmem:[%s1 + $0x7c] sm:$0xf]
  %v97 = vld [vmem:[%s1 + $0x80] sm:$0xf]
  %v98 = vld [vmem:[%s1 + $0x84] sm:$0xf]
  %v99 = vld [vmem:[%s1 + $0x88] sm:$0xf]
  %v100 = vld [vmem:[%s1 + $0x8c] sm:$0xf]
  %v101 = vld [vmem:[%s1 + $0x90] sm:$0xf]
  %v102 = vld [vmem:[%s1 + $0x94] sm:$0xf]
  %v103 = vld [vmem:[%s1 + $0x98] sm:$0xf]
  %v104 = vld [vmem:[%s1 + $0x9c] sm:$0xf]
  %v105 = vld [vmem:[%s1 + $0xa0] sm:$0xf]
  %v106 = vld [vmem:[%s1 + $0xa4] sm:$0xf]
  %v107 = vld [vmem:[%s1 + $0xa8] sm:$0xf]
  %v108 = vld [vmem:[%s1 + $0xac] sm:$0xf]
  %v109 = vld [vmem:[%s1 + $0xb0] sm:$0xf]
  %v110 = vld [vmem:[%s1 + $0xb4] sm:$0xf]
  %v111 = vld [vmem:[%s1 + $0xb8] sm:$0xf]
  %v112 = vld [vmem:[%s1 + $0xbc] sm:$0xf]
  %v113 = vld [vmem:[%s1 + $0xc0] sm:$0xf]
  %v114 = vld [vmem:[%s1 + $0xc4] sm:$0xf]
  %v115 = vld [vmem:[%s1 + $0xc8] sm:$0xf]
  %v116 = vld [vmem:[%s1 + $0xcc] sm:$0xf]
  %v117 = vld [vmem:[%s1 + $0xd0] sm:$0xf]
  %v118 = vld [vmem:[%s1 + $0xd4] sm:$0xf]
  %v119 = vld [vmem:[%s1 + $0xd8] sm:$0xf]
  %v120 = vld [vmem:[%s1 + $0xdc] sm:$0xf]
  %v121 = vld [vmem:[%s1 + $0xe0] sm:$0xf]
  %v122 = vld [vmem:[%s1 + $0xe4] sm:$0xf]
  %v123 = vld [vmem:[%s1 + $0xe8] sm:$0xf]
  %v124 = vld [vmem:[%s1 + $0xec] sm:$0xf]
  %v125 = vld [vmem:[%s1 + $0xf0] sm:$0xf]
  %v126 = vld [vmem:[%s1 + $0xf4] sm:$0xf]
  %v127 = vld [vmem:[%s1 + $0xf8] sm:$0x3]
  %v128 = vld [vmem:[%s2] sm:$0x1]
  %v130 = vlaneseq
  %v131 = vshrl.u32 %v130, 7
  %v132 = vsub.s32 0, %v131
  %v133 = vrot.slane %v128, %v132
  %v185 = vunpack.c.l.b16 %v15
  %v186 = vunpack.c.h.b16 %v15
  %v187 = vunpack.c.l.b16 %v16
  %v188 = vunpack.c.h.b16 %v16
  %v189 = vunpack.c.l.b16 %v17
  %v190 = vunpack.c.h.b16 %v17
  %v191 = vunpack.c.l.b16 %v18
  %v192 = vunpack.c.h.b16 %v18
  %v193 = vunpack.c.l.b16 %v19
  %v194 = vunpack.c.h.b16 %v19
  %v195 = vunpack.c.l.b16 %v20
  %v196 = vunpack.c.h.b16 %v20
  %v197 = vunpack.c.l.b16 %v21
  %v198 = vunpack.c.h.b16 %v21
  %v199 = vunpack.c.l.b16 %v22
  %v200 = vunpack.c.h.b16 %v22
  %v201 = vunpack.c.l.b16 %v23
  %v202 = vunpack.c.h.b16 %v23
  %v203 = vunpack.c.l.b16 %v24
  %v204 = vunpack.c.h.b16 %v24
  %v205 = vunpack.c.l.b16 %v25
  %v206 = vunpack.c.h.b16 %v25
  %v207 = vunpack.c.l.b16 %v26
  %v208 = vunpack.c.h.b16 %v26
  %v209 = vunpack.c.l.b16 %v27
  %v210 = vunpack.c.h.b16 %v27
  %v211 = vunpack.c.l.b16 %v28
  %v212 = vunpack.c.h.b16 %v28
  %v213 = vunpack.c.l.b16 %v29
  %v214 = vunpack.c.h.b16 %v29
  %v215 = vunpack.c.l.b16 %v30
  %v216 = vunpack.c.h.b16 %v30
  %v217 = vunpack.c.l.b16 %v31
  %v218 = vunpack.c.h.b16 %v31
  %v219 = vunpack.c.l.b16 %v32
  %v220 = vunpack.c.h.b16 %v32
  %v221 = vunpack.c.l.b16 %v33
  %v222 = vunpack.c.h.b16 %v33
  %v223 = vunpack.c.l.b16 %v34
  %v224 = vunpack.c.h.b16 %v34
  %v225 = vunpack.c.l.b16 %v35
  %v226 = vunpack.c.h.b16 %v35
  %v227 = vunpack.c.l.b16 %v36
  %v228 = vunpack.c.h.b16 %v36
  %v229 = vunpack.c.l.b16 %v37
  %v230 = vunpack.c.h.b16 %v37
  %v231 = vunpack.c.l.b16 %v38
  %v232 = vunpack.c.h.b16 %v38
  %v233 = vunpack.c.l.b16 %v39
  %v234 = vunpack.c.h.b16 %v39
  %v235 = vunpack.c.l.b16 %v40
  %v236 = vunpack.c.h.b16 %v40
  %v237 = vunpack.c.l.b16 %v41
  %v238 = vunpack.c.h.b16 %v41
  %v239 = vunpack.c.l.b16 %v42
  %v240 = vunpack.c.h.b16 %v42
  %v241 = vunpack.c.l.b16 %v43
  %v242 = vunpack.c.h.b16 %v43
  %v243 = vunpack.c.l.b16 %v44
  %v244 = vunpack.c.h.b16 %v44
  %v245 = vunpack.c.l.b16 %v45
  %v246 = vunpack.c.h.b16 %v45
  %v247 = vunpack.c.l.b16 %v46
  %v248 = vunpack.c.h.b16 %v46
  %v249 = vunpack.c.l.b16 %v47
  %v250 = vunpack.c.h.b16 %v47
  %v251 = vunpack.c.l.b16 %v48
  %v252 = vunpack.c.h.b16 %v48
  %v253 = vunpack.c.l.b16 %v49
  %v254 = vunpack.c.h.b16 %v49
  %v255 = vunpack.c.l.b16 %v50
  %v256 = vunpack.c.h.b16 %v50
  %v257 = vunpack.c.l.b16 %v51
  %v258 = vunpack.c.h.b16 %v51
  %v259 = vunpack.c.l.b16 %v52
  %v260 = vunpack.c.h.b16 %v52
  %v261 = vunpack.c.l.b16 %v53
  %v262 = vunpack.c.h.b16 %v53
  %v263 = vunpack.c.l.b16 %v54
  %v264 = vunpack.c.h.b16 %v54
  %v265 = vunpack.c.l.b16 %v55
  %v266 = vunpack.c.h.b16 %v55
  %v267 = vunpack.c.l.b16 %v56
  %v268 = vunpack.c.h.b16 %v56
  %v269 = vunpack.c.l.b16 %v57
  %v270 = vunpack.c.h.b16 %v57
  %v271 = vunpack.c.l.b16 %v58
  %v272 = vunpack.c.h.b16 %v58
  %v273 = vunpack.c.l.b16 %v59
  %v274 = vunpack.c.h.b16 %v59
  %v275 = vunpack.c.l.b16 %v60
  %v276 = vunpack.c.h.b16 %v60
  %v277 = vunpack.c.l.b16 %v61
  %v278 = vunpack.c.h.b16 %v61
  %v279 = vunpack.c.l.b16 %v62
  %v280 = vunpack.c.h.b16 %v62
  %v281 = vunpack.c.l.b16 %v63
  %v282 = vunpack.c.h.b16 %v63
  %v283 = vunpack.c.l.b16 %v64
  %v284 = vunpack.c.h.b16 %v64
  %v285 = vpack.c.b16 %v189, %v185
  %v286 = vpack.c.b16 %v190, %v186
  %v287 = vpack.c.b16 %v191, %v187
  %v288 = vpack.c.b16 %v192, %v188
  %v289 = vpack.c.b16 %v197, %v193
  %v290 = vpack.c.b16 %v198, %v194
  %v291 = vpack.c.b16 %v199, %v195
  %v292 = vpack.c.b16 %v200, %v196
  %v293 = vpack.c.b16 %v205, %v201
  %v294 = vpack.c.b16 %v206, %v202
  %v295 = vpack.c.b16 %v207, %v203
  %v296 = vpack.c.b16 %v208, %v204
  %v297 = vpack.c.b16 %v213, %v209
  %v298 = vpack.c.b16 %v214, %v210
  %v299 = vpack.c.b16 %v215, %v211
  %v300 = vpack.c.b16 %v216, %v212
  %v301 = vpack.c.b16 %v221, %v217
  %v302 = vpack.c.b16 %v222, %v218
  %v303 = vpack.c.b16 %v223, %v219
  %v304 = vpack.c.b16 %v224, %v220
  %v305 = vpack.c.b16 %v229, %v225
  %v306 = vpack.c.b16 %v230, %v226
  %v307 = vpack.c.b16 %v231, %v227
  %v308 = vpack.c.b16 %v232, %v228
  %v309 = vpack.c.b16 %v237, %v233
  %v310 = vpack.c.b16 %v238, %v234
  %v311 = vpack.c.b16 %v239, %v235
  %v312 = vpack.c.b16 %v240, %v236
  %v313 = vpack.c.b16 %v245, %v241
  %v314 = vpack.c.b16 %v246, %v242
  %v315 = vpack.c.b16 %v247, %v243
  %v316 = vpack.c.b16 %v248, %v244
  %v317 = vpack.c.b16 %v253, %v249
  %v318 = vpack.c.b16 %v254, %v250
  %v319 = vpack.c.b16 %v255, %v251
  %v320 = vpack.c.b16 %v256, %v252
  %v321 = vpack.c.b16 %v261, %v257
  %v322 = vpack.c.b16 %v262, %v258
  %v323 = vpack.c.b16 %v263, %v259
  %v324 = vpack.c.b16 %v264, %v260
  %v325 = vpack.c.b16 %v269, %v265
  %v326 = vpack.c.b16 %v270, %v266
  %v327 = vpack.c.b16 %v271, %v267
  %v328 = vpack.c.b16 %v272, %v268
  %v329 = vpack.c.b16 %v277, %v273
  %v330 = vpack.c.b16 %v278, %v274
  %v331 = vpack.c.b16 %v279, %v275
  %v332 = vpack.c.b16 %v280, %v276
  %v333 = vpack.c.b16 %v281, %v281
  %v334 = vpack.c.b16 %v282, %v282
  %v335 = vpack.c.b16 %v283, %v283
  %v336 = vpack.c.b16 %v284, %v284
  %v439 = vunpack.c.l.b16 %v65
  %v440 = vunpack.c.l.b16 %v66
  %v441 = vunpack.c.l.b16 %v67
  %v442 = vunpack.c.l.b16 %v68
  %v443 = vunpack.c.l.b16 %v69
  %v444 = vunpack.c.l.b16 %v70
  %v445 = vunpack.c.l.b16 %v71
  %v446 = vunpack.c.l.b16 %v72
  %v447 = vunpack.c.l.b16 %v73
  %v448 = vunpack.c.l.b16 %v74
  %v449 = vunpack.c.l.b16 %v75
  %v450 = vunpack.c.l.b16 %v76
  %v451 = vunpack.c.l.b16 %v77
  %v452 = vunpack.c.l.b16 %v78
  %v453 = vunpack.c.l.b16 %v79
  %v454 = vunpack.c.l.b16 %v80
  %v455 = vunpack.c.l.b16 %v81
  %v456 = vunpack.c.l.b16 %v82
  %v457 = vunpack.c.l.b16 %v83
  %v458 = vunpack.c.l.b16 %v84
  %v459 = vunpack.c.l.b16 %v85
  %v460 = vunpack.c.l.b16 %v86
  %v461 = vunpack.c.l.b16 %v87
  %v462 = vunpack.c.l.b16 %v88
  %v463 = vunpack.c.l.b16 %v89
  %v464 = vunpack.c.l.b16 %v90
  %v465 = vunpack.c.l.b16 %v91
  %v466 = vunpack.c.l.b16 %v92
  %v467 = vunpack.c.l.b16 %v93
  %v468 = vunpack.c.l.b16 %v94
  %v469 = vunpack.c.l.b16 %v95
  %v470 = vunpack.c.l.b16 %v96
  %v471 = vunpack.c.l.b16 %v97
  %v472 = vunpack.c.l.b16 %v98
  %v473 = vunpack.c.l.b16 %v99
  %v474 = vunpack.c.l.b16 %v100
  %v475 = vunpack.c.l.b16 %v101
  %v476 = vunpack.c.l.b16 %v102
  %v477 = vunpack.c.l.b16 %v103
  %v478 = vunpack.c.l.b16 %v104
  %v479 = vunpack.c.l.b16 %v105
  %v480 = vunpack.c.l.b16 %v106
  %v481 = vunpack.c.l.b16 %v107
  %v482 = vunpack.c.l.b16 %v108
  %v483 = vunpack.c.l.b16 %v109
  %v484 = vunpack.c.l.b16 %v110
  %v485 = vunpack.c.l.b16 %v111
  %v486 = vunpack.c.l.b16 %v112
  %v487 = vunpack.c.l.b16 %v113
  %v488 = vunpack.c.l.b16 %v114
  %v489 = vunpack.c.l.b16 %v115
  %v490 = vunpack.c.l.b16 %v116
  %v491 = vunpack.c.l.b16 %v117
  %v492 = vunpack.c.l.b16 %v118
  %v493 = vunpack.c.l.b16 %v119
  %v494 = vunpack.c.l.b16 %v120
  %v495 = vunpack.c.l.b16 %v121
  %v496 = vunpack.c.l.b16 %v122
  %v497 = vunpack.c.l.b16 %v123
  %v498 = vunpack.c.l.b16 %v124
  %v499 = vunpack.c.l.b16 %v125
  %v500 = vunpack.c.l.b16 %v126
  %v501 = vunpack.c.l.b16 %v127
  %v502 = vpack.c.b16 %v440, %v439
  %v503 = vpack.c.b16 %v442, %v441
  %v504 = vpack.c.b16 %v444, %v443
  %v505 = vpack.c.b16 %v446, %v445
  %v506 = vpack.c.b16 %v448, %v447
  %v507 = vpack.c.b16 %v450, %v449
  %v508 = vpack.c.b16 %v452, %v451
  %v509 = vpack.c.b16 %v454, %v453
  %v510 = vpack.c.b16 %v456, %v455
  %v511 = vpack.c.b16 %v458, %v457
  %v512 = vpack.c.b16 %v460, %v459
  %v513 = vpack.c.b16 %v462, %v461
  %v514 = vpack.c.b16 %v464, %v463
  %v515 = vpack.c.b16 %v466, %v465
  %v516 = vpack.c.b16 %v468, %v467
  %v517 = vpack.c.b16 %v470, %v469
  %v518 = vpack.c.b16 %v472, %v471
  %v519 = vpack.c.b16 %v474, %v473
  %v520 = vpack.c.b16 %v476, %v475
  %v521 = vpack.c.b16 %v478, %v477
  %v522 = vpack.c.b16 %v480, %v479
  %v523 = vpack.c.b16 %v482, %v481
  %v524 = vpack.c.b16 %v484, %v483
  %v525 = vpack.c.b16 %v486, %v485
  %v526 = vpack.c.b16 %v488, %v487
  %v527 = vpack.c.b16 %v490, %v489
  %v528 = vpack.c.b16 %v492, %v491
  %v529 = vpack.c.b16 %v494, %v493
  %v530 = vpack.c.b16 %v496, %v495
  %v531 = vpack.c.b16 %v498, %v497
  %v532 = vpack.c.b16 %v500, %v499
  %v533 = vpack.c.b16 %v501, %v501
  %vm565 = vcmask 949248
  %v567 = vsel %vm565, %v288, 0
  %v570 = vsel %vm565, %v292, 0
  %v573 = vsel %vm565, %v296, 0
  %v576 = vsel %vm565, %v300, 0
  %v579 = vsel %vm565, %v304, 0
  %v582 = vsel %vm565, %v308, 0
  %v585 = vsel %vm565, %v312, 0
  %v588 = vsel %vm565, %v316, 0
  %v591 = vsel %vm565, %v320, 0
  %v594 = vsel %vm565, %v324, 0
  %v597 = vsel %vm565, %v328, 0
  %v600 = vsel %vm565, %v332, 0
  %v603 = vsel %vm565, %v336, 0
  %vm605 = vcmask 1041408
  %v607 = vsel %vm605, %v533, 0
  %609 = vmatprep.subr.bf16.mxu0 0
  %610 = vmatpush1.bf16.msra.mxu0 %v502
  %611 = vmatprep.subr.bf16.mxu0 0
  %612 = vmatpush1.bf16.msra.mxu0 %v503
  %613 = vmatprep.subr.bf16.mxu0 0
  %614 = vmatpush1.bf16.msra.mxu0 %v504
  %615 = vmatprep.subr.bf16.mxu0 0
  %616 = vmatpush1.bf16.msra.mxu0 %v505
  %617 = vmatprep.subr.bf16.mxu0 0
  %618 = vmatpush1.bf16.msra.mxu0 %v506
  %619 = vmatprep.subr.bf16.mxu0 0
  %620 = vmatpush1.bf16.msra.mxu0 %v507
  %621 = vmatprep.subr.bf16.mxu0 0
  %622 = vmatpush1.bf16.msra.mxu0 %v508
  %623 = vmatprep.subr.bf16.mxu0 0
  %624 = vmatpush1.bf16.msra.mxu0 %v509
  %625 = vmatprep.subr.bf16.mxu0 0
  %626 = vmatpush1.bf16.msra.mxu0 %v510
  %627 = vmatprep.subr.bf16.mxu0 0
  %628 = vmatpush1.bf16.msra.mxu0 %v511
  %629 = vmatprep.subr.bf16.mxu0 0
  %630 = vmatpush1.bf16.msra.mxu0 %v512
  %631 = vmatprep.subr.bf16.mxu0 0
  %632 = vmatpush1.bf16.msra.mxu0 %v513
  %633 = vmatprep.subr.bf16.mxu0 0
  %634 = vmatpush1.bf16.msra.mxu0 %v514
  %635 = vmatprep.subr.bf16.mxu0 0
  %636 = vmatpush1.bf16.msra.mxu0 %v515
  %637 = vmatprep.subr.bf16.mxu0 0
  %638 = vmatpush1.bf16.msra.mxu0 %v516
  %639 = vmatprep.subr.bf16.mxu0 0
  %640 = vmatpush1.bf16.msra.mxu0 %v517
  %641 = vmatprep.mubr.bf16.mxu0 %v286
  %642 = vmatmul.mubr.bf16.gmra.mrb[0].mxu0 %v285
  %v643 = vpop.f32.mrb[0].mxu0
  %v644 = vadd.f32 %v133, %v643
  %v645 = vpop.f32.mrb[0].mxu0
  %v646 = vpop.f32.mrb[0].mxu0
  %v647 = vadd.f32 %v133, %v646
  %v648 = vpop.f32.mrb[0].mxu0
  %649 = vmatprep.mubr.bf16.mxu0 %v290
  %650 = vmatmul.mubr.bf16.gmra.mrb[0].mxu0 %v289
  %v651 = vpop.f32.mrb[0].mxu0
  %v652 = vadd.f32 %v133, %v651
  %v653 = vpop.f32.mrb[0].mxu0
  %v654 = vpop.f32.mrb[0].mxu0
  %v655 = vadd.f32 %v133, %v654
  %v656 = vpop.f32.mrb[0].mxu0
  %657 = vmatprep.mubr.bf16.mxu0 %v294
  %658 = vmatmul.mubr.bf16.gmra.mrb[0].mxu0 %v293
  %v659 = vpop.f32.mrb[0].mxu0
  %v660 = vadd.f32 %v133, %v659
  %v661 = vpop.f32.mrb[0].mxu0
  %v662 = vpop.f32.mrb[0].mxu0
  %v663 = vadd.f32 %v133, %v662
  %v664 = vpop.f32.mrb[0].mxu0
  %665 = vmatprep.mubr.bf16.mxu0 %v298
  %666 = vmatmul.mubr.bf16.gmra.mrb[0].mxu0 %v297
  %v667 = vpop.f32.mrb[0].mxu0
  %v668 = vadd.f32 %v133, %v667
  %v669 = vpop.f32.mrb[0].mxu0
  %v670 = vpop.f32.mrb[0].mxu0
  %v671 = vadd.f32 %v133, %v670
  %v672 = vpop.f32.mrb[0].mxu0
  %673 = vmatprep.mubr.bf16.mxu0 %v302
  %674 = vmatmul.mubr.bf16.gmra.mrb[0].mxu0 %v301
  %v675 = vpop.f32.mrb[0].mxu0
  %v676 = vadd.f32 %v133, %v675
  %v677 = vpop.f32.mrb[0].mxu0
  %v678 = vpop.f32.mrb[0].mxu0
  %v679 = vadd.f32 %v133, %v678
  %v680 = vpop.f32.mrb[0].mxu0
  %681 = vmatprep.mubr.bf16.mxu0 %v306
  %682 = vmatmul.mubr.bf16.gmra.mrb[0].mxu0 %v305
  %v683 = vpop.f32.mrb[0].mxu0
  %v684 = vadd.f32 %v133, %v683
  %v685 = vpop.f32.mrb[0].mxu0
  %v686 = vpop.f32.mrb[0].mxu0
  %v687 = vadd.f32 %v133, %v686
  %v688 = vpop.f32.mrb[0].mxu0
  %689 = vmatprep.mubr.bf16.mxu0 %v310
  %690 = vmatmul.mubr.bf16.gmra.mrb[0].mxu0 %v309
  %v691 = vpop.f32.mrb[0].mxu0
  %v692 = vadd.f32 %v133, %v691
  %v693 = vpop.f32.mrb[0].mxu0
  %v694 = vpop.f32.mrb[0].mxu0
  %v695 = vadd.f32 %v133, %v694
  %v696 = vpop.f32.mrb[0].mxu0
  %697 = vmatprep.mubr.bf16.mxu0 %v314
  %698 = vmatmul.mubr.bf16.gmra.mrb[0].mxu0 %v313
  %v699 = vpop.f32.mrb[0].mxu0
  %v700 = vadd.f32 %v133, %v699
  %v701 = vpop.f32.mrb[0].mxu0
  %v702 = vpop.f32.mrb[0].mxu0
  %v703 = vadd.f32 %v133, %v702
  %v704 = vpop.f32.mrb[0].mxu0
  %705 = vmatprep.mubr.bf16.mxu0 %v318
  %706 = vmatmul.mubr.bf16.gmra.mrb[0].mxu0 %v317
  %v707 = vpop.f32.mrb[0].mxu0
  %v708 = vadd.f32 %v133, %v707
  %v709 = vpop.f32.mrb[0].mxu0
  %v710 = vpop.f32.mrb[0].mxu0
  %v711 = vadd.f32 %v133, %v710
  %v712 = vpop.f32.mrb[0].mxu0
  %713 = vmatprep.mubr.bf16.mxu0 %v322
  %714 = vmatmul.mubr.bf16.gmra.mrb[0].mxu0 %v321
  %v715 = vpop.f32.mrb[0].mxu0
  %v716 = vadd.f32 %v133, %v715
  %v717 = vpop.f32.mrb[0].mxu0
  %v718 = vpop.f32.mrb[0].mxu0
  %v719 = vadd.f32 %v133, %v718
  %v720 = vpop.f32.mrb[0].mxu0
  %721 = vmatprep.mubr.bf16.mxu0 %v326
  %722 = vmatmul.mubr.bf16.gmra.mrb[0].mxu0 %v325
  %v723 = vpop.f32.mrb[0].mxu0
  %v724 = vadd.f32 %v133, %v723
  %v725 = vpop.f32.mrb[0].mxu0
  %v726 = vpop.f32.mrb[0].mxu0
  %v727 = vadd.f32 %v133, %v726
  %v728 = vpop.f32.mrb[0].mxu0
  %729 = vmatprep.mubr.bf16.mxu0 %v330
  %730 = vmatmul.mubr.bf16.gmra.mrb[0].mxu0 %v329
  %v731 = vpop.f32.mrb[0].mxu0
  %v732 = vadd.f32 %v133, %v731
  %v733 = vpop.f32.mrb[0].mxu0
  %v734 = vpop.f32.mrb[0].mxu0
  %v735 = vadd.f32 %v133, %v734
  %v736 = vpop.f32.mrb[0].mxu0
  %737 = vmatprep.mubr.bf16.mxu0 %v334
  %738 = vmatmul.mubr.bf16.gmra.mrb[0].mxu0 %v333
  %v739 = vpop.f32.mrb[0].mxu0
  %v740 = vadd.f32 %v133, %v739
  %v741 = vpop.f32.mrb[0].mxu0
  %v742 = vpop.f32.mrb[0].mxu0
  %v743 = vpop.f32.mrb[0].mxu0
  %744 = vdwg.mxu0
  %745 = vmatprep.subr.bf16.mxu0 0
  %746 = vmatpush1.bf16.msra.mxu0 %v518
  %747 = vmatprep.subr.bf16.mxu0 0
  %748 = vmatpush1.bf16.msra.mxu0 %v519
  %749 = vmatprep.subr.bf16.mxu0 0
  %750 = vmatpush1.bf16.msra.mxu0 %v520
  %751 = vmatprep.subr.bf16.mxu0 0
  %752 = vmatpush1.bf16.msra.mxu0 %v521
  %753 = vmatprep.subr.bf16.mxu0 0
  %754 = vmatpush1.bf16.msra.mxu0 %v522
  %755 = vmatprep.subr.bf16.mxu0 0
  %756 = vmatpush1.bf16.msra.mxu0 %v523
  %757 = vmatprep.subr.bf16.mxu0 0
  %758 = vmatpush1.bf16.msra.mxu0 %v524
  %759 = vmatprep.subr.bf16.mxu0 0
  %760 = vmatpush1.bf16.msra.mxu0 %v525
  %761 = vmatprep.subr.bf16.mxu0 0
  %762 = vmatpush1.bf16.msra.mxu0 %v526
  %763 = vmatprep.subr.bf16.mxu0 0
  %764 = vmatpush1.bf16.msra.mxu0 %v527
  %765 = vmatprep.subr.bf16.mxu0 0
  %766 = vmatpush1.bf16.msra.mxu0 %v528
  %767 = vmatprep.subr.bf16.mxu0 0
  %768 = vmatpush1.bf16.msra.mxu0 %v529
  %769 = vmatprep.subr.bf16.mxu0 0
  %770 = vmatpush1.bf16.msra.mxu0 %v530
  %771 = vmatprep.subr.bf16.mxu0 0
  %772 = vmatpush1.bf16.msra.mxu0 %v531
  %773 = vmatprep.subr.bf16.mxu0 0
  %774 = vmatpush1.bf16.msra.mxu0 %v532
  %775 = vmatprep.subr.bf16.mxu0 0
  %776 = vmatpush1.bf16.msra.mxu0 %v607
  %777 = vmatprep.mubr.bf16.mxu0 %v567
  %778 = vmatmul.mubr.bf16.gmra.mrb[0].mxu0 %v287
  %v779 = vpop.f32.mrb[0].mxu0
  %v780 = vadd.f32 %v644, %v779
  %v781 = vpop.f32.mrb[0].mxu0
  %v782 = vpop.f32.mrb[0].mxu0
  %v783 = vadd.f32 %v647, %v782
  %v784 = vpop.f32.mrb[0].mxu0
  %785 = vmatprep.mubr.bf16.mxu0 %v570
  %786 = vmatmul.mubr.bf16.gmra.mrb[0].mxu0 %v291
  %v787 = vpop.f32.mrb[0].mxu0
  %v788 = vadd.f32 %v652, %v787
  %v789 = vpop.f32.mrb[0].mxu0
  %v790 = vpop.f32.mrb[0].mxu0
  %v791 = vadd.f32 %v655, %v790
  %v792 = vpop.f32.mrb[0].mxu0
  %793 = vmatprep.mubr.bf16.mxu0 %v573
  %794 = vmatmul.mubr.bf16.gmra.mrb[0].mxu0 %v295
  %v795 = vpop.f32.mrb[0].mxu0
  %v796 = vadd.f32 %v660, %v795
  %v797 = vpop.f32.mrb[0].mxu0
  %v798 = vpop.f32.mrb[0].mxu0
  %v799 = vadd.f32 %v663, %v798
  %v800 = vpop.f32.mrb[0].mxu0
  %801 = vmatprep.mubr.bf16.mxu0 %v576
  %802 = vmatmul.mubr.bf16.gmra.mrb[0].mxu0 %v299
  %v803 = vpop.f32.mrb[0].mxu0
  %v804 = vadd.f32 %v668, %v803
  %v805 = vpop.f32.mrb[0].mxu0
  %v806 = vpop.f32.mrb[0].mxu0
  %v807 = vadd.f32 %v671, %v806
  %v808 = vpop.f32.mrb[0].mxu0
  %809 = vmatprep.mubr.bf16.mxu0 %v579
  %810 = vmatmul.mubr.bf16.gmra.mrb[0].mxu0 %v303
  %v811 = vpop.f32.mrb[0].mxu0
  %v812 = vadd.f32 %v676, %v811
  %v813 = vpop.f32.mrb[0].mxu0
  %v814 = vpop.f32.mrb[0].mxu0
  %v815 = vadd.f32 %v679, %v814
  %v816 = vpop.f32.mrb[0].mxu0
  %817 = vmatprep.mubr.bf16.mxu0 %v582
  %818 = vmatmul.mubr.bf16.gmra.mrb[0].mxu0 %v307
  %v819 = vpop.f32.mrb[0].mxu0
  %v820 = vadd.f32 %v684, %v819
  %v821 = vpop.f32.mrb[0].mxu0
  %v822 = vpop.f32.mrb[0].mxu0
  %v823 = vadd.f32 %v687, %v822
  %v824 = vpop.f32.mrb[0].mxu0
  %825 = vmatprep.mubr.bf16.mxu0 %v585
  %826 = vmatmul.mubr.bf16.gmra.mrb[0].mxu0 %v311
  %v827 = vpop.f32.mrb[0].mxu0
  %v828 = vadd.f32 %v692, %v827
  %v829 = vpop.f32.mrb[0].mxu0
  %v830 = vpop.f32.mrb[0].mxu0
  %v831 = vadd.f32 %v695, %v830
  %v832 = vpop.f32.mrb[0].mxu0
  %833 = vmatprep.mubr.bf16.mxu0 %v588
  %834 = vmatmul.mubr.bf16.gmra.mrb[0].mxu0 %v315
  %v835 = vpop.f32.mrb[0].mxu0
  %v836 = vadd.f32 %v700, %v835
  %v837 = vpop.f32.mrb[0].mxu0
  %v838 = vpop.f32.mrb[0].mxu0
  %v839 = vadd.f32 %v703, %v838
  %v840 = vpop.f32.mrb[0].mxu0
  %841 = vmatprep.mubr.bf16.mxu0 %v591
  %842 = vmatmul.mubr.bf16.gmra.mrb[0].mxu0 %v319
  %v843 = vpop.f32.mrb[0].mxu0
  %v844 = vadd.f32 %v708, %v843
  %v845 = vpop.f32.mrb[0].mxu0
  %v846 = vpop.f32.mrb[0].mxu0
  %v847 = vadd.f32 %v711, %v846
  %v848 = vpop.f32.mrb[0].mxu0
  %849 = vmatprep.mubr.bf16.mxu0 %v594
  %850 = vmatmul.mubr.bf16.gmra.mrb[0].mxu0 %v323
  %v851 = vpop.f32.mrb[0].mxu0
  %v852 = vadd.f32 %v716, %v851
  %v853 = vpop.f32.mrb[0].mxu0
  %v854 = vpop.f32.mrb[0].mxu0
  %v855 = vadd.f32 %v719, %v854
  %v856 = vpop.f32.mrb[0].mxu0
  %857 = vmatprep.mubr.bf16.mxu0 %v597
  %858 = vmatmul.mubr.bf16.gmra.mrb[0].mxu0 %v327
  %v859 = vpop.f32.mrb[0].mxu0
  %v860 = vadd.f32 %v724, %v859
  %v861 = vpop.f32.mrb[0].mxu0
  %v862 = vpop.f32.mrb[0].mxu0
  %v863 = vadd.f32 %v727, %v862
  %v864 = vpop.f32.mrb[0].mxu0
  %865 = vmatprep.mubr.bf16.mxu0 %v600
  %866 = vmatmul.mubr.bf16.gmra.mrb[0].mxu0 %v331
  %v867 = vpop.f32.mrb[0].mxu0
  %v868 = vadd.f32 %v732, %v867
  %v869 = vpop.f32.mrb[0].mxu0
  %v870 = vpop.f32.mrb[0].mxu0
  %v871 = vadd.f32 %v735, %v870
  %v872 = vpop.f32.mrb[0].mxu0
  %873 = vmatprep.mubr.bf16.mxu0 %v603
  %874 = vmatmul.mubr.bf16.gmra.mrb[0].mxu0 %v335
  %v875 = vpop.f32.mrb[0].mxu0
  %v876 = vadd.f32 %v740, %v875
  %v877 = vpop.f32.mrb[0].mxu0
  %v878 = vpop.f32.mrb[0].mxu0
  %v879 = vpop.f32.mrb[0].mxu0
  %880 = vdwg.mxu0
  %v881 = vand.u32 2147483647, %v780
  %v882 = vand.u32 2147483647, %v783
  %v883 = vand.u32 2147483647, %v788
  %v884 = vand.u32 2147483647, %v791
  %v885 = vand.u32 2147483647, %v796
  %v886 = vand.u32 2147483647, %v799
  %v887 = vand.u32 2147483647, %v804
  %v888 = vand.u32 2147483647, %v807
  %v889 = vand.u32 2147483647, %v812
  %v890 = vand.u32 2147483647, %v815
  %v891 = vand.u32 2147483647, %v820
  %v892 = vand.u32 2147483647, %v823
  %v893 = vand.u32 2147483647, %v828
  %v894 = vand.u32 2147483647, %v831
  %v895 = vand.u32 2147483647, %v836
  %v896 = vand.u32 2147483647, %v839
  %v897 = vand.u32 2147483647, %v844
  %v898 = vand.u32 2147483647, %v847
  %v899 = vand.u32 2147483647, %v852
  %v900 = vand.u32 2147483647, %v855
  %v901 = vand.u32 2147483647, %v860
  %v902 = vand.u32 2147483647, %v863
  %v903 = vand.u32 2147483647, %v868
  %v904 = vand.u32 2147483647, %v871
  %v905 = vand.u32 2147483647, %v876
  %v906 = vadd.f32 %v881, 1.0
  %v907 = vadd.f32 %v882, 1.0
  %v908 = vadd.f32 %v883, 1.0
  %v909 = vadd.f32 %v884, 1.0
  %v910 = vadd.f32 %v885, 1.0
  %v911 = vadd.f32 %v886, 1.0
  %v912 = vadd.f32 %v887, 1.0
  %v913 = vadd.f32 %v888, 1.0
  %v914 = vadd.f32 %v889, 1.0
  %v915 = vadd.f32 %v890, 1.0
  %v916 = vadd.f32 %v891, 1.0
  %v917 = vadd.f32 %v892, 1.0
  %v918 = vadd.f32 %v893, 1.0
  %v919 = vadd.f32 %v894, 1.0
  %v920 = vadd.f32 %v895, 1.0
  %v921 = vadd.f32 %v896, 1.0
  %v922 = vadd.f32 %v897, 1.0
  %v923 = vadd.f32 %v898, 1.0
  %v924 = vadd.f32 %v899, 1.0
  %v925 = vadd.f32 %v900, 1.0
  %v926 = vadd.f32 %v901, 1.0
  %v927 = vadd.f32 %v902, 1.0
  %v928 = vadd.f32 %v903, 1.0
  %v929 = vadd.f32 %v904, 1.0
  %v930 = vadd.f32 %v905, 1.0
  %v931 = vrcp.pop %v906
  %v932 = vmul.f32 %v780, %v931
  %v933 = vrcp.pop %v907
  %v934 = vmul.f32 %v783, %v933
  %v935 = vrcp.pop %v908
  %v936 = vmul.f32 %v788, %v935
  %v937 = vrcp.pop %v909
  %v938 = vmul.f32 %v791, %v937
  %v939 = vrcp.pop %v910
  %v940 = vmul.f32 %v796, %v939
  %v941 = vrcp.pop %v911
  %v942 = vmul.f32 %v799, %v941
  %v943 = vrcp.pop %v912
  %v944 = vmul.f32 %v804, %v943
  %v945 = vrcp.pop %v913
  %v946 = vmul.f32 %v807, %v945
  %v947 = vrcp.pop %v914
  %v948 = vmul.f32 %v812, %v947
  %v949 = vrcp.pop %v915
  %v950 = vmul.f32 %v815, %v949
  %v951 = vrcp.pop %v916
  %v952 = vmul.f32 %v820, %v951
  %v953 = vrcp.pop %v917
  %v954 = vmul.f32 %v823, %v953
  %v955 = vrcp.pop %v918
  %v956 = vmul.f32 %v828, %v955
  %v957 = vrcp.pop %v919
  %v958 = vmul.f32 %v831, %v957
  %v959 = vrcp.pop %v920
  %v960 = vmul.f32 %v836, %v959
  %v961 = vrcp.pop %v921
  %v962 = vmul.f32 %v839, %v961
  %v963 = vrcp.pop %v922
  %v964 = vmul.f32 %v844, %v963
  %v965 = vrcp.pop %v923
  %v966 = vmul.f32 %v847, %v965
  %v967 = vrcp.pop %v924
  %v968 = vmul.f32 %v852, %v967
  %v969 = vrcp.pop %v925
  %v970 = vmul.f32 %v855, %v969
  %v971 = vrcp.pop %v926
  %v972 = vmul.f32 %v860, %v971
  %v973 = vrcp.pop %v927
  %v974 = vmul.f32 %v863, %v973
  %v975 = vrcp.pop %v928
  %v976 = vmul.f32 %v868, %v975
  %v977 = vrcp.pop %v929
  %v978 = vmul.f32 %v871, %v977
  %v979 = vrcp.pop %v930
  %v980 = vmul.f32 %v876, %v979
  %v981 = vpack.c.bf16 %v934, %v932
  %v982 = vpack.c.bf16 %v938, %v936
  %v983 = vpack.c.bf16 %v942, %v940
  %v984 = vpack.c.bf16 %v946, %v944
  %v985 = vpack.c.bf16 %v950, %v948
  %v986 = vpack.c.bf16 %v954, %v952
  %v987 = vpack.c.bf16 %v958, %v956
  %v988 = vpack.c.bf16 %v962, %v960
  %v989 = vpack.c.bf16 %v966, %v964
  %v990 = vpack.c.bf16 %v970, %v968
  %v991 = vpack.c.bf16 %v974, %v972
  %v992 = vpack.c.bf16 %v978, %v976
  %v993 = vpack.c.bf16 %v980, %v980
  %v1007 = vunpack.c.l.b16 %v981
  %v1008 = vunpack.c.h.b16 %v981
  %v1009 = vunpack.c.l.b16 %v982
  %v1010 = vunpack.c.h.b16 %v982
  %v1011 = vunpack.c.l.b16 %v983
  %v1012 = vunpack.c.h.b16 %v983
  %v1013 = vunpack.c.l.b16 %v984
  %v1014 = vunpack.c.h.b16 %v984
  %v1015 = vunpack.c.l.b16 %v985
  %v1016 = vunpack.c.h.b16 %v985
  %v1017 = vunpack.c.l.b16 %v986
  %v1018 = vunpack.c.h.b16 %v986
  %v1019 = vunpack.c.l.b16 %v987
  %v1020 = vunpack.c.h.b16 %v987
  %v1021 = vunpack.c.l.b16 %v988
  %v1022 = vunpack.c.h.b16 %v988
  %v1023 = vunpack.c.l.b16 %v989
  %v1024 = vunpack.c.h.b16 %v989
  %v1025 = vunpack.c.l.b16 %v990
  %v1026 = vunpack.c.h.b16 %v990
  %v1027 = vunpack.c.l.b16 %v991
  %v1028 = vunpack.c.h.b16 %v991
  %v1029 = vunpack.c.l.b16 %v992
  %v1030 = vunpack.c.h.b16 %v992
  %v1031 = vunpack.c.l.b16 %v993
  %v1032 = vpack.c.b16 %v1007, %v1007
  %v1033 = vpack.c.b16 %v1008, %v1008
  %v1034 = vpack.c.b16 %v1009, %v1009
  %v1035 = vpack.c.b16 %v1010, %v1010
  %v1036 = vpack.c.b16 %v1011, %v1011
  %v1037 = vpack.c.b16 %v1012, %v1012
  %v1038 = vpack.c.b16 %v1013, %v1013
  %v1039 = vpack.c.b16 %v1014, %v1014
  %v1040 = vpack.c.b16 %v1015, %v1015
  %v1041 = vpack.c.b16 %v1016, %v1016
  %v1042 = vpack.c.b16 %v1017, %v1017
  %v1043 = vpack.c.b16 %v1018, %v1018
  %v1044 = vpack.c.b16 %v1019, %v1019
  %v1045 = vpack.c.b16 %v1020, %v1020
  %v1046 = vpack.c.b16 %v1021, %v1021
  %v1047 = vpack.c.b16 %v1022, %v1022
  %v1048 = vpack.c.b16 %v1023, %v1023
  %v1049 = vpack.c.b16 %v1024, %v1024
  %v1050 = vpack.c.b16 %v1025, %v1025
  %v1051 = vpack.c.b16 %v1026, %v1026
  %v1052 = vpack.c.b16 %v1027, %v1027
  %v1053 = vpack.c.b16 %v1028, %v1028
  %v1054 = vpack.c.b16 %v1029, %v1029
  %v1055 = vpack.c.b16 %v1030, %v1030
  %v1056 = vpack.c.b16 %v1031, %v1031
  %vm1082 = vcmask 257024
  %1083 = vst.msk [vmem:[%s3] sm:$0xf] %vm1082, %v1032
  %1084 = vst.msk [vmem:[%s3 + $0x4] sm:$0xf] %vm1082, %v1033
  %1085 = vst.msk [vmem:[%s3 + $0x8] sm:$0xf] %vm1082, %v1034
  %1086 = vst.msk [vmem:[%s3 + $0xc] sm:$0xf] %vm1082, %v1035
  %1087 = vst.msk [vmem:[%s3 + $0x10] sm:$0xf] %vm1082, %v1036
  %1088 = vst.msk [vmem:[%s3 + $0x14] sm:$0xf] %vm1082, %v1037
  %1089 = vst.msk [vmem:[%s3 + $0x18] sm:$0xf] %vm1082, %v1038
  %1090 = vst.msk [vmem:[%s3 + $0x1c] sm:$0xf] %vm1082, %v1039
  %1091 = vst.msk [vmem:[%s3 + $0x20] sm:$0xf] %vm1082, %v1040
  %1092 = vst.msk [vmem:[%s3 + $0x24] sm:$0xf] %vm1082, %v1041
  %1093 = vst.msk [vmem:[%s3 + $0x28] sm:$0xf] %vm1082, %v1042
  %1094 = vst.msk [vmem:[%s3 + $0x2c] sm:$0xf] %vm1082, %v1043
  %1095 = vst.msk [vmem:[%s3 + $0x30] sm:$0xf] %vm1082, %v1044
  %1096 = vst.msk [vmem:[%s3 + $0x34] sm:$0xf] %vm1082, %v1045
  %1097 = vst.msk [vmem:[%s3 + $0x38] sm:$0xf] %vm1082, %v1046
  %1098 = vst.msk [vmem:[%s3 + $0x3c] sm:$0xf] %vm1082, %v1047
  %1099 = vst.msk [vmem:[%s3 + $0x40] sm:$0xf] %vm1082, %v1048
  %1100 = vst.msk [vmem:[%s3 + $0x44] sm:$0xf] %vm1082, %v1049
  %1101 = vst.msk [vmem:[%s3 + $0x48] sm:$0xf] %vm1082, %v1050
  %1102 = vst.msk [vmem:[%s3 + $0x4c] sm:$0xf] %vm1082, %v1051
  %1103 = vst.msk [vmem:[%s3 + $0x50] sm:$0xf] %vm1082, %v1052
  %1104 = vst.msk [vmem:[%s3 + $0x54] sm:$0xf] %vm1082, %v1053
  %1105 = vst.msk [vmem:[%s3 + $0x58] sm:$0xf] %vm1082, %v1054
  %1106 = vst.msk [vmem:[%s3 + $0x5c] sm:$0xf] %vm1082, %v1055
  %1107 = vst.msk [vmem:[%s3 + $0x60] sm:$0xf] %vm1082, %v1056
  // Predicated region
  $region14: #{net_forward.7} parent=0 // pred_check
    _
  $region15: #{net_forward.7} parent=0 // pred_check_branch
    %1109 = sbr.rel (0) target = $region17
  $region16: #{net_forward.7} parent=0 // pred_region
    _
  $region17: #{net_forward.7} parent=0 // pred_fallthru
    _
  // Predicated region
  $region18: #{net_forward.7} parent=0 // pred_check
    _
  $region19: #{net_forward.7} parent=0 // pred_check_branch
    %1111 = sbr.rel (0) target = $region21
  $region20: #{net_forward.7} parent=0 // pred_region
    _
  $region21: #{net_forward.7} parent=0 // pred_fallthru
    _

// kernel: net_forward.8
$region0: #{net_forward.8}
  #allocation0 [shape = 'u32[]', space=smem, size = 0x4, offset = 0x4, fixed_abs, tag = 'smem constant byte address 0x4 - core index']
  #allocation1 [shape = 'u32[144,128]{1,0:T(1,128)}', space=vmem, size = 0x12000, scoped, tag = 'internal scratch']
  %s0 = inlined_call_operand.vmem [shape: bf16[10,2,5,64], index: 0, kind: input, shape index: {}]
  %s1 = inlined_call_operand.vmem [shape: bf16[10,5,32], index: 1, kind: output, shape index: {}]
  %s2 = sld [smem:[#allocation0]]
  $region14: #{net_forward.8} parent=0
    _
  %s4 = ssub.s32 1, %s2
  %s5 = scalar_select 0, %s4, %s2
  // Predicated region
  $region2: #{net_forward.8} parent=0 // pred_check
    _
  $region3: #{net_forward.8} parent=0 // pred_check_branch
    %7 = sbr.rel (0) target = $region5
  $region4: #{net_forward.8} parent=0 // pred_region
    _
  $region5: #{net_forward.8} parent=0 // pred_fallthru
    _
  %v8 = vld [vmem:[%s0] sm:$0x7]
  %v9 = vld [vmem:[%s0 + $0x4] sm:$0x7]
  %v10 = vld [vmem:[%s0 + $0x8] sm:$0x7]
  %v11 = vld [vmem:[%s0 + $0xc] sm:$0x7]
  %v12 = vld [vmem:[%s0 + $0x10] sm:$0x7]
  %v13 = vld [vmem:[%s0 + $0x14] sm:$0x7]
  %v14 = vld [vmem:[%s0 + $0x18] sm:$0x7]
  %v15 = vld [vmem:[%s0 + $0x1c] sm:$0x7]
  %v16 = vld [vmem:[%s0 + $0x20] sm:$0x7]
  %v17 = vld [vmem:[%s0 + $0x24] sm:$0x7]
  %v18 = vld [vmem:[%s0 + $0x28] sm:$0x7]
  %v19 = vld [vmem:[%s0 + $0x2c] sm:$0x7]
  %v20 = vld [vmem:[%s0 + $0x30] sm:$0x7]
  %v21 = vld [vmem:[%s0 + $0x34] sm:$0x7]
  %v22 = vld [vmem:[%s0 + $0x38] sm:$0x7]
  %v23 = vld [vmem:[%s0 + $0x3c] sm:$0x7]
  %v24 = vld [vmem:[%s0 + $0x40] sm:$0x7]
  %v25 = vld [vmem:[%s0 + $0x44] sm:$0x7]
  %v26 = vld [vmem:[%s0 + $0x48] sm:$0x7]
  %v27 = vld [vmem:[%s0 + $0x4c] sm:$0x7]
  %v28 = vmax.bf16 %v8, %v9
  %v29 = vmax.bf16 %v10, %v11
  %v30 = vmax.bf16 %v12, %v13
  %v31 = vmax.bf16 %v14, %v15
  %v32 = vmax.bf16 %v16, %v17
  %v33 = vmax.bf16 %v18, %v19
  %v34 = vmax.bf16 %v20, %v21
  %v35 = vmax.bf16 %v22, %v23
  %v36 = vmax.bf16 %v24, %v25
  %v37 = vmax.bf16 %v26, %v27
  %48 = vrot.lane.b32.xlu0 %v28, 96
  %v49 = vpop.permute.xlu0 %48
  %50 = vrot.lane.b32.xlu0 %v29, 96
  %v51 = vpop.permute.xlu0 %50
  %52 = vrot.lane.b32.xlu0 %v30, 96
  %v53 = vpop.permute.xlu0 %52
  %54 = vrot.lane.b32.xlu0 %v31, 96
  %v55 = vpop.permute.xlu0 %54
  %56 = vrot.lane.b32.xlu0 %v32, 96
  %v57 = vpop.permute.xlu0 %56
  %58 = vrot.lane.b32.xlu0 %v33, 96
  %v59 = vpop.permute.xlu0 %58
  %60 = vrot.lane.b32.xlu0 %v34, 96
  %v61 = vpop.permute.xlu0 %60
  %62 = vrot.lane.b32.xlu0 %v35, 96
  %v63 = vpop.permute.xlu0 %62
  %64 = vrot.lane.b32.xlu0 %v36, 96
  %v65 = vpop.permute.xlu0 %64
  %66 = vrot.lane.b32.xlu0 %v37, 96
  %v67 = vpop.permute.xlu0 %66
  %v78 = vmax.bf16 %v28, %v49
  %v79 = vmax.bf16 %v29, %v51
  %v80 = vmax.bf16 %v30, %v53
  %v81 = vmax.bf16 %v31, %v55
  %v82 = vmax.bf16 %v32, %v57
  %v83 = vmax.bf16 %v33, %v59
  %v84 = vmax.bf16 %v34, %v61
  %v85 = vmax.bf16 %v35, %v63
  %v86 = vmax.bf16 %v36, %v65
  %v87 = vmax.bf16 %v37, %v67
  %vm88 = vcmask 256000
  %vm89 = vsmask.f32 2304
  %vm90 = vmand %vm88, %vm89
  %v91 = vld [vmem:[%s1] sm:$0x7]
  %v92 = vsel %vm90, %v78, %v91
  %93 = vst [vmem:[%s1] sm:$0x7] %v92
  %v94 = vld [vmem:[%s1 + $0x4] sm:$0x7]
  %v95 = vsel %vm90, %v79, %v94
  %96 = vst [vmem:[%s1 + $0x4] sm:$0x7] %v95
  %v97 = vld [vmem:[%s1 + $0x8] sm:$0x7]
  %v98 = vsel %vm90, %v80, %v97
  %99 = vst [vmem:[%s1 + $0x8] sm:$0x7] %v98
  %v100 = vld [vmem:[%s1 + $0xc] sm:$0x7]
  %v101 = vsel %vm90, %v81, %v100
  %102 = vst [vmem:[%s1 + $0xc] sm:$0x7] %v101
  %v103 = vld [vmem:[%s1 + $0x10] sm:$0x7]
  %v104 = vsel %vm90, %v82, %v103
  %105 = vst [vmem:[%s1 + $0x10] sm:$0x7] %v104
  %v106 = vld [vmem:[%s1 + $0x14] sm:$0x7]
  %v107 = vsel %vm90, %v83, %v106
  %108 = vst [vmem:[%s1 + $0x14] sm:$0x7] %v107
  %v109 = vld [vmem:[%s1 + $0x18] sm:$0x7]
  %v110 = vsel %vm90, %v84, %v109
  %111 = vst [vmem:[%s1 + $0x18] sm:$0x7] %v110
  %v112 = vld [vmem:[%s1 + $0x1c] sm:$0x7]
  %v113 = vsel %vm90, %v85, %v112
  %114 = vst [vmem:[%s1 + $0x1c] sm:$0x7] %v113
  %v115 = vld [vmem:[%s1 + $0x20] sm:$0x7]
  %v116 = vsel %vm90, %v86, %v115
  %117 = vst [vmem:[%s1 + $0x20] sm:$0x7] %v116
  %v118 = vld [vmem:[%s1 + $0x24] sm:$0x7]
  %v119 = vsel %vm90, %v87, %v118
  %120 = vst [vmem:[%s1 + $0x24] sm:$0x7] %v119
  // Predicated region
  $region6: #{net_forward.8} parent=0 // pred_check
    _
  $region7: #{net_forward.8} parent=0 // pred_check_branch
    %122 = sbr.rel (0) target = $region9
  $region8: #{net_forward.8} parent=0 // pred_region
    _
  $region9: #{net_forward.8} parent=0 // pred_fallthru
    _
  // Predicated region
  $region10: #{net_forward.8} parent=0 // pred_check
    _
  $region11: #{net_forward.8} parent=0 // pred_check_branch
    %124 = sbr.rel (0) target = $region13
  $region12: #{net_forward.8} parent=0 // pred_region
    _
  $region13: #{net_forward.8} parent=0 // pred_fallthru
    _

// kernel: net_forward.9
$region0: #{net_forward.9}
  #allocation0 [shape = 'u32[]', space=smem, size = 0x4, offset = 0x4, fixed_abs, tag = 'smem constant byte address 0x4 - core index']
  #allocation1 [shape = 'u32[144,128]{1,0:T(1,128)}', space=vmem, size = 0x12000, scoped, tag = 'internal scratch']
  %s0 = inlined_call_operand.vmem [shape: bf16[2,800], index: 0, kind: input, shape index: {}]
  %s1 = inlined_call_operand.vmem [shape: bf16[800,64], index: 1, kind: input, shape index: {}]
  %s2 = inlined_call_operand.vmem [shape: f32[1,64], index: 2, kind: input, shape index: {}]
  %s3 = inlined_call_operand.vmem [shape: bf16[64,10], index: 3, kind: input, shape index: {}]
  %s4 = inlined_call_operand.vmem [shape: f32[1,10], index: 4, kind: input, shape index: {}]
  %s5 = inlined_call_operand.hbm [shape: f32[2,10], index: 5, kind: output, shape index: {}]
  %s6 = sld [smem:[#allocation0]]
  $region30: #{net_forward.9} parent=0
    _
  %s8 = ssub.s32 1, %s6
  %s9 = scalar_select 0, %s8, %s6
  $region1: #{net_forward.9} parent=0
    #allocation2 [shape = 'u8[1024]{0}', space=vmem, size = 0x400, scoped, tag = 'output window, operand 0, single buffered']
    #allocation3 [shape = 's32[1]{0}', space=sflag, size = 0x4, scoped, tag = 'scoped memory for net_forward.9']
    %10 = vsyncpa [#allocation3], 0
    // Predicated region
    $region2: #{net_forward.9} parent=1 // pred_check
      _
    $region3: #{net_forward.9} parent=1 // pred_check_branch
      %12 = sbr.rel (0) target = $region5
    $region4: #{net_forward.9} parent=1 // pred_region
      _
    $region5: #{net_forward.9} parent=1 // pred_fallthru
      _
    // Predicated region
    $region6: #{net_forward.9} parent=1 // pred_check
      _
    $region7: #{net_forward.9} parent=1 // pred_check_branch
      %14 = sbr.rel (0) target = $region9
    $region8: #{net_forward.9} parent=1 // pred_region
      _
    $region9: #{net_forward.9} parent=1 // pred_fallthru
      _
    // Predicated region
    $region10: #{net_forward.9} parent=1 // pred_check
      _
    $region11: #{net_forward.9} parent=1 // pred_check_branch
      %16 = sbr.rel (0) target = $region13
    $region12: #{net_forward.9} parent=1 // pred_region
      _
    $region13: #{net_forward.9} parent=1 // pred_fallthru
      _
    // Predicated region
    $region14: #{net_forward.9} parent=1 // pred_check
      _
    $region15: #{net_forward.9} parent=1 // pred_check_branch
      %18 = sbr.rel (0) target = $region17
    $region16: #{net_forward.9} parent=1 // pred_region
      _
    $region17: #{net_forward.9} parent=1 // pred_fallthru
      _
    // Predicated region
    $region18: #{net_forward.9} parent=1 // pred_check
      _
    $region19: #{net_forward.9} parent=1 // pred_check_branch
      %20 = sbr.rel (0) target = $region21
    $region20: #{net_forward.9} parent=1 // pred_region
      _
    $region21: #{net_forward.9} parent=1 // pred_fallthru
      _
    %v22 = vld [vmem:[%s0] sm:$0x7f]
    %v23 = vld [vmem:[%s1] sm:$0xf]
    %v24 = vld [vmem:[%s1 + $0x4] sm:$0xf]
    %v25 = vld [vmem:[%s1 + $0x8] sm:$0xf]
    %v26 = vld [vmem:[%s1 + $0xc] sm:$0xf]
    %v27 = vld [vmem:[%s1 + $0x10] sm:$0xf]
    %v28 = vld [vmem:[%s1 + $0x14] sm:$0xf]
    %v29 = vld [vmem:[%s1 + $0x18] sm:$0xf]
    %v30 = vld [vmem:[%s1 + $0x1c] sm:$0xf]
    %v31 = vld [vmem:[%s1 + $0x20] sm:$0xf]
    %v32 = vld [vmem:[%s1 + $0x24] sm:$0xf]
    %v33 = vld [vmem:[%s1 + $0x28] sm:$0xf]
    %v34 = vld [vmem:[%s1 + $0x2c] sm:$0xf]
    %v35 = vld [vmem:[%s1 + $0x30] sm:$0xf]
    %v36 = vld [vmem:[%s1 + $0x34] sm:$0xf]
    %v37 = vld [vmem:[%s1 + $0x38] sm:$0xf]
    %v38 = vld [vmem:[%s1 + $0x3c] sm:$0xf]
    %v39 = vld [vmem:[%s1 + $0x40] sm:$0xf]
    %v40 = vld [vmem:[%s1 + $0x44] sm:$0xf]
    %v41 = vld [vmem:[%s1 + $0x48] sm:$0xf]
    %v42 = vld [vmem:[%s1 + $0x4c] sm:$0xf]
    %v43 = vld [vmem:[%s1 + $0x50] sm:$0xf]
    %v44 = vld [vmem:[%s1 + $0x54] sm:$0xf]
    %v45 = vld [vmem:[%s1 + $0x58] sm:$0xf]
    %v46 = vld [vmem:[%s1 + $0x5c] sm:$0xf]
    %v47 = vld [vmem:[%s1 + $0x60] sm:$0xf]
    %v48 = vld [vmem:[%s1 + $0x64] sm:$0xf]
    %v49 = vld [vmem:[%s1 + $0x68] sm:$0xf]
    %v50 = vld [vmem:[%s1 + $0x6c] sm:$0xf]
    %v51 = vld [vmem:[%s1 + $0x70] sm:$0xf]
    %v52 = vld [vmem:[%s1 + $0x74] sm:$0xf]
    %v53 = vld [vmem:[%s1 + $0x78] sm:$0xf]
    %v54 = vld [vmem:[%s1 + $0x7c] sm:$0xf]
    %v55 = vld [vmem:[%s1 + $0x80] sm:$0xf]
    %v56 = vld [vmem:[%s1 + $0x84] sm:$0xf]
    %v57 = vld [vmem:[%s1 + $0x88] sm:$0xf]
    %v58 = vld [vmem:[%s1 + $0x8c] sm:$0xf]
    %v59 = vld [vmem:[%s1 + $0x90] sm:$0xf]
    %v60 = vld [vmem:[%s1 + $0x94] sm:$0xf]
    %v61 = vld [vmem:[%s1 + $0x98] sm:$0xf]
    %v62 = vld [vmem:[%s1 + $0x9c] sm:$0xf]
    %v63 = vld [vmem:[%s1 + $0xa0] sm:$0xf]
    %v64 = vld [vmem:[%s1 + $0xa4] sm:$0xf]
    %v65 = vld [vmem:[%s1 + $0xa8] sm:$0xf]
    %v66 = vld [vmem:[%s1 + $0xac] sm:$0xf]
    %v67 = vld [vmem:[%s1 + $0xb0] sm:$0xf]
    %v68 = vld [vmem:[%s1 + $0xb4] sm:$0xf]
    %v69 = vld [vmem:[%s1 + $0xb8] sm:$0xf]
    %v70 = vld [vmem:[%s1 + $0xbc] sm:$0xf]
    %v71 = vld [vmem:[%s1 + $0xc0] sm:$0xf]
    %v72 = vld [vmem:[%s1 + $0xc4] sm:$0xf]
    %v73 = vld [vmem:[%s1 + $0xc8] sm:$0xf]
    %v74 = vld [vmem:[%s1 + $0xcc] sm:$0xf]
    %v75 = vld [vmem:[%s1 + $0xd0] sm:$0xf]
    %v76 = vld [vmem:[%s1 + $0xd4] sm:$0xf]
    %v77 = vld [vmem:[%s1 + $0xd8] sm:$0xf]
    %v78 = vld [vmem:[%s1 + $0xdc] sm:$0xf]
    %v79 = vld [vmem:[%s1 + $0xe0] sm:$0xf]
    %v80 = vld [vmem:[%s1 + $0xe4] sm:$0xf]
    %v81 = vld [vmem:[%s1 + $0xe8] sm:$0xf]
    %v82 = vld [vmem:[%s1 + $0xec] sm:$0xf]
    %v83 = vld [vmem:[%s1 + $0xf0] sm:$0xf]
    %v84 = vld [vmem:[%s1 + $0xf4] sm:$0xf]
    %v85 = vld [vmem:[%s1 + $0xf8] sm:$0xf]
    %v86 = vld [vmem:[%s1 + $0xfc] sm:$0xf]
    %v87 = vld [vmem:[%s1 + $0x100] sm:$0xf]
    %v88 = vld [vmem:[%s1 + $0x104] sm:$0xf]
    %v89 = vld [vmem:[%s1 + $0x108] sm:$0xf]
    %v90 = vld [vmem:[%s1 + $0x10c] sm:$0xf]
    %v91 = vld [vmem:[%s1 + $0x110] sm:$0xf]
    %v92 = vld [vmem:[%s1 + $0x114] sm:$0xf]
    %v93 = vld [vmem:[%s1 + $0x118] sm:$0xf]
    %v94 = vld [vmem:[%s1 + $0x11c] sm:$0xf]
    %v95 = vld [vmem:[%s1 + $0x120] sm:$0xf]
    %v96 = vld [vmem:[%s1 + $0x124] sm:$0xf]
    %v97 = vld [vmem:[%s1 + $0x128] sm:$0xf]
    %v98 = vld [vmem:[%s1 + $0x12c] sm:$0xf]
    %v99 = vld [vmem:[%s1 + $0x130] sm:$0xf]
    %v100 = vld [vmem:[%s1 + $0x134] sm:$0xf]
    %v101 = vld [vmem:[%s1 + $0x138] sm:$0xf]
    %v102 = vld [vmem:[%s1 + $0x13c] sm:$0xf]
    %v103 = vld [vmem:[%s1 + $0x140] sm:$0xf]
    %v104 = vld [vmem:[%s1 + $0x144] sm:$0xf]
    %v105 = vld [vmem:[%s1 + $0x148] sm:$0xf]
    %v106 = vld [vmem:[%s1 + $0x14c] sm:$0xf]
    %v107 = vld [vmem:[%s1 + $0x150] sm:$0xf]
    %v108 = vld [vmem:[%s1 + $0x154] sm:$0xf]
    %v109 = vld [vmem:[%s1 + $0x158] sm:$0xf]
    %v110 = vld [vmem:[%s1 + $0x15c] sm:$0xf]
    %v111 = vld [vmem:[%s1 + $0x160] sm:$0xf]
    %v112 = vld [vmem:[%s1 + $0x164] sm:$0xf]
    %v113 = vld [vmem:[%s1 + $0x168] sm:$0xf]
    %v114 = vld [vmem:[%s1 + $0x16c] sm:$0xf]
    %v115 = vld [vmem:[%s1 + $0x170] sm:$0xf]
    %v116 = vld [vmem:[%s1 + $0x174] sm:$0xf]
    %v117 = vld [vmem:[%s1 + $0x178] sm:$0xf]
    %v118 = vld [vmem:[%s1 + $0x17c] sm:$0xf]
    %v119 = vld [vmem:[%s1 + $0x180] sm:$0xf]
    %v120 = vld [vmem:[%s1 + $0x184] sm:$0xf]
    %v121 = vld [vmem:[%s1 + $0x188] sm:$0xf]
    %v122 = vld [vmem:[%s1 + $0x18c] sm:$0xf]
    %v123 = vld [vmem:[%s2] sm:$0x1]
    %v125 = vlaneseq
    %v126 = vshrl.u32 %v125, 7
    %v127 = vsub.s32 0, %v126
    %v128 = vrot.slane %v123, %v127
    %v131 = vcombine.high %v22, %v22
    %v133 = vunpack.c.l.s4 1966171168
    %v134 = vunpack.c.0.s8 %v133
    %v135 = vlaneseq
    %v136 = vshrl.u32 %v135, 7
    %v137 = vsub.s32 %v134, %v136
    %v138 = vrot.slane %v22, %v137
    %v140 = vunpack.c.l.s4 1966171168
    %v141 = vunpack.c.0.s8 %v140
    %v142 = vlaneseq
    %v143 = vshrl.u32 %v142, 7
    %v144 = vsub.s32 %v141, %v143
    %v145 = vrot.slane %v131, %v144
    %v146 = vcombine.high %v138, %v138
    %v147 = vcombine.high %v145, %v145
    %v149 = vunpack.c.l.s4 1966171168
    %v150 = vunpack.c.0.s8 %v149
    %v151 = vlaneseq
    %v152 = vshrl.u32 %v151, 7
    %v153 = vsub.s32 %v150, %v152
    %v154 = vrot.slane %v138, %v153
    %v156 = vunpack.c.l.s4 1966171168
    %v157 = vunpack.c.0.s8 %v156
    %v158 = vlaneseq
    %v159 = vshrl.u32 %v158, 7
    %v160 = vsub.s32 %v157, %v159
    %v161 = vrot.slane %v145, %v160
    %v163 = vunpack.c.l.s4 1966171168
    %v164 = vunpack.c.0.s8 %v163
    %v165 = vlaneseq
    %v166 = vshrl.u32 %v165, 7
    %v167 = vsub.s32 %v164, %v166
    %v168 = vrot.slane %v146, %v167
    %v170 = vunpack.c.l.s4 1966171168
    %v171 = vunpack.c.0.s8 %v170
    %v172 = vlaneseq
    %v173 = vshrl.u32 %v172, 7
    %v174 = vsub.s32 %v171, %v173
    %v175 = vrot.slane %v147, %v174
    %v176 = vcombine.high %v154, %v154
    %v177 = vcombine.high %v161, %v161
    %v178 = vcombine.high %v168, %v168
    %v285 = vunpack.c.l.b16 %v23
    %v286 = vunpack.c.l.b16 %v24
    %v287 = vunpack.c.l.b16 %v25
    %v288 = vunpack.c.l.b16 %v26
    %v289 = vunpack.c.l.b16 %v27
    %v290 = vunpack.c.l.b16 %v28
    %v291 = vunpack.c.l.b16 %v29
    %v292 = vunpack.c.l.b16 %v30
    %v293 = vunpack.c.l.b16 %v31
    %v294 = vunpack.c.l.b16 %v32
    %v295 = vunpack.c.l.b16 %v33
    %v296 = vunpack.c.l.b16 %v34
    %v297 = vunpack.c.l.b16 %v35
    %v298 = vunpack.c.l.b16 %v36
    %v299 = vunpack.c.l.b16 %v37
    %v300 = vunpack.c.l.b16 %v38
    %v301 = vunpack.c.l.b16 %v39
    %v302 = vunpack.c.l.b16 %v40
    %v303 = vunpack.c.l.b16 %v41
    %v304 = vunpack.c.l.b16 %v42
    %v305 = vunpack.c.l.b16 %v43
    %v306 = vunpack.c.l.b16 %v44
    %v307 = vunpack.c.l.b16 %v45
    %v308 = vunpack.c.l.b16 %v46
    %v309 = vunpack.c.l.b16 %v47
    %v310 = vunpack.c.l.b16 %v48
    %v311 = vunpack.c.l.b16 %v49
    %v312 = vunpack.c.l.b16 %v50
    %v313 = vunpack.c.l.b16 %v51
    %v314 = vunpack.c.l.b16 %v52
    %v315 = vunpack.c.l.b16 %v53
    %v316 = vunpack.c.l.b16 %v54
    %v317 = vunpack.c.l.b16 %v55
    %v318 = vunpack.c.l.b16 %v56
    %v319 = vunpack.c.l.b16 %v57
    %v320 = vunpack.c.l.b16 %v58
    %v321 = vunpack.c.l.b16 %v59
    %v322 = vunpack.c.l.b16 %v60
    %v323 = vunpack.c.l.b16 %v61
    %v324 = vunpack.c.l.b16 %v62
    %v325 = vunpack.c.l.b16 %v63
    %v326 = vunpack.c.l.b16 %v64
    %v327 = vunpack.c.l.b16 %v65
    %v328 = vunpack.c.l.b16 %v66
    %v329 = vunpack.c.l.b16 %v67
    %v330 = vunpack.c.l.b16 %v68
    %v331 = vunpack.c.l.b16 %v69
    %v332 = vunpack.c.l.b16 %v70
    %v333 = vunpack.c.l.b16 %v71
    %v334 = vunpack.c.l.b16 %v72
    %v335 = vunpack.c.l.b16 %v73
    %v336 = vunpack.c.l.b16 %v74
    %v337 = vunpack.c.l.b16 %v75
    %v338 = vunpack.c.l.b16 %v76
    %v339 = vunpack.c.l.b16 %v77
    %v340 = vunpack.c.l.b16 %v78
    %v341 = vunpack.c.l.b16 %v79
    %v342 = vunpack.c.l.b16 %v80
    %v343 = vunpack.c.l.b16 %v81
    %v344 = vunpack.c.l.b16 %v82
    %v345 = vunpack.c.l.b16 %v83
    %v346 = vunpack.c.l.b16 %v84
    %v347 = vunpack.c.l.b16 %v85
    %v348 = vunpack.c.l.b16 %v86
    %v349 = vunpack.c.l.b16 %v87
    %v350 = vunpack.c.l.b16 %v88
    %v351 = vunpack.c.l.b16 %v89
    %v352 = vunpack.c.l.b16 %v90
    %v353 = vunpack.c.l.b16 %v91
    %v354 = vunpack.c.l.b16 %v92
    %v355 = vunpack.c.l.b16 %v93
    %v356 = vunpack.c.l.b16 %v94
    %v357 = vunpack.c.l.b16 %v95
    %v358 = vunpack.c.l.b16 %v96
    %v359 = vunpack.c.l.b16 %v97
    %v360 = vunpack.c.l.b16 %v98
    %v361 = vunpack.c.l.b16 %v99
    %v362 = vunpack.c.l.b16 %v100
    %v363 = vunpack.c.l.b16 %v101
    %v364 = vunpack.c.l.b16 %v102
    %v365 = vunpack.c.l.b16 %v103
    %v366 = vunpack.c.l.b16 %v104
    %v367 = vunpack.c.l.b16 %v105
    %v368 = vunpack.c.l.b16 %v106
    %v369 = vunpack.c.l.b16 %v107
    %v370 = vunpack.c.l.b16 %v108
    %v371 = vunpack.c.l.b16 %v109
    %v372 = vunpack.c.l.b16 %v110
    %v373 = vunpack.c.l.b16 %v111
    %v374 = vunpack.c.l.b16 %v112
    %v375 = vunpack.c.l.b16 %v113
    %v376 = vunpack.c.l.b16 %v114
    %v377 = vunpack.c.l.b16 %v115
    %v378 = vunpack.c.l.b16 %v116
    %v379 = vunpack.c.l.b16 %v117
    %v380 = vunpack.c.l.b16 %v118
    %v381 = vunpack.c.l.b16 %v119
    %v382 = vunpack.c.l.b16 %v120
    %v383 = vunpack.c.l.b16 %v121
    %v384 = vunpack.c.l.b16 %v122
    %v385 = vpack.c.b16 %v286, %v285
    %v386 = vpack.c.b16 %v288, %v287
    %v387 = vpack.c.b16 %v290, %v289
    %v388 = vpack.c.b16 %v292, %v291
    %v389 = vpack.c.b16 %v294, %v293
    %v390 = vpack.c.b16 %v296, %v295
    %v391 = vpack.c.b16 %v298, %v297
    %v392 = vpack.c.b16 %v300, %v299
    %v393 = vpack.c.b16 %v302, %v301
    %v394 = vpack.c.b16 %v304, %v303
    %v395 = vpack.c.b16 %v306, %v305
    %v396 = vpack.c.b16 %v308, %v307
    %v397 = vpack.c.b16 %v310, %v309
    %v398 = vpack.c.b16 %v312, %v311
    %v399 = vpack.c.b16 %v314, %v313
    %v400 = vpack.c.b16 %v316, %v315
    %v401 = vpack.c.b16 %v318, %v317
    %v402 = vpack.c.b16 %v320, %v319
    %v403 = vpack.c.b16 %v322, %v321
    %v404 = vpack.c.b16 %v324, %v323
    %v405 = vpack.c.b16 %v326, %v325
    %v406 = vpack.c.b16 %v328, %v327
    %v407 = vpack.c.b16 %v330, %v329
    %v408 = vpack.c.b16 %v332, %v331
    %v409 = vpack.c.b16 %v334, %v333
    %v410 = vpack.c.b16 %v336, %v335
    %v411 = vpack.c.b16 %v338, %v337
    %v412 = vpack.c.b16 %v340, %v339
    %v413 = vpack.c.b16 %v342, %v341
    %v414 = vpack.c.b16 %v344, %v343
    %v415 = vpack.c.b16 %v346, %v345
    %v416 = vpack.c.b16 %v348, %v347
    %v417 = vpack.c.b16 %v350, %v349
    %v418 = vpack.c.b16 %v352, %v351
    %v419 = vpack.c.b16 %v354, %v353
    %v420 = vpack.c.b16 %v356, %v355
    %v421 = vpack.c.b16 %v358, %v357
    %v422 = vpack.c.b16 %v360, %v359
    %v423 = vpack.c.b16 %v362, %v361
    %v424 = vpack.c.b16 %v364, %v363
    %v425 = vpack.c.b16 %v366, %v365
    %v426 = vpack.c.b16 %v368, %v367
    %v427 = vpack.c.b16 %v370, %v369
    %v428 = vpack.c.b16 %v372, %v371
    %v429 = vpack.c.b16 %v374, %v373
    %v430 = vpack.c.b16 %v376, %v375
    %v431 = vpack.c.b16 %v378, %v377
    %v432 = vpack.c.b16 %v380, %v379
    %v433 = vpack.c.b16 %v382, %v381
    %v434 = vpack.c.b16 %v384, %v383
    %vm485 = vcmask 261120
    %v487 = vsel %vm485, %v177, 0
    %489 = vmatprep.subr.bf16.mxu0 0
    %490 = vmatpush1.bf16.msra.mxu0 %v385
    %491 = vmatprep.subr.bf16.mxu0 0
    %492 = vmatpush1.bf16.msra.mxu0 %v386
    %493 = vmatprep.subr.bf16.mxu0 0
    %494 = vmatpush1.bf16.msra.mxu0 %v387
    %495 = vmatprep.subr.bf16.mxu0 0
    %496 = vmatpush1.bf16.msra.mxu0 %v388
    %497 = vmatprep.subr.bf16.mxu0 0
    %498 = vmatpush1.bf16.msra.mxu0 %v389
    %499 = vmatprep.subr.bf16.mxu0 0
    %500 = vmatpush1.bf16.msra.mxu0 %v390
    %501 = vmatprep.subr.bf16.mxu0 0
    %502 = vmatpush1.bf16.msra.mxu0 %v391
    %503 = vmatprep.subr.bf16.mxu0 0
    %504 = vmatpush1.bf16.msra.mxu0 %v392
    %505 = vmatprep.subr.bf16.mxu0 0
    %506 = vmatpush1.bf16.msra.mxu0 %v393
    %507 = vmatprep.subr.bf16.mxu0 0
    %508 = vmatpush1.bf16.msra.mxu0 %v394
    %509 = vmatprep.subr.bf16.mxu0 0
    %510 = vmatpush1.bf16.msra.mxu0 %v395
    %511 = vmatprep.subr.bf16.mxu0 0
    %512 = vmatpush1.bf16.msra.mxu0 %v396
    %513 = vmatprep.subr.bf16.mxu0 0
    %514 = vmatpush1.bf16.msra.mxu0 %v397
    %515 = vmatprep.subr.bf16.mxu0 0
    %516 = vmatpush1.bf16.msra.mxu0 %v398
    %517 = vmatprep.subr.bf16.mxu0 0
    %518 = vmatpush1.bf16.msra.mxu0 %v399
    %519 = vmatprep.subr.bf16.mxu0 0
    %520 = vmatpush1.bf16.msra.mxu0 %v400
    %521 = vmatprep.mubr.bf16.mxu0 %v168
    %522 = vmatmul.mubr.bf16.gmra.mrb[0].mxu0 %v154
    %v523 = vpop.f32.mrb[0].mxu0
    %v524 = vadd.f32 %v128, %v523
    %v525 = vpop.f32.mrb[0].mxu0
    %v526 = vpop.f32.mrb[0].mxu0
    %v527 = vpop.f32.mrb[0].mxu0
    %528 = vdwg.mxu0
    %529 = vmatprep.subr.bf16.mxu0 0
    %530 = vmatpush1.bf16.msra.mxu0 %v401
    %531 = vmatprep.subr.bf16.mxu0 0
    %532 = vmatpush1.bf16.msra.mxu0 %v402
    %533 = vmatprep.subr.bf16.mxu0 0
    %534 = vmatpush1.bf16.msra.mxu0 %v403
    %535 = vmatprep.subr.bf16.mxu0 0
    %536 = vmatpush1.bf16.msra.mxu0 %v404
    %537 = vmatprep.subr.bf16.mxu0 0
    %538 = vmatpush1.bf16.msra.mxu0 %v405
    %539 = vmatprep.subr.bf16.mxu0 0
    %540 = vmatpush1.bf16.msra.mxu0 %v406
    %541 = vmatprep.subr.bf16.mxu0 0
    %542 = vmatpush1.bf16.msra.mxu0 %v407
    %543 = vmatprep.subr.bf16.mxu0 0
    %544 = vmatpush1.bf16.msra.mxu0 %v408
    %545 = vmatprep.subr.bf16.mxu0 0
    %546 = vmatpush1.bf16.msra.mxu0 %v409
    %547 = vmatprep.subr.bf16.mxu0 0
    %548 = vmatpush1.bf16.msra.mxu0 %v410
    %549 = vmatprep.subr.bf16.mxu0 0
    %550 = vmatpush1.bf16.msra.mxu0 %v411
    %551 = vmatprep.subr.bf16.mxu0 0
    %552 = vmatpush1.bf16.msra.mxu0 %v412
    %553 = vmatprep.subr.bf16.mxu0 0
    %554 = vmatpush1.bf16.msra.mxu0 %v413
    %555 = vmatprep.subr.bf16.mxu0 0
    %556 = vmatpush1.bf16.msra.mxu0 %v414
    %557 = vmatprep.subr.bf16.mxu0 0
    %558 = vmatpush1.bf16.msra.mxu0 %v415
    %559 = vmatprep.subr.bf16.mxu0 0
    %560 = vmatpush1.bf16.msra.mxu0 %v416
    %561 = vmatprep.mubr.bf16.mxu0 %v178
    %562 = vmatmul.mubr.bf16.gmra.mrb[0].mxu0 %v176
    %v563 = vpop.f32.mrb[0].mxu0
    %v564 = vadd.f32 %v524, %v563
    %v565 = vpop.f32.mrb[0].mxu0
    %v566 = vpop.f32.mrb[0].mxu0
    %v567 = vpop.f32.mrb[0].mxu0
    %568 = vdwg.mxu0
    %569 = vmatprep.subr.bf16.mxu0 0
    %570 = vmatpush1.bf16.msra.mxu0 %v417
    %571 = vmatprep.subr.bf16.mxu0 0
    %572 = vmatpush1.bf16.msra.mxu0 %v418
    %573 = vmatprep.subr.bf16.mxu0 0
    %574 = vmatpush1.bf16.msra.mxu0 %v419
    %575 = vmatprep.subr.bf16.mxu0 0
    %576 = vmatpush1.bf16.msra.mxu0 %v420
    %577 = vmatprep.subr.bf16.mxu0 0
    %578 = vmatpush1.bf16.msra.mxu0 %v421
    %579 = vmatprep.subr.bf16.mxu0 0
    %580 = vmatpush1.bf16.msra.mxu0 %v422
    %581 = vmatprep.subr.bf16.mxu0 0
    %582 = vmatpush1.bf16.msra.mxu0 %v423
    %583 = vmatprep.subr.bf16.mxu0 0
    %584 = vmatpush1.bf16.msra.mxu0 %v424
    %585 = vmatprep.subr.bf16.mxu0 0
    %586 = vmatpush1.bf16.msra.mxu0 %v425
    %587 = vmatprep.subr.bf16.mxu0 0
    %588 = vmatpush1.bf16.msra.mxu0 %v426
    %589 = vmatprep.subr.bf16.mxu0 0
    %590 = vmatpush1.bf16.msra.mxu0 %v427
    %591 = vmatprep.subr.bf16.mxu0 0
    %592 = vmatpush1.bf16.msra.mxu0 %v428
    %593 = vmatprep.subr.bf16.mxu0 0
    %594 = vmatpush1.bf16.msra.mxu0 %v429
    %595 = vmatprep.subr.bf16.mxu0 0
    %596 = vmatpush1.bf16.msra.mxu0 %v430
    %597 = vmatprep.subr.bf16.mxu0 0
    %598 = vmatpush1.bf16.msra.mxu0 %v431
    %599 = vmatprep.subr.bf16.mxu0 0
    %600 = vmatpush1.bf16.msra.mxu0 %v432
    %601 = vmatprep.mubr.bf16.mxu0 %v175
    %602 = vmatmul.mubr.bf16.gmra.mrb[0].mxu0 %v161
    %v603 = vpop.f32.mrb[0].mxu0
    %v604 = vadd.f32 %v564, %v603
    %v605 = vpop.f32.mrb[0].mxu0
    %v606 = vpop.f32.mrb[0].mxu0
    %v607 = vpop.f32.mrb[0].mxu0
    %608 = vdwg.mxu0
    %609 = vmatprep.subr.bf16.mxu0 0
    %610 = vmatpush1.bf16.msra.mxu0 %v433
    %611 = vmatprep.subr.bf16.mxu0 0
    %612 = vmatpush1.bf16.msra.mxu0 %v434
    %613 = vmatprep.subr.bf16.mxu0 0
    %614 = vmatpush1.bf16.msra.mxu0 0
    %615 = vmatprep.subr.bf16.mxu0 0
    %616 = vmatpush1.bf16.msra.mxu0 0
    %617 = vmatprep.subr.bf16.mxu0 0
    %618 = vmatpush1.bf16.msra.mxu0 0
    %619 = vmatprep.subr.bf16.mxu0 0
    %620 = vmatpush1.bf16.msra.mxu0 0
    %621 = vmatprep.subr.bf16.mxu0 0
    %622 = vmatpush1.bf16.msra.mxu0 0
    %623 = vmatprep.subr.bf16.mxu0 0
    %624 = vmatpush1.bf16.msra.mxu0 0
    %625 = vmatprep.subr.bf16.mxu0 0
    %626 = vmatpush1.bf16.msra.mxu0 0
    %627 = vmatprep.subr.bf16.mxu0 0
    %628 = vmatpush1.bf16.msra.mxu0 0
    %629 = vmatprep.subr.bf16.mxu0 0
    %630 = vmatpush1.bf16.msra.mxu0 0
    %631 = vmatprep.subr.bf16.mxu0 0
    %632 = vmatpush1.bf16.msra.mxu0 0
    %633 = vmatprep.subr.bf16.mxu0 0
    %634 = vmatpush1.bf16.msra.mxu0 0
    %635 = vmatprep.subr.bf16.mxu0 0
    %636 = vmatpush1.bf16.msra.mxu0 0
    %637 = vmatprep.subr.bf16.mxu0 0
    %638 = vmatpush1.bf16.msra.mxu0 0
    %639 = vmatprep.subr.bf16.mxu0 0
    %640 = vmatpush1.bf16.msra.mxu0 0
    %641 = vmatprep.mubr.bf16.mxu0 0
    %642 = vmatmul.mubr.bf16.gmra.mrb[0].mxu0 %v487
    %v643 = vpop.f32.mrb[0].mxu0
    %v644 = vadd.f32 %v604, %v643
    %v645 = vpop.f32.mrb[0].mxu0
    %v646 = vpop.f32.mrb[0].mxu0
    %v647 = vpop.f32.mrb[0].mxu0
    %648 = vdwg.mxu0
    %v649 = vand.u32 2147483647, %v644
    %v650 = vadd.f32 %v649, 1.0
    %v651 = vrcp.pop %v650
    %v652 = vmul.f32 %v644, %v651
    %v653 = vpack.c.bf16 %v652, %v652
    %v654 = vld [vmem:[%s3] sm:$0xf]
    %v655 = vld [vmem:[%s3 + $0x4] sm:$0xf]
    %v656 = vld [vmem:[%s3 + $0x8] sm:$0xf]
    %v657 = vld [vmem:[%s3 + $0xc] sm:$0xf]
    %v658 = vld [vmem:[%s3 + $0x10] sm:$0xf]
    %v659 = vld [vmem:[%s3 + $0x14] sm:$0xf]
    %v660 = vld [vmem:[%s3 + $0x18] sm:$0xf]
    %v661 = vld [vmem:[%s3 + $0x1c] sm:$0xf]
    %v662 = vld [vmem:[%s4] sm:$0x1]
    %v664 = vlaneseq
    %v665 = vshrl.u32 %v664, 7
    %v666 = vsub.s32 0, %v665
    %v667 = vrot.slane %v662, %v666
    %v677 = vunpack.c.l.b16 %v654
    %v678 = vunpack.c.l.b16 %v655
    %v679 = vunpack.c.l.b16 %v656
    %v680 = vunpack.c.l.b16 %v657
    %v681 = vunpack.c.l.b16 %v658
    %v682 = vunpack.c.l.b16 %v659
    %v683 = vunpack.c.l.b16 %v660
    %v684 = vunpack.c.l.b16 %v661
    %v685 = vpack.c.b16 %v678, %v677
    %v686 = vpack.c.b16 %v680, %v679
    %v687 = vpack.c.b16 %v682, %v681
    %v688 = vpack.c.b16 %v684, %v683
    %vm693 = vcmask 523264
    %v695 = vsel %vm693, %v653, 0
    %697 = vmatprep.subr.bf16.mxu0 0
    %698 = vmatpush1.bf16.msra.mxu0 %v685
    %699 = vmatprep.subr.bf16.mxu0 0
    %700 = vmatpush1.bf16.msra.mxu0 %v686
    %701 = vmatprep.subr.bf16.mxu0 0
    %702 = vmatpush1.bf16.msra.mxu0 %v687
    %703 = vmatprep.subr.bf16.mxu0 0
    %704 = vmatpush1.bf16.msra.mxu0 %v688
    %705 = vmatprep.subr.bf16.mxu0 0
    %706 = vmatpush1.bf16.msra.mxu0 0
    %707 = vmatprep.subr.bf16.mxu0 0
    %708 = vmatpush1.bf16.msra.mxu0 0
    %709 = vmatprep.subr.bf16.mxu0 0
    %710 = vmatpush1.bf16.msra.mxu0 0
    %711 = vmatprep.subr.bf16.mxu0 0
    %712 = vmatpush1.bf16.msra.mxu0 0
    %713 = vmatprep.subr.bf16.mxu0 0
    %714 = vmatpush1.bf16.msra.mxu0 0
    %715 = vmatprep.subr.bf16.mxu0 0
    %716 = vmatpush1.bf16.msra.mxu0 0
    %717 = vmatprep.subr.bf16.mxu0 0
    %718 = vmatpush1.bf16.msra.mxu0 0
    %719 = vmatprep.subr.bf16.mxu0 0
    %720 = vmatpush1.bf16.msra.mxu0 0
    %721 = vmatprep.subr.bf16.mxu0 0
    %722 = vmatpush1.bf16.msra.mxu0 0
    %723 = vmatprep.subr.bf16.mxu0 0
    %724 = vmatpush1.bf16.msra.mxu0 0
    %725 = vmatprep.subr.bf16.mxu0 0
    %726 = vmatpush1.bf16.msra.mxu0 0
    %727 = vmatprep.subr.bf16.mxu0 0
    %728 = vmatpush1.bf16.msra.mxu0 0
    %729 = vmatprep.mubr.bf16.mxu0 0
    %730 = vmatmul.mubr.bf16.gmra.mrb[0].mxu0 %v695
    %v731 = vpop.f32.mrb[0].mxu0
    %v732 = vadd.f32 %v667, %v731
    %v733 = vpop.f32.mrb[0].mxu0
    %v734 = vpop.f32.mrb[0].mxu0
    %v735 = vpop.f32.mrb[0].mxu0
    %736 = vdwg.mxu0
    %vm737 = vcmask 74752
    %v738 = vsel %vm737, %v732, -inf
    %739 = vmax.xlane.f32.xlu0 %v738
    %v740 = vpop.xlane.xlu0 %739
    %v741 = vsub.f32 %v732, %v740
    %v742 = vmul.f32 %v741, 1.442695
    %v743 = vpow.pop %v742
    %v744 = vsel %vm737, %v743, 0.0
    %745 = vadd.xlane.f32.xlu0 %v744
    %v746 = vpop.xlane.xlu0 %745
    %v747 = vlog2.pop %v746
    %v748 = vmul.f32 %v747, 0.6931472
    %v749 = vsub.f32 %v741, %v748
    %750 = vst.msk [vmem:[#allocation2] sm:$0x3] %vm737, %v749
    // Predicated region
    $region22: #{net_forward.9} parent=1 // pred_check
      _
    $region23: #{net_forward.9} parent=1 // pred_check_branch
      %752 = sbr.rel (0) target = $region25
    $region24: #{net_forward.9} parent=1 // pred_region
      %s754 = ssub.s32 32, 32
      %755 = vsyncadd [#allocation3], %s754
      %s757 = sshll.u32 [#allocation2], 4
      %s758 = int_to_ptr.vmem [resolvable:$true] %s757
      %760 = dma.vmem_to_hbm [thread:$0]  %s758, 32, %s5, [#allocation3]
    $region25: #{net_forward.9} parent=1 // pred_fallthru
      _
    // Predicated region
    $region26: #{net_forward.9} parent=1 // pred_check
      _
    $region27: #{net_forward.9} parent=1 // pred_check_branch
      %762 = sbr.rel (0) target = $region29
    $region28: #{net_forward.9} parent=1 // pred_region
      %763 = dma.done [#allocation3], 32
    $region29: #{net_forward.9} parent=1 // pred_fallthru
      _
    %764 = vsyncpa [#allocation3], 1

</llo_original>
